<compile_context>
chip_gen: v7x
topology: tpu7x:2x2x1
jax: 0.10.0
libtpu: 0.0.40
codegen_flags: <defaults>
</compile_context>

<pallas_src>
import functools

import jax
import jax.numpy as jnp
import numpy as np
from jax.experimental import pallas as pl
from jax.experimental.pallas import tpu as pltpu


# ------------------------- problem sizes (small) -----------------------------
B = 2          # batch
N = 16         # number of input tokens
D_IN = 32      # dim_input
D_SLOT = 32    # dim_slot
D_PROJ = 32    # dim_projected
D_MLP = 64     # dim_mlp
NUM_SLOT = 8   # num_slot
NUM_ITER = 3   # num_iter
EPSILON = 1e-8
LN_EPS = 1e-5  # PyTorch LayerNorm default eps


def _layernorm(x, g, b, eps=LN_EPS):
    mean = jnp.mean(x, axis=-1, keepdims=True)
    var = jnp.mean((x - mean) ** 2, axis=-1, keepdims=True)
    return (x - mean) * jax.lax.rsqrt(var + eps) * g + b


# --------------------------- packed-parameter layout ---------------------------
def _param_layout(d_in, d_slot, d_mlp, num_slot):
    """Row layout of the single (rows, 128) parameter slab."""
    assert d_in <= 128 and d_mlp <= 128 and 3 * d_slot <= 128
    layout = {}
    r = 0

    def add(name, nrows, ncols):
        nonlocal r
        layout[name] = (r, nrows, ncols)
        r += -(-nrows // 8) * 8          # keep every segment 8-row (vreg) aligned

    add("bias", 8, 128)                  # 8 packed (1, width) rows, see below
    add("slots0", num_slot, d_slot)
    add("w_qk", d_slot, d_in)            # (1/sqrt(d_proj)) * w_q @ w_k^T
    add("w_vih", d_in, 3 * d_slot)       # w_v @ [w_ir | w_iz | w_in]
    add("w_hh", d_slot, 3 * d_slot)      # [w_hr | w_hz | w_hn]
    add("w1", d_slot, d_mlp)
    add("w2", d_mlp, d_slot)
    return layout, r


def _pack_params(p, d_proj):
    f32 = jnp.float32
    d_in = p["wk"].shape[0]
    num_slot, d_slot = p["slots0"].shape
    d_mlp = p["w1"].shape[1]
    layout, total_rows = _param_layout(d_in, d_slot, d_mlp, num_slot)

    def row(v):
        v = jnp.asarray(v, f32).reshape(1, -1)
        return jnp.pad(v, ((0, 0), (0, 128 - v.shape[1])))

    bias_rows = jnp.concatenate([
        row(p["ln_inp_g"]), row(p["ln_inp_b"]),
        row(p["ln_slot_g"]), row(p["ln_slot_b"]),
        row(p["b2"]), row(p["b1"]),
        row(jnp.concatenate([p["bir"], p["biz"], p["binn"]], axis=1)),
        row(jnp.concatenate([p["bhr"], p["bhz"], p["bhn"]], axis=1)),
    ], axis=0)                                                   # (8, 128)

    scale = 1.0 / np.sqrt(d_proj)
    w_qk = scale * (jnp.asarray(p["wq"], f32) @ jnp.asarray(p["wk"], f32).T)
    w_ih = jnp.concatenate([p["wir"], p["wiz"], p["win"]], axis=1).astype(f32)
    w_vih = jnp.asarray(p["wv"], f32) @ w_ih
    w_hh = jnp.concatenate([p["whr"], p["whz"], p["whn"]], axis=1).astype(f32)

    slab = jnp.zeros((total_rows, 128), f32)

    def place(s, name, mat):
        r0, nr, nc = layout[name]
        return s.at[r0:r0 + nr, :nc].set(jnp.asarray(mat, f32).reshape(nr, nc))

    slab = place(slab, "bias", bias_rows)
    slab = place(slab, "slots0", p["slots0"])
    slab = place(slab, "w_qk", w_qk)
    slab = place(slab, "w_vih", w_vih)
    slab = place(slab, "w_hh", w_hh)
    slab = place(slab, "w1", p["w1"])
    slab = place(slab, "w2", p["w2"])
    return slab, layout


# ------------------------------- kernel ---------------------------------------
def slot_attention_kernel(
    x_ref,        # (BT*N, d_in)   token rows for this grid step (batch folded)
    p_ref,        # (rows, 128)    single packed parameter slab
    out_ref,      # (BT*S, d_slot)
    *, num_iter, epsilon, batch_tile, num_tokens, num_slot,
    d_in, d_slot, d_mlp, layout,
):
    f32 = jnp.float32
    BT, Ntok, S = batch_tile, num_tokens, num_slot

    def seg(name):
        r0, nr, nc = layout[name]
        return p_ref[r0:r0 + nr, :nc]

    bias_r0 = layout["bias"][0]

    def brow(i, width):                      # (1, width) bias / LN row
        return p_ref[bias_r0 + i:bias_r0 + i + 1, :width]

    ln_inp_g, ln_inp_b = brow(0, d_in), brow(1, d_in)
    ln_slot_g, ln_slot_b = brow(2, d_slot), brow(3, d_slot)
    b2, b1 = brow(4, d_slot), brow(5, d_mlp)
    b_ih, b_hh = brow(6, 3 * d_slot), brow(7, 3 * d_slot)

    slots0 = seg("slots0")                   # (S, d_slot)
    w_qk = seg("w_qk")                       # (d_slot, d_in), scale pre-folded
    w_vih = seg("w_vih")                     # (d_in, 3*d_slot)
    w_hh = seg("w_hh")                       # (d_slot, 3*d_slot)
    w_1 = seg("w1")                          # (d_slot, d_mlp)
    w_2 = seg("w2")                          # (d_mlp, d_slot)

    # ---- pre-loop: LN(x) + loop-invariant folds (done once per grid step) ----
    xn = _layernorm(x_ref[...], ln_inp_g, ln_inp_b)               # (BT*N, d_in)
    vih = jnp.dot(xn, w_vih, preferred_element_type=f32)          # (BT*N, 3*d_slot)

    # Per-batch score operand  wqk_b = (scale * w_q @ w_k^T) @ xn_b^T  -> (d_slot, N)
    # trans-B contraction on the MXU, no explicit transpose.
    wqk = []
    for bb in range(BT):
        xn_b = xn[bb * Ntok:(bb + 1) * Ntok, :]
        wqk.append(jax.lax.dot_general(
            w_qk, xn_b, dimension_numbers=(((1,), (1,)), ((), ())),
            preferred_element_type=f32))

    slots = jnp.concatenate([slots0] * BT, axis=0) if BT > 1 else slots0

    for _ in range(num_iter):                                     # static, unrolled
        slots_prev = slots
        sn = _layernorm(slots, ln_slot_g, ln_slot_b)              # (BT*S, d_slot)

        gi_parts = []
        for bb in range(BT):
            sn_b = sn[bb * S:(bb + 1) * S, :]                     # (S, d_slot)
            sc = jnp.dot(sn_b, wqk[bb], preferred_element_type=f32)   # (S, N)
            # softmax over slots (axis 0 of the (S, N) layout), + epsilon
            sc = sc - jnp.max(sc, axis=0, keepdims=True)
            e = jnp.exp(sc)
            attn = e / jnp.sum(e, axis=0, keepdims=True) + epsilon
            # normalize over tokens, then fused (weights @ v) @ w_ih == weights @ vih
            weights = attn / jnp.sum(attn, axis=-1, keepdims=True)
            vih_b = vih[bb * Ntok:(bb + 1) * Ntok, :]             # (N, 3*d_slot)
            gi_parts.append(jnp.dot(weights, vih_b, preferred_element_type=f32))
        gi = (jnp.concatenate(gi_parts, axis=0) if BT > 1 else gi_parts[0]) + b_ih
        gh = jnp.dot(slots_prev, w_hh, preferred_element_type=f32) + b_hh

        # ---- GRUCell with packed [r|z|n] gates ----
        r = jax.nn.sigmoid(gi[:, :d_slot] + gh[:, :d_slot])
        z = jax.nn.sigmoid(gi[:, d_slot:2 * d_slot] + gh[:, d_slot:2 * d_slot])
        n = jnp.tanh(gi[:, 2 * d_slot:] + r * gh[:, 2 * d_slot:])
        slots = (1.0 - z) * n + z * slots_prev

        # ---- residual MLP ----
        h = jnp.maximum(jnp.dot(slots, w_1, preferred_element_type=f32) + b1, 0.0)
        slots = slots + jnp.dot(h, w_2, preferred_element_type=f32) + b2

    out_ref[...] = slots


# ------------------------------- wrapper ---------------------------------------
def slot_attention_pallas(x, params, *, num_iter=NUM_ITER, epsilon=EPSILON,
                          batch_block=None):
    b, n, d_in = x.shape
    s, d_slot = params["slots0"].shape
    d_proj = params["wk"].shape[1]
    d_mlp = params["w1"].shape[1]

    # Default: fold the whole batch into ONE grid step.  At these sizes the
    # kernel is overhead/latency bound on every generation (v5e/v6e single TC,
    # and even dual-TC v7x): per-step fixed cost + duplicated weight DMAs exceed
    # the halved compute.  Only pass batch_block (to shard the batch grid axis
    # across TensorCores) once per-step work reaches roughly bt*n >= 128 rows.
    bt = b if batch_block is None else batch_block
    assert b % bt == 0
    grid = (b // bt,)

    slab, layout = _pack_params(params, d_proj)
    x2d = x.reshape(b * n, d_in)          # layout-trivial fold of batch into rows

    kernel = functools.partial(
        slot_attention_kernel,
        num_iter=num_iter, epsilon=epsilon, batch_tile=bt,
        num_tokens=n, num_slot=s,
        d_in=d_in, d_slot=d_slot, d_mlp=d_mlp, layout=layout)

    out = pl.pallas_call(
        kernel,
        out_shape=jax.ShapeDtypeStruct((b * s, d_slot), jnp.float32),
        grid=grid,
        in_specs=[
            pl.BlockSpec((bt * n, d_in), lambda gi: (gi, 0)),
            pl.BlockSpec(slab.shape, lambda gi: (0, 0)),      # one param DMA
        ],
        out_specs=pl.BlockSpec((bt * s, d_slot), lambda gi: (gi, 0)),
        compiler_params=pltpu.CompilerParams(
            dimension_semantics=("parallel",)),
    )(x2d, slab)
    return out.reshape(b, s, d_slot)


# --------------------------- pure-JAX reference --------------------------------
def slot_attention_ref(x, p, *, num_iter=NUM_ITER, epsilon=EPSILON):
    xn = _layernorm(x, p["ln_inp_g"], p["ln_inp_b"])
    k = xn @ p["wk"]
    v = xn @ p["wv"]
    slots = jnp.tile(p["slots0"][None], (x.shape[0], 1, 1))
    scale = 1.0 / np.sqrt(D_PROJ)
    for _ in range(num_iter):
        slots_prev = slots
        sn = _layernorm(slots, p["ln_slot_g"], p["ln_slot_b"])
        q = sn @ p["wq"]
        attn = jnp.einsum("bnd,bsd->bns", k, q) * scale
        attn = jax.nn.softmax(attn, axis=-1) + epsilon
        weights = attn / jnp.sum(attn, axis=1, keepdims=True)
        updates = jnp.einsum("bns,bnd->bsd", weights, v)
        r = jax.nn.sigmoid(updates @ p["wir"] + p["bir"]
                           + slots_prev @ p["whr"] + p["bhr"])
        z = jax.nn.sigmoid(updates @ p["wiz"] + p["biz"]
                           + slots_prev @ p["whz"] + p["bhz"])
        nn_ = jnp.tanh(updates @ p["win"] + p["binn"]
                       + r * (slots_prev @ p["whn"] + p["bhn"]))
        slots = (1.0 - z) * nn_ + z * slots_prev
        h = jax.nn.relu(slots @ p["w1"] + p["b1"])
        slots = slots + h @ p["w2"] + p["b2"]
    return slots


# ------------------------------ param init ------------------------------------
def init_params(key):
    ks = jax.random.split(key, 24)
    f = jnp.float32

    def rn(k, shape, scale=0.1):
        return (scale * jax.random.normal(k, shape)).astype(f)

    return {
        "ln_inp_g": 1.0 + rn(ks[0], (1, D_IN)),
        "ln_inp_b": rn(ks[1], (1, D_IN)),
        "ln_slot_g": 1.0 + rn(ks[2], (1, D_SLOT)),
        "ln_slot_b": rn(ks[3], (1, D_SLOT)),
        "slots0": rn(ks[4], (NUM_SLOT, D_SLOT), 1.0),
        "wk": rn(ks[5], (D_IN, D_PROJ)),
        "wv": rn(ks[6], (D_IN, D_PROJ)),
        "wq": rn(ks[7], (D_SLOT, D_PROJ)),
        "wir": rn(ks[8], (D_PROJ, D_SLOT)),
        "wiz": rn(ks[9], (D_PROJ, D_SLOT)),
        "win": rn(ks[10], (D_PROJ, D_SLOT)),
        "whr": rn(ks[11], (D_SLOT, D_SLOT)),
        "whz": rn(ks[12], (D_SLOT, D_SLOT)),
        "whn": rn(ks[13], (D_SLOT, D_SLOT)),
        "bir": rn(ks[14], (1, D_SLOT)),
        "biz": rn(ks[15], (1, D_SLOT)),
        "binn": rn(ks[16], (1, D_SLOT)),
        "bhr": rn(ks[17], (1, D_SLOT)),
        "bhz": rn(ks[18], (1, D_SLOT)),
        "bhn": rn(ks[19], (1, D_SLOT)),
        "w1": rn(ks[20], (D_SLOT, D_MLP)),
        "b1": rn(ks[21], (1, D_MLP)),
        "w2": rn(ks[22], (D_MLP, D_SLOT)),
        "b2": rn(ks[23], (1, D_SLOT)),
    }


# --------------------------------- main ---------------------------------------
if __name__ == "__main__":
    key = jax.random.PRNGKey(0)
    k_x, k_p = jax.random.split(key)
    x = jax.random.normal(k_x, (B, N, D_IN), dtype=jnp.float32)
    params = init_params(k_p)

    out = jax.block_until_ready(slot_attention_pallas(x, params))
    ref = jax.block_until_ready(slot_attention_ref(x, params))
    # Tight tolerance per review (all-f32); small slack covers the reduction
    # reordering from the w_q@w_k^T / w_v@w_ih weight folds.
    np.testing.assert_allclose(np.asarray(out), np.asarray(ref),
                               rtol=1e-4, atol=1e-5)

    assert out.shape == (B, NUM_SLOT, D_SLOT)
    print("KERNEL_OK")
</pallas_src>

<mosaic_0001>
module attributes {stable_mosaic.version = 11 : i64} {
  func.func @slot_attention_kernel(%arg0: i32, %arg1: memref<32x32xf32, #tpu.memory_space<vmem>>, %arg2: memref<208x128xf32, #tpu.memory_space<vmem>>, %arg3: memref<16x32xf32, #tpu.memory_space<vmem>>) attributes {dimension_semantics = [#tpu.dimension_semantics<parallel>], iteration_bounds = array<i64: 1>, scalar_prefetch = 0 : i64, scratch_operands = 0 : i64, tpu.core_type = #tpu.core_type<tc>, window_params = [{transform_indices = @transform_0, window_bounds = array<i64: 32, 32>}, {pipeline_mode = #tpu.pipeline_mode<synchronous>, transform_indices = @transform_1, window_bounds = array<i64: 208, 128>}, {transform_indices = @transform_2, window_bounds = array<i64: 16, 32>}]} {
    %c0 = arith.constant 0 : index
    %c0_0 = arith.constant 0 : index
    %0 = vector.load %arg2[%c0, %c0_0] : memref<208x128xf32, #tpu.memory_space<vmem>>, vector<1x32xf32>
    %c1 = arith.constant 1 : index
    %c0_1 = arith.constant 0 : index
    %1 = vector.load %arg2[%c1, %c0_1] : memref<208x128xf32, #tpu.memory_space<vmem>>, vector<1x32xf32>
    %c2 = arith.constant 2 : index
    %c0_2 = arith.constant 0 : index
    %2 = vector.load %arg2[%c2, %c0_2] : memref<208x128xf32, #tpu.memory_space<vmem>>, vector<1x32xf32>
    %c3 = arith.constant 3 : index
    %c0_3 = arith.constant 0 : index
    %3 = vector.load %arg2[%c3, %c0_3] : memref<208x128xf32, #tpu.memory_space<vmem>>, vector<1x32xf32>
    %c4 = arith.constant 4 : index
    %c0_4 = arith.constant 0 : index
    %4 = vector.load %arg2[%c4, %c0_4] : memref<208x128xf32, #tpu.memory_space<vmem>>, vector<1x32xf32>
    %c5 = arith.constant 5 : index
    %c0_5 = arith.constant 0 : index
    %5 = vector.load %arg2[%c5, %c0_5] : memref<208x128xf32, #tpu.memory_space<vmem>>, vector<1x64xf32>
    %c6 = arith.constant 6 : index
    %c0_6 = arith.constant 0 : index
    %6 = vector.load %arg2[%c6, %c0_6] : memref<208x128xf32, #tpu.memory_space<vmem>>, vector<1x96xf32>
    %c7 = arith.constant 7 : index
    %c0_7 = arith.constant 0 : index
    %7 = vector.load %arg2[%c7, %c0_7] : memref<208x128xf32, #tpu.memory_space<vmem>>, vector<1x96xf32>
    %c8 = arith.constant 8 : index
    %c0_8 = arith.constant 0 : index
    %8 = vector.load %arg2[%c8, %c0_8] : memref<208x128xf32, #tpu.memory_space<vmem>>, vector<8x32xf32>
    %c16 = arith.constant 16 : index
    %c0_9 = arith.constant 0 : index
    %9 = vector.load %arg2[%c16, %c0_9] : memref<208x128xf32, #tpu.memory_space<vmem>>, vector<32x32xf32>
    %c48 = arith.constant 48 : index
    %c0_10 = arith.constant 0 : index
    %10 = vector.load %arg2[%c48, %c0_10] : memref<208x128xf32, #tpu.memory_space<vmem>>, vector<32x96xf32>
    %c80 = arith.constant 80 : index
    %c0_11 = arith.constant 0 : index
    %11 = vector.load %arg2[%c80, %c0_11] : memref<208x128xf32, #tpu.memory_space<vmem>>, vector<32x96xf32>
    %c112 = arith.constant 112 : index
    %c0_12 = arith.constant 0 : index
    %12 = vector.load %arg2[%c112, %c0_12] : memref<208x128xf32, #tpu.memory_space<vmem>>, vector<32x64xf32>
    %c144 = arith.constant 144 : index
    %c0_13 = arith.constant 0 : index
    %13 = vector.load %arg2[%c144, %c0_13] : memref<208x128xf32, #tpu.memory_space<vmem>>, vector<64x32xf32>
    %c0_14 = arith.constant 0 : index
    %c0_15 = arith.constant 0 : index
    %14 = vector.load %arg1[%c0_14, %c0_15] : memref<32x32xf32, #tpu.memory_space<vmem>>, vector<32x32xf32>
    %cst = arith.constant dense<0.000000e+00> : vector<32xf32>
    %15 = vector.multi_reduction <add>, %14, %cst [1] : vector<32x32xf32> to vector<32xf32>
    %16 = vector.shape_cast %15 : vector<32xf32> to vector<32x1xf32>
    %cst_16 = arith.constant 3.200000e+01 : f32
    %17 = vector.broadcast %cst_16 : f32 to vector<32x1xf32>
    %18 = arith.divf %16, %17 : vector<32x1xf32>
    %19 = vector.broadcast %18 : vector<32x1xf32> to vector<32x32xf32>
    %20 = arith.subf %14, %19 : vector<32x32xf32>
    %21 = arith.mulf %20, %20 : vector<32x32xf32>
    %cst_17 = arith.constant dense<0.000000e+00> : vector<32xf32>
    %22 = vector.multi_reduction <add>, %21, %cst_17 [1] : vector<32x32xf32> to vector<32xf32>
    %23 = vector.shape_cast %22 : vector<32xf32> to vector<32x1xf32>
    %cst_18 = arith.constant 3.200000e+01 : f32
    %24 = vector.broadcast %cst_18 : f32 to vector<32x1xf32>
    %25 = arith.divf %23, %24 : vector<32x1xf32>
    %26 = vector.broadcast %18 : vector<32x1xf32> to vector<32x32xf32>
    %27 = arith.subf %14, %26 : vector<32x32xf32>
    %cst_19 = arith.constant 9.99999974E-6 : f32
    %28 = vector.broadcast %cst_19 : f32 to vector<32x1xf32>
    %29 = arith.addf %25, %28 : vector<32x1xf32>
    %30 = math.rsqrt %29 : vector<32x1xf32>
    %31 = vector.broadcast %30 : vector<32x1xf32> to vector<32x32xf32>
    %32 = arith.mulf %27, %31 : vector<32x32xf32>
    %33 = vector.broadcast %0 : vector<1x32xf32> to vector<32x32xf32>
    %34 = arith.mulf %32, %33 : vector<32x32xf32>
    %35 = vector.broadcast %1 : vector<1x32xf32> to vector<32x32xf32>
    %36 = arith.addf %34, %35 : vector<32x32xf32>
    %cst_20 = arith.constant dense<0.000000e+00> : vector<32x96xf32>
    %37 = tpu.matmul %36, %10, %cst_20 {dimension_numbers = #tpu.dot_dimension_numbers<[1], [0], [0], [1], [0, 0, 1, 1], [], []>} : vector<32x32xf32>, vector<32x96xf32>, vector<32x96xf32> -> vector<32x96xf32>
    %38 = vector.extract_strided_slice %36 {offsets = [0, 0], sizes = [16, 32], strides = [1, 1]} : vector<32x32xf32> to vector<16x32xf32>
    %cst_21 = arith.constant dense<0.000000e+00> : vector<32x16xf32>
    %39 = tpu.matmul %9, %38, %cst_21 {dimension_numbers = #tpu.dot_dimension_numbers<[1], [1], [0], [0], [0, 0, 1, 0], [], []>} : vector<32x32xf32>, vector<16x32xf32>, vector<32x16xf32> -> vector<32x16xf32>
    %40 = vector.extract_strided_slice %36 {offsets = [16, 0], sizes = [16, 32], strides = [1, 1]} : vector<32x32xf32> to vector<16x32xf32>
    %cst_22 = arith.constant dense<0.000000e+00> : vector<32x16xf32>
    %41 = tpu.matmul %9, %40, %cst_22 {dimension_numbers = #tpu.dot_dimension_numbers<[1], [1], [0], [0], [0, 0, 1, 0], [], []>} : vector<32x32xf32>, vector<16x32xf32>, vector<32x16xf32> -> vector<32x16xf32>
    %42 = tpu.concatenate %8, %8 in 0 : vector<8x32xf32>, vector<8x32xf32> -> vector<16x32xf32>
    %cst_23 = arith.constant dense<0.000000e+00> : vector<16xf32>
    %43 = vector.multi_reduction <add>, %42, %cst_23 [1] : vector<16x32xf32> to vector<16xf32>
    %44 = vector.shape_cast %43 : vector<16xf32> to vector<16x1xf32>
    %cst_24 = arith.constant 3.200000e+01 : f32
    %45 = vector.broadcast %cst_24 : f32 to vector<16x1xf32>
    %46 = arith.divf %44, %45 : vector<16x1xf32>
    %47 = vector.broadcast %46 : vector<16x1xf32> to vector<16x32xf32>
    %48 = arith.subf %42, %47 : vector<16x32xf32>
    %49 = arith.mulf %48, %48 : vector<16x32xf32>
    %cst_25 = arith.constant dense<0.000000e+00> : vector<16xf32>
    %50 = vector.multi_reduction <add>, %49, %cst_25 [1] : vector<16x32xf32> to vector<16xf32>
    %51 = vector.shape_cast %50 : vector<16xf32> to vector<16x1xf32>
    %cst_26 = arith.constant 3.200000e+01 : f32
    %52 = vector.broadcast %cst_26 : f32 to vector<16x1xf32>
    %53 = arith.divf %51, %52 : vector<16x1xf32>
    %54 = vector.broadcast %46 : vector<16x1xf32> to vector<16x32xf32>
    %55 = arith.subf %42, %54 : vector<16x32xf32>
    %cst_27 = arith.constant 9.99999974E-6 : f32
    %56 = vector.broadcast %cst_27 : f32 to vector<16x1xf32>
    %57 = arith.addf %53, %56 : vector<16x1xf32>
    %58 = math.rsqrt %57 : vector<16x1xf32>
    %59 = vector.broadcast %58 : vector<16x1xf32> to vector<16x32xf32>
    %60 = arith.mulf %55, %59 : vector<16x32xf32>
    %61 = vector.broadcast %2 : vector<1x32xf32> to vector<16x32xf32>
    %62 = arith.mulf %60, %61 : vector<16x32xf32>
    %63 = vector.broadcast %3 : vector<1x32xf32> to vector<16x32xf32>
    %64 = arith.addf %62, %63 : vector<16x32xf32>
    %65 = vector.extract_strided_slice %64 {offsets = [0, 0], sizes = [8, 32], strides = [1, 1]} : vector<16x32xf32> to vector<8x32xf32>
    %cst_28 = arith.constant dense<0.000000e+00> : vector<8x16xf32>
    %66 = tpu.matmul %65, %39, %cst_28 {dimension_numbers = #tpu.dot_dimension_numbers<[1], [0], [0], [1], [0, 0, 1, 1], [], []>} : vector<8x32xf32>, vector<32x16xf32>, vector<8x16xf32> -> vector<8x16xf32>
    %cst_29 = arith.constant dense<0xFF800000> : vector<16xf32>
    %67 = vector.multi_reduction <maximumf>, %66, %cst_29 [0] : vector<8x16xf32> to vector<16xf32>
    %68 = vector.shape_cast %67 : vector<16xf32> to vector<1x16xf32>
    %69 = vector.broadcast %68 : vector<1x16xf32> to vector<8x16xf32>
    %70 = arith.subf %66, %69 : vector<8x16xf32>
    %71 = math.exp %70 : vector<8x16xf32>
    %cst_30 = arith.constant dense<0.000000e+00> : vector<16xf32>
    %72 = vector.multi_reduction <add>, %71, %cst_30 [0] : vector<8x16xf32> to vector<16xf32>
    %73 = vector.shape_cast %72 : vector<16xf32> to vector<1x16xf32>
    %74 = vector.broadcast %73 : vector<1x16xf32> to vector<8x16xf32>
    %75 = arith.divf %71, %74 : vector<8x16xf32>
    %cst_31 = arith.constant 9.99999993E-9 : f32
    %76 = vector.broadcast %cst_31 : f32 to vector<8x16xf32>
    %77 = arith.addf %75, %76 : vector<8x16xf32>
    %cst_32 = arith.constant dense<0.000000e+00> : vector<8xf32>
    %78 = vector.multi_reduction <add>, %77, %cst_32 [1] : vector<8x16xf32> to vector<8xf32>
    %79 = vector.shape_cast %78 : vector<8xf32> to vector<8x1xf32>
    %80 = vector.broadcast %79 : vector<8x1xf32> to vector<8x16xf32>
    %81 = arith.divf %77, %80 : vector<8x16xf32>
    %82 = vector.extract_strided_slice %37 {offsets = [0, 0], sizes = [16, 96], strides = [1, 1]} : vector<32x96xf32> to vector<16x96xf32>
    %cst_33 = arith.constant dense<0.000000e+00> : vector<8x96xf32>
    %83 = tpu.matmul %81, %82, %cst_33 {dimension_numbers = #tpu.dot_dimension_numbers<[1], [0], [0], [1], [0, 0, 1, 1], [], []>} : vector<8x16xf32>, vector<16x96xf32>, vector<8x96xf32> -> vector<8x96xf32>
    %84 = vector.extract_strided_slice %64 {offsets = [8, 0], sizes = [8, 32], strides = [1, 1]} : vector<16x32xf32> to vector<8x32xf32>
    %cst_34 = arith.constant dense<0.000000e+00> : vector<8x16xf32>
    %85 = tpu.matmul %84, %41, %cst_34 {dimension_numbers = #tpu.dot_dimension_numbers<[1], [0], [0], [1], [0, 0, 1, 1], [], []>} : vector<8x32xf32>, vector<32x16xf32>, vector<8x16xf32> -> vector<8x16xf32>
    %cst_35 = arith.constant dense<0xFF800000> : vector<16xf32>
    %86 = vector.multi_reduction <maximumf>, %85, %cst_35 [0] : vector<8x16xf32> to vector<16xf32>
    %87 = vector.shape_cast %86 : vector<16xf32> to vector<1x16xf32>
    %88 = vector.broadcast %87 : vector<1x16xf32> to vector<8x16xf32>
    %89 = arith.subf %85, %88 : vector<8x16xf32>
    %90 = math.exp %89 : vector<8x16xf32>
    %cst_36 = arith.constant dense<0.000000e+00> : vector<16xf32>
    %91 = vector.multi_reduction <add>, %90, %cst_36 [0] : vector<8x16xf32> to vector<16xf32>
    %92 = vector.shape_cast %91 : vector<16xf32> to vector<1x16xf32>
    %93 = vector.broadcast %92 : vector<1x16xf32> to vector<8x16xf32>
    %94 = arith.divf %90, %93 : vector<8x16xf32>
    %cst_37 = arith.constant 9.99999993E-9 : f32
    %95 = vector.broadcast %cst_37 : f32 to vector<8x16xf32>
    %96 = arith.addf %94, %95 : vector<8x16xf32>
    %cst_38 = arith.constant dense<0.000000e+00> : vector<8xf32>
    %97 = vector.multi_reduction <add>, %96, %cst_38 [1] : vector<8x16xf32> to vector<8xf32>
    %98 = vector.shape_cast %97 : vector<8xf32> to vector<8x1xf32>
    %99 = vector.broadcast %98 : vector<8x1xf32> to vector<8x16xf32>
    %100 = arith.divf %96, %99 : vector<8x16xf32>
    %101 = vector.extract_strided_slice %37 {offsets = [16, 0], sizes = [16, 96], strides = [1, 1]} : vector<32x96xf32> to vector<16x96xf32>
    %cst_39 = arith.constant dense<0.000000e+00> : vector<8x96xf32>
    %102 = tpu.matmul %100, %101, %cst_39 {dimension_numbers = #tpu.dot_dimension_numbers<[1], [0], [0], [1], [0, 0, 1, 1], [], []>} : vector<8x16xf32>, vector<16x96xf32>, vector<8x96xf32> -> vector<8x96xf32>
    %103 = tpu.concatenate %83, %102 in 0 : vector<8x96xf32>, vector<8x96xf32> -> vector<16x96xf32>
    %104 = vector.broadcast %6 : vector<1x96xf32> to vector<16x96xf32>
    %105 = arith.addf %103, %104 : vector<16x96xf32>
    %cst_40 = arith.constant dense<0.000000e+00> : vector<16x96xf32>
    %106 = tpu.matmul %42, %11, %cst_40 {dimension_numbers = #tpu.dot_dimension_numbers<[1], [0], [0], [1], [0, 0, 1, 1], [], []>} : vector<16x32xf32>, vector<32x96xf32>, vector<16x96xf32> -> vector<16x96xf32>
    %107 = vector.broadcast %7 : vector<1x96xf32> to vector<16x96xf32>
    %108 = arith.addf %106, %107 : vector<16x96xf32>
    %109 = vector.extract_strided_slice %105 {offsets = [0, 0], sizes = [16, 32], strides = [1, 1]} : vector<16x96xf32> to vector<16x32xf32>
    %110 = vector.extract_strided_slice %108 {offsets = [0, 0], sizes = [16, 32], strides = [1, 1]} : vector<16x96xf32> to vector<16x32xf32>
    %111 = arith.addf %109, %110 : vector<16x32xf32>
    %112 = arith.negf %111 : vector<16x32xf32>
    %113 = math.exp %112 : vector<16x32xf32>
    %cst_41 = arith.constant 1.000000e+00 : f32
    %114 = vector.broadcast %cst_41 : f32 to vector<16x32xf32>
    %115 = arith.addf %114, %113 : vector<16x32xf32>
    %116 = arith.divf %114, %115 : vector<16x32xf32>
    %117 = vector.extract_strided_slice %105 {offsets = [0, 32], sizes = [16, 32], strides = [1, 1]} : vector<16x96xf32> to vector<16x32xf32>
    %118 = vector.extract_strided_slice %108 {offsets = [0, 32], sizes = [16, 32], strides = [1, 1]} : vector<16x96xf32> to vector<16x32xf32>
    %119 = arith.addf %117, %118 : vector<16x32xf32>
    %120 = arith.negf %119 : vector<16x32xf32>
    %121 = math.exp %120 : vector<16x32xf32>
    %cst_42 = arith.constant 1.000000e+00 : f32
    %122 = vector.broadcast %cst_42 : f32 to vector<16x32xf32>
    %123 = arith.addf %122, %121 : vector<16x32xf32>
    %124 = arith.divf %122, %123 : vector<16x32xf32>
    %125 = vector.extract_strided_slice %105 {offsets = [0, 64], sizes = [16, 32], strides = [1, 1]} : vector<16x96xf32> to vector<16x32xf32>
    %126 = vector.extract_strided_slice %108 {offsets = [0, 64], sizes = [16, 32], strides = [1, 1]} : vector<16x96xf32> to vector<16x32xf32>
    %127 = arith.mulf %116, %126 : vector<16x32xf32>
    %128 = arith.addf %125, %127 : vector<16x32xf32>
    %129 = math.tanh %128 : vector<16x32xf32>
    %cst_43 = arith.constant 1.000000e+00 : f32
    %130 = vector.broadcast %cst_43 : f32 to vector<16x32xf32>
    %131 = arith.subf %130, %124 : vector<16x32xf32>
    %132 = arith.mulf %131, %129 : vector<16x32xf32>
    %133 = arith.mulf %124, %42 : vector<16x32xf32>
    %134 = arith.addf %132, %133 : vector<16x32xf32>
    %cst_44 = arith.constant dense<0.000000e+00> : vector<16x64xf32>
    %135 = tpu.matmul %134, %12, %cst_44 {dimension_numbers = #tpu.dot_dimension_numbers<[1], [0], [0], [1], [0, 0, 1, 1], [], []>} : vector<16x32xf32>, vector<32x64xf32>, vector<16x64xf32> -> vector<16x64xf32>
    %136 = vector.broadcast %5 : vector<1x64xf32> to vector<16x64xf32>
    %137 = arith.addf %135, %136 : vector<16x64xf32>
    %cst_45 = arith.constant 0.000000e+00 : f32
    %138 = vector.broadcast %cst_45 : f32 to vector<16x64xf32>
    %139 = arith.maximumf %137, %138 : vector<16x64xf32>
    %cst_46 = arith.constant dense<0.000000e+00> : vector<16x32xf32>
    %140 = tpu.matmul %139, %13, %cst_46 {dimension_numbers = #tpu.dot_dimension_numbers<[1], [0], [0], [1], [0, 0, 1, 1], [], []>} : vector<16x64xf32>, vector<64x32xf32>, vector<16x32xf32> -> vector<16x32xf32>
    %141 = arith.addf %134, %140 : vector<16x32xf32>
    %142 = vector.broadcast %4 : vector<1x32xf32> to vector<16x32xf32>
    %143 = arith.addf %141, %142 : vector<16x32xf32>
    %cst_47 = arith.constant dense<0.000000e+00> : vector<16xf32>
    %144 = vector.multi_reduction <add>, %143, %cst_47 [1] : vector<16x32xf32> to vector<16xf32>
    %145 = vector.shape_cast %144 : vector<16xf32> to vector<16x1xf32>
    %cst_48 = arith.constant 3.200000e+01 : f32
    %146 = vector.broadcast %cst_48 : f32 to vector<16x1xf32>
    %147 = arith.divf %145, %146 : vector<16x1xf32>
    %148 = vector.broadcast %147 : vector<16x1xf32> to vector<16x32xf32>
    %149 = arith.subf %143, %148 : vector<16x32xf32>
    %150 = arith.mulf %149, %149 : vector<16x32xf32>
    %cst_49 = arith.constant dense<0.000000e+00> : vector<16xf32>
    %151 = vector.multi_reduction <add>, %150, %cst_49 [1] : vector<16x32xf32> to vector<16xf32>
    %152 = vector.shape_cast %151 : vector<16xf32> to vector<16x1xf32>
    %cst_50 = arith.constant 3.200000e+01 : f32
    %153 = vector.broadcast %cst_50 : f32 to vector<16x1xf32>
    %154 = arith.divf %152, %153 : vector<16x1xf32>
    %155 = vector.broadcast %147 : vector<16x1xf32> to vector<16x32xf32>
    %156 = arith.subf %143, %155 : vector<16x32xf32>
    %cst_51 = arith.constant 9.99999974E-6 : f32
    %157 = vector.broadcast %cst_51 : f32 to vector<16x1xf32>
    %158 = arith.addf %154, %157 : vector<16x1xf32>
    %159 = math.rsqrt %158 : vector<16x1xf32>
    %160 = vector.broadcast %159 : vector<16x1xf32> to vector<16x32xf32>
    %161 = arith.mulf %156, %160 : vector<16x32xf32>
    %162 = vector.broadcast %2 : vector<1x32xf32> to vector<16x32xf32>
    %163 = arith.mulf %161, %162 : vector<16x32xf32>
    %164 = vector.broadcast %3 : vector<1x32xf32> to vector<16x32xf32>
    %165 = arith.addf %163, %164 : vector<16x32xf32>
    %166 = vector.extract_strided_slice %165 {offsets = [0, 0], sizes = [8, 32], strides = [1, 1]} : vector<16x32xf32> to vector<8x32xf32>
    %cst_52 = arith.constant dense<0.000000e+00> : vector<8x16xf32>
    %167 = tpu.matmul %166, %39, %cst_52 {dimension_numbers = #tpu.dot_dimension_numbers<[1], [0], [0], [1], [0, 0, 1, 1], [], []>} : vector<8x32xf32>, vector<32x16xf32>, vector<8x16xf32> -> vector<8x16xf32>
    %cst_53 = arith.constant dense<0xFF800000> : vector<16xf32>
    %168 = vector.multi_reduction <maximumf>, %167, %cst_53 [0] : vector<8x16xf32> to vector<16xf32>
    %169 = vector.shape_cast %168 : vector<16xf32> to vector<1x16xf32>
    %170 = vector.broadcast %169 : vector<1x16xf32> to vector<8x16xf32>
    %171 = arith.subf %167, %170 : vector<8x16xf32>
    %172 = math.exp %171 : vector<8x16xf32>
    %cst_54 = arith.constant dense<0.000000e+00> : vector<16xf32>
    %173 = vector.multi_reduction <add>, %172, %cst_54 [0] : vector<8x16xf32> to vector<16xf32>
    %174 = vector.shape_cast %173 : vector<16xf32> to vector<1x16xf32>
    %175 = vector.broadcast %174 : vector<1x16xf32> to vector<8x16xf32>
    %176 = arith.divf %172, %175 : vector<8x16xf32>
    %cst_55 = arith.constant 9.99999993E-9 : f32
    %177 = vector.broadcast %cst_55 : f32 to vector<8x16xf32>
    %178 = arith.addf %176, %177 : vector<8x16xf32>
    %cst_56 = arith.constant dense<0.000000e+00> : vector<8xf32>
    %179 = vector.multi_reduction <add>, %178, %cst_56 [1] : vector<8x16xf32> to vector<8xf32>
    %180 = vector.shape_cast %179 : vector<8xf32> to vector<8x1xf32>
    %181 = vector.broadcast %180 : vector<8x1xf32> to vector<8x16xf32>
    %182 = arith.divf %178, %181 : vector<8x16xf32>
    %183 = vector.extract_strided_slice %37 {offsets = [0, 0], sizes = [16, 96], strides = [1, 1]} : vector<32x96xf32> to vector<16x96xf32>
    %cst_57 = arith.constant dense<0.000000e+00> : vector<8x96xf32>
    %184 = tpu.matmul %182, %183, %cst_57 {dimension_numbers = #tpu.dot_dimension_numbers<[1], [0], [0], [1], [0, 0, 1, 1], [], []>} : vector<8x16xf32>, vector<16x96xf32>, vector<8x96xf32> -> vector<8x96xf32>
    %185 = vector.extract_strided_slice %165 {offsets = [8, 0], sizes = [8, 32], strides = [1, 1]} : vector<16x32xf32> to vector<8x32xf32>
    %cst_58 = arith.constant dense<0.000000e+00> : vector<8x16xf32>
    %186 = tpu.matmul %185, %41, %cst_58 {dimension_numbers = #tpu.dot_dimension_numbers<[1], [0], [0], [1], [0, 0, 1, 1], [], []>} : vector<8x32xf32>, vector<32x16xf32>, vector<8x16xf32> -> vector<8x16xf32>
    %cst_59 = arith.constant dense<0xFF800000> : vector<16xf32>
    %187 = vector.multi_reduction <maximumf>, %186, %cst_59 [0] : vector<8x16xf32> to vector<16xf32>
    %188 = vector.shape_cast %187 : vector<16xf32> to vector<1x16xf32>
    %189 = vector.broadcast %188 : vector<1x16xf32> to vector<8x16xf32>
    %190 = arith.subf %186, %189 : vector<8x16xf32>
    %191 = math.exp %190 : vector<8x16xf32>
    %cst_60 = arith.constant dense<0.000000e+00> : vector<16xf32>
    %192 = vector.multi_reduction <add>, %191, %cst_60 [0] : vector<8x16xf32> to vector<16xf32>
    %193 = vector.shape_cast %192 : vector<16xf32> to vector<1x16xf32>
    %194 = vector.broadcast %193 : vector<1x16xf32> to vector<8x16xf32>
    %195 = arith.divf %191, %194 : vector<8x16xf32>
    %cst_61 = arith.constant 9.99999993E-9 : f32
    %196 = vector.broadcast %cst_61 : f32 to vector<8x16xf32>
    %197 = arith.addf %195, %196 : vector<8x16xf32>
    %cst_62 = arith.constant dense<0.000000e+00> : vector<8xf32>
    %198 = vector.multi_reduction <add>, %197, %cst_62 [1] : vector<8x16xf32> to vector<8xf32>
    %199 = vector.shape_cast %198 : vector<8xf32> to vector<8x1xf32>
    %200 = vector.broadcast %199 : vector<8x1xf32> to vector<8x16xf32>
    %201 = arith.divf %197, %200 : vector<8x16xf32>
    %202 = vector.extract_strided_slice %37 {offsets = [16, 0], sizes = [16, 96], strides = [1, 1]} : vector<32x96xf32> to vector<16x96xf32>
    %cst_63 = arith.constant dense<0.000000e+00> : vector<8x96xf32>
    %203 = tpu.matmul %201, %202, %cst_63 {dimension_numbers = #tpu.dot_dimension_numbers<[1], [0], [0], [1], [0, 0, 1, 1], [], []>} : vector<8x16xf32>, vector<16x96xf32>, vector<8x96xf32> -> vector<8x96xf32>
    %204 = tpu.concatenate %184, %203 in 0 : vector<8x96xf32>, vector<8x96xf32> -> vector<16x96xf32>
    %205 = vector.broadcast %6 : vector<1x96xf32> to vector<16x96xf32>
    %206 = arith.addf %204, %205 : vector<16x96xf32>
    %cst_64 = arith.constant dense<0.000000e+00> : vector<16x96xf32>
    %207 = tpu.matmul %143, %11, %cst_64 {dimension_numbers = #tpu.dot_dimension_numbers<[1], [0], [0], [1], [0, 0, 1, 1], [], []>} : vector<16x32xf32>, vector<32x96xf32>, vector<16x96xf32> -> vector<16x96xf32>
    %208 = vector.broadcast %7 : vector<1x96xf32> to vector<16x96xf32>
    %209 = arith.addf %207, %208 : vector<16x96xf32>
    %210 = vector.extract_strided_slice %206 {offsets = [0, 0], sizes = [16, 32], strides = [1, 1]} : vector<16x96xf32> to vector<16x32xf32>
    %211 = vector.extract_strided_slice %209 {offsets = [0, 0], sizes = [16, 32], strides = [1, 1]} : vector<16x96xf32> to vector<16x32xf32>
    %212 = arith.addf %210, %211 : vector<16x32xf32>
    %213 = arith.negf %212 : vector<16x32xf32>
    %214 = math.exp %213 : vector<16x32xf32>
    %cst_65 = arith.constant 1.000000e+00 : f32
    %215 = vector.broadcast %cst_65 : f32 to vector<16x32xf32>
    %216 = arith.addf %215, %214 : vector<16x32xf32>
    %217 = arith.divf %215, %216 : vector<16x32xf32>
    %218 = vector.extract_strided_slice %206 {offsets = [0, 32], sizes = [16, 32], strides = [1, 1]} : vector<16x96xf32> to vector<16x32xf32>
    %219 = vector.extract_strided_slice %209 {offsets = [0, 32], sizes = [16, 32], strides = [1, 1]} : vector<16x96xf32> to vector<16x32xf32>
    %220 = arith.addf %218, %219 : vector<16x32xf32>
    %221 = arith.negf %220 : vector<16x32xf32>
    %222 = math.exp %221 : vector<16x32xf32>
    %cst_66 = arith.constant 1.000000e+00 : f32
    %223 = vector.broadcast %cst_66 : f32 to vector<16x32xf32>
    %224 = arith.addf %223, %222 : vector<16x32xf32>
    %225 = arith.divf %223, %224 : vector<16x32xf32>
    %226 = vector.extract_strided_slice %206 {offsets = [0, 64], sizes = [16, 32], strides = [1, 1]} : vector<16x96xf32> to vector<16x32xf32>
    %227 = vector.extract_strided_slice %209 {offsets = [0, 64], sizes = [16, 32], strides = [1, 1]} : vector<16x96xf32> to vector<16x32xf32>
    %228 = arith.mulf %217, %227 : vector<16x32xf32>
    %229 = arith.addf %226, %228 : vector<16x32xf32>
    %230 = math.tanh %229 : vector<16x32xf32>
    %cst_67 = arith.constant 1.000000e+00 : f32
    %231 = vector.broadcast %cst_67 : f32 to vector<16x32xf32>
    %232 = arith.subf %231, %225 : vector<16x32xf32>
    %233 = arith.mulf %232, %230 : vector<16x32xf32>
    %234 = arith.mulf %225, %143 : vector<16x32xf32>
    %235 = arith.addf %233, %234 : vector<16x32xf32>
    %cst_68 = arith.constant dense<0.000000e+00> : vector<16x64xf32>
    %236 = tpu.matmul %235, %12, %cst_68 {dimension_numbers = #tpu.dot_dimension_numbers<[1], [0], [0], [1], [0, 0, 1, 1], [], []>} : vector<16x32xf32>, vector<32x64xf32>, vector<16x64xf32> -> vector<16x64xf32>
    %237 = vector.broadcast %5 : vector<1x64xf32> to vector<16x64xf32>
    %238 = arith.addf %236, %237 : vector<16x64xf32>
    %cst_69 = arith.constant 0.000000e+00 : f32
    %239 = vector.broadcast %cst_69 : f32 to vector<16x64xf32>
    %240 = arith.maximumf %238, %239 : vector<16x64xf32>
    %cst_70 = arith.constant dense<0.000000e+00> : vector<16x32xf32>
    %241 = tpu.matmul %240, %13, %cst_70 {dimension_numbers = #tpu.dot_dimension_numbers<[1], [0], [0], [1], [0, 0, 1, 1], [], []>} : vector<16x64xf32>, vector<64x32xf32>, vector<16x32xf32> -> vector<16x32xf32>
    %242 = arith.addf %235, %241 : vector<16x32xf32>
    %243 = vector.broadcast %4 : vector<1x32xf32> to vector<16x32xf32>
    %244 = arith.addf %242, %243 : vector<16x32xf32>
    %cst_71 = arith.constant dense<0.000000e+00> : vector<16xf32>
    %245 = vector.multi_reduction <add>, %244, %cst_71 [1] : vector<16x32xf32> to vector<16xf32>
    %246 = vector.shape_cast %245 : vector<16xf32> to vector<16x1xf32>
    %cst_72 = arith.constant 3.200000e+01 : f32
    %247 = vector.broadcast %cst_72 : f32 to vector<16x1xf32>
    %248 = arith.divf %246, %247 : vector<16x1xf32>
    %249 = vector.broadcast %248 : vector<16x1xf32> to vector<16x32xf32>
    %250 = arith.subf %244, %249 : vector<16x32xf32>
    %251 = arith.mulf %250, %250 : vector<16x32xf32>
    %cst_73 = arith.constant dense<0.000000e+00> : vector<16xf32>
    %252 = vector.multi_reduction <add>, %251, %cst_73 [1] : vector<16x32xf32> to vector<16xf32>
    %253 = vector.shape_cast %252 : vector<16xf32> to vector<16x1xf32>
    %cst_74 = arith.constant 3.200000e+01 : f32
    %254 = vector.broadcast %cst_74 : f32 to vector<16x1xf32>
    %255 = arith.divf %253, %254 : vector<16x1xf32>
    %256 = vector.broadcast %248 : vector<16x1xf32> to vector<16x32xf32>
    %257 = arith.subf %244, %256 : vector<16x32xf32>
    %cst_75 = arith.constant 9.99999974E-6 : f32
    %258 = vector.broadcast %cst_75 : f32 to vector<16x1xf32>
    %259 = arith.addf %255, %258 : vector<16x1xf32>
    %260 = math.rsqrt %259 : vector<16x1xf32>
    %261 = vector.broadcast %260 : vector<16x1xf32> to vector<16x32xf32>
    %262 = arith.mulf %257, %261 : vector<16x32xf32>
    %263 = vector.broadcast %2 : vector<1x32xf32> to vector<16x32xf32>
    %264 = arith.mulf %262, %263 : vector<16x32xf32>
    %265 = vector.broadcast %3 : vector<1x32xf32> to vector<16x32xf32>
    %266 = arith.addf %264, %265 : vector<16x32xf32>
    %267 = vector.extract_strided_slice %266 {offsets = [0, 0], sizes = [8, 32], strides = [1, 1]} : vector<16x32xf32> to vector<8x32xf32>
    %cst_76 = arith.constant dense<0.000000e+00> : vector<8x16xf32>
    %268 = tpu.matmul %267, %39, %cst_76 {dimension_numbers = #tpu.dot_dimension_numbers<[1], [0], [0], [1], [0, 0, 1, 1], [], []>} : vector<8x32xf32>, vector<32x16xf32>, vector<8x16xf32> -> vector<8x16xf32>
    %cst_77 = arith.constant dense<0xFF800000> : vector<16xf32>
    %269 = vector.multi_reduction <maximumf>, %268, %cst_77 [0] : vector<8x16xf32> to vector<16xf32>
    %270 = vector.shape_cast %269 : vector<16xf32> to vector<1x16xf32>
    %271 = vector.broadcast %270 : vector<1x16xf32> to vector<8x16xf32>
    %272 = arith.subf %268, %271 : vector<8x16xf32>
    %273 = math.exp %272 : vector<8x16xf32>
    %cst_78 = arith.constant dense<0.000000e+00> : vector<16xf32>
    %274 = vector.multi_reduction <add>, %273, %cst_78 [0] : vector<8x16xf32> to vector<16xf32>
    %275 = vector.shape_cast %274 : vector<16xf32> to vector<1x16xf32>
    %276 = vector.broadcast %275 : vector<1x16xf32> to vector<8x16xf32>
    %277 = arith.divf %273, %276 : vector<8x16xf32>
    %cst_79 = arith.constant 9.99999993E-9 : f32
    %278 = vector.broadcast %cst_79 : f32 to vector<8x16xf32>
    %279 = arith.addf %277, %278 : vector<8x16xf32>
    %cst_80 = arith.constant dense<0.000000e+00> : vector<8xf32>
    %280 = vector.multi_reduction <add>, %279, %cst_80 [1] : vector<8x16xf32> to vector<8xf32>
    %281 = vector.shape_cast %280 : vector<8xf32> to vector<8x1xf32>
    %282 = vector.broadcast %281 : vector<8x1xf32> to vector<8x16xf32>
    %283 = arith.divf %279, %282 : vector<8x16xf32>
    %284 = vector.extract_strided_slice %37 {offsets = [0, 0], sizes = [16, 96], strides = [1, 1]} : vector<32x96xf32> to vector<16x96xf32>
    %cst_81 = arith.constant dense<0.000000e+00> : vector<8x96xf32>
    %285 = tpu.matmul %283, %284, %cst_81 {dimension_numbers = #tpu.dot_dimension_numbers<[1], [0], [0], [1], [0, 0, 1, 1], [], []>} : vector<8x16xf32>, vector<16x96xf32>, vector<8x96xf32> -> vector<8x96xf32>
    %286 = vector.extract_strided_slice %266 {offsets = [8, 0], sizes = [8, 32], strides = [1, 1]} : vector<16x32xf32> to vector<8x32xf32>
    %cst_82 = arith.constant dense<0.000000e+00> : vector<8x16xf32>
    %287 = tpu.matmul %286, %41, %cst_82 {dimension_numbers = #tpu.dot_dimension_numbers<[1], [0], [0], [1], [0, 0, 1, 1], [], []>} : vector<8x32xf32>, vector<32x16xf32>, vector<8x16xf32> -> vector<8x16xf32>
    %cst_83 = arith.constant dense<0xFF800000> : vector<16xf32>
    %288 = vector.multi_reduction <maximumf>, %287, %cst_83 [0] : vector<8x16xf32> to vector<16xf32>
    %289 = vector.shape_cast %288 : vector<16xf32> to vector<1x16xf32>
    %290 = vector.broadcast %289 : vector<1x16xf32> to vector<8x16xf32>
    %291 = arith.subf %287, %290 : vector<8x16xf32>
    %292 = math.exp %291 : vector<8x16xf32>
    %cst_84 = arith.constant dense<0.000000e+00> : vector<16xf32>
    %293 = vector.multi_reduction <add>, %292, %cst_84 [0] : vector<8x16xf32> to vector<16xf32>
    %294 = vector.shape_cast %293 : vector<16xf32> to vector<1x16xf32>
    %295 = vector.broadcast %294 : vector<1x16xf32> to vector<8x16xf32>
    %296 = arith.divf %292, %295 : vector<8x16xf32>
    %cst_85 = arith.constant 9.99999993E-9 : f32
    %297 = vector.broadcast %cst_85 : f32 to vector<8x16xf32>
    %298 = arith.addf %296, %297 : vector<8x16xf32>
    %cst_86 = arith.constant dense<0.000000e+00> : vector<8xf32>
    %299 = vector.multi_reduction <add>, %298, %cst_86 [1] : vector<8x16xf32> to vector<8xf32>
    %300 = vector.shape_cast %299 : vector<8xf32> to vector<8x1xf32>
    %301 = vector.broadcast %300 : vector<8x1xf32> to vector<8x16xf32>
    %302 = arith.divf %298, %301 : vector<8x16xf32>
    %303 = vector.extract_strided_slice %37 {offsets = [16, 0], sizes = [16, 96], strides = [1, 1]} : vector<32x96xf32> to vector<16x96xf32>
    %cst_87 = arith.constant dense<0.000000e+00> : vector<8x96xf32>
    %304 = tpu.matmul %302, %303, %cst_87 {dimension_numbers = #tpu.dot_dimension_numbers<[1], [0], [0], [1], [0, 0, 1, 1], [], []>} : vector<8x16xf32>, vector<16x96xf32>, vector<8x96xf32> -> vector<8x96xf32>
    %305 = tpu.concatenate %285, %304 in 0 : vector<8x96xf32>, vector<8x96xf32> -> vector<16x96xf32>
    %306 = vector.broadcast %6 : vector<1x96xf32> to vector<16x96xf32>
    %307 = arith.addf %305, %306 : vector<16x96xf32>
    %cst_88 = arith.constant dense<0.000000e+00> : vector<16x96xf32>
    %308 = tpu.matmul %244, %11, %cst_88 {dimension_numbers = #tpu.dot_dimension_numbers<[1], [0], [0], [1], [0, 0, 1, 1], [], []>} : vector<16x32xf32>, vector<32x96xf32>, vector<16x96xf32> -> vector<16x96xf32>
    %309 = vector.broadcast %7 : vector<1x96xf32> to vector<16x96xf32>
    %310 = arith.addf %308, %309 : vector<16x96xf32>
    %311 = vector.extract_strided_slice %307 {offsets = [0, 0], sizes = [16, 32], strides = [1, 1]} : vector<16x96xf32> to vector<16x32xf32>
    %312 = vector.extract_strided_slice %310 {offsets = [0, 0], sizes = [16, 32], strides = [1, 1]} : vector<16x96xf32> to vector<16x32xf32>
    %313 = arith.addf %311, %312 : vector<16x32xf32>
    %314 = arith.negf %313 : vector<16x32xf32>
    %315 = math.exp %314 : vector<16x32xf32>
    %cst_89 = arith.constant 1.000000e+00 : f32
    %316 = vector.broadcast %cst_89 : f32 to vector<16x32xf32>
    %317 = arith.addf %316, %315 : vector<16x32xf32>
    %318 = arith.divf %316, %317 : vector<16x32xf32>
    %319 = vector.extract_strided_slice %307 {offsets = [0, 32], sizes = [16, 32], strides = [1, 1]} : vector<16x96xf32> to vector<16x32xf32>
    %320 = vector.extract_strided_slice %310 {offsets = [0, 32], sizes = [16, 32], strides = [1, 1]} : vector<16x96xf32> to vector<16x32xf32>
    %321 = arith.addf %319, %320 : vector<16x32xf32>
    %322 = arith.negf %321 : vector<16x32xf32>
    %323 = math.exp %322 : vector<16x32xf32>
    %cst_90 = arith.constant 1.000000e+00 : f32
    %324 = vector.broadcast %cst_90 : f32 to vector<16x32xf32>
    %325 = arith.addf %324, %323 : vector<16x32xf32>
    %326 = arith.divf %324, %325 : vector<16x32xf32>
    %327 = vector.extract_strided_slice %307 {offsets = [0, 64], sizes = [16, 32], strides = [1, 1]} : vector<16x96xf32> to vector<16x32xf32>
    %328 = vector.extract_strided_slice %310 {offsets = [0, 64], sizes = [16, 32], strides = [1, 1]} : vector<16x96xf32> to vector<16x32xf32>
    %329 = arith.mulf %318, %328 : vector<16x32xf32>
    %330 = arith.addf %327, %329 : vector<16x32xf32>
    %331 = math.tanh %330 : vector<16x32xf32>
    %cst_91 = arith.constant 1.000000e+00 : f32
    %332 = vector.broadcast %cst_91 : f32 to vector<16x32xf32>
    %333 = arith.subf %332, %326 : vector<16x32xf32>
    %334 = arith.mulf %333, %331 : vector<16x32xf32>
    %335 = arith.mulf %326, %244 : vector<16x32xf32>
    %336 = arith.addf %334, %335 : vector<16x32xf32>
    %cst_92 = arith.constant dense<0.000000e+00> : vector<16x64xf32>
    %337 = tpu.matmul %336, %12, %cst_92 {dimension_numbers = #tpu.dot_dimension_numbers<[1], [0], [0], [1], [0, 0, 1, 1], [], []>} : vector<16x32xf32>, vector<32x64xf32>, vector<16x64xf32> -> vector<16x64xf32>
    %338 = vector.broadcast %5 : vector<1x64xf32> to vector<16x64xf32>
    %339 = arith.addf %337, %338 : vector<16x64xf32>
    %cst_93 = arith.constant 0.000000e+00 : f32
    %340 = vector.broadcast %cst_93 : f32 to vector<16x64xf32>
    %341 = arith.maximumf %339, %340 : vector<16x64xf32>
    %cst_94 = arith.constant dense<0.000000e+00> : vector<16x32xf32>
    %342 = tpu.matmul %341, %13, %cst_94 {dimension_numbers = #tpu.dot_dimension_numbers<[1], [0], [0], [1], [0, 0, 1, 1], [], []>} : vector<16x64xf32>, vector<64x32xf32>, vector<16x32xf32> -> vector<16x32xf32>
    %343 = arith.addf %336, %342 : vector<16x32xf32>
    %344 = vector.broadcast %4 : vector<1x32xf32> to vector<16x32xf32>
    %345 = arith.addf %343, %344 : vector<16x32xf32>
    %c0_95 = arith.constant 0 : index
    %c0_96 = arith.constant 0 : index
    %346 = vector.load %arg3[%c0_95, %c0_96] : memref<16x32xf32, #tpu.memory_space<vmem>>, vector<16x32xf32>
    tpu.vector_store %arg3[%c0_95, %c0_96], %345 {strides = array<i32>} : memref<16x32xf32, #tpu.memory_space<vmem>>, vector<16x32xf32>,
    return
  }
  func.func @transform_0(%arg0: i32) -> (i32, i32) {
    %c0_i32 = arith.constant 0 : i32
    %c0_i32_0 = arith.constant 0 : i32
    return %arg0, %c0_i32 : i32, i32
  }
  func.func @transform_1(%arg0: i32) -> (i32, i32) {
    %c0_i32 = arith.constant 0 : i32
    %c0_i32_0 = arith.constant 0 : i32
    %c0_i32_1 = arith.constant 0 : i32
    return %c0_i32, %c0_i32_0 : i32, i32
  }
  func.func @transform_2(%arg0: i32) -> (i32, i32) {
    %c0_i32 = arith.constant 0 : i32
    %c0_i32_0 = arith.constant 0 : i32
    return %arg0, %c0_i32 : i32, i32
  }
}

</mosaic_0001>

<llo_original>
// kernel: tpu_custom_call.1
$region0: #{tpu_custom_call.1}
  #allocation0 [shape = 'u32[]', space=smem, size = 0x4, offset = 0x4, fixed_abs, tag = 'smem constant byte address 0x4 - core index']
  #allocation1 [shape = 'u32[144,128]{1,0:T(1,128)}', space=vmem, size = 0x12000, scoped, tag = 'internal scratch']
  %s0 = inlined_call_operand.hbm [shape: f32[32,32], index: 0, kind: input, shape index: {}]
  %s1 = inlined_call_operand.hbm [shape: f32[208,128], index: 1, kind: input, shape index: {}]
  %s2 = inlined_call_operand.hbm [shape: f32[16,32], index: 2, kind: output, shape index: {}]
  %s3 = sld [smem:[#allocation0]]
  $region26: #{tpu_custom_call.1} parent=0
    _
  %s5 = ssub.s32 1, %s3
  %s6 = scalar_select 0, %s5, %s3
  $region1: #{tpu_custom_call.1} parent=0
    #allocation2 [shape = 'u8[16384]{0}', space=vmem, size = 0x4000, scoped, tag = 'input window, operand 0, single buffered']
    #allocation3 [shape = 's32[1]{0}', space=sflag, size = 0x4, scoped, tag = 'scoped memory for tpu_custom_call.1']
    #allocation4 [shape = 's32[1]{0}', space=sflag, size = 0x4, scoped, tag = 'scoped memory for tpu_custom_call.1']
    #allocation5 [shape = 'u8[106496]{0}', space=vmem, size = 0x1a000, scoped, tag = 'input window, operand 1, single buffered']
    #allocation6 [shape = 's32[1]{0}', space=sflag, size = 0x4, scoped, tag = 'scoped memory for tpu_custom_call.1']
    #allocation7 [shape = 'u8[8192]{0}', space=vmem, size = 0x2000, scoped, tag = 'output window, operand 0, single buffered']
    %7 = vsyncpa [#allocation3], 0
    %8 = vsyncpa [#allocation6], 0
    %9 = vsyncpa [#allocation4], 0
    // Predicated region
    $region2: #{tpu_custom_call.1} parent=1 // pred_check
      _
    $region3: #{tpu_custom_call.1} parent=1 // pred_check_branch
      %11 = sbr.rel (0) target = $region5
    $region4: #{tpu_custom_call.1} parent=1 // pred_region
      %s13 = ssub.s32 512, 512
      %14 = vsyncadd [#allocation3], %s13
      %s15 = sshll.u32 [#allocation2], 4
      %s16 = int_to_ptr.vmem [resolvable:$true] %s15
      %21 = dma.hbm_to_vmem [thread:$0]  %s0, 512, %s16, [#allocation3], 128, 128, 8
    $region5: #{tpu_custom_call.1} parent=1 // pred_fallthru
      _
    // Predicated region
    $region6: #{tpu_custom_call.1} parent=1 // pred_check
      _
    $region7: #{tpu_custom_call.1} parent=1 // pred_check_branch
      %23 = sbr.rel (0) target = $region9
    $region8: #{tpu_custom_call.1} parent=1 // pred_region
      %s25 = ssub.s32 3328, 3328
      %26 = vsyncadd [#allocation6], %s25
      %s27 = sshll.u32 [#allocation5], 4
      %s28 = int_to_ptr.vmem [resolvable:$true] %s27
      %33 = dma.hbm_to_vmem [thread:$0]  %s1, 3328, %s28, [#allocation6], 128, 128, 8
    $region9: #{tpu_custom_call.1} parent=1 // pred_fallthru
      _
    // Predicated region
    $region10: #{tpu_custom_call.1} parent=1 // pred_check
      _
    $region11: #{tpu_custom_call.1} parent=1 // pred_check_branch
      %35 = sbr.rel (0) target = $region13
    $region12: #{tpu_custom_call.1} parent=1 // pred_region
      %36 = dma.done [#allocation3], 512
    $region13: #{tpu_custom_call.1} parent=1 // pred_fallthru
      _
    // Predicated region
    $region14: #{tpu_custom_call.1} parent=1 // pred_check
      _
    $region15: #{tpu_custom_call.1} parent=1 // pred_check_branch
      %38 = sbr.rel (0) target = $region17
    $region16: #{tpu_custom_call.1} parent=1 // pred_region
      %39 = dma.done [#allocation6], 3328
    $region17: #{tpu_custom_call.1} parent=1 // pred_fallthru
      _
    %v40 = vld [vmem:[#allocation5] sm:$0x1]
    %v41 = vld [vmem:[#allocation5 + $0x1] sm:$0x1]
    %v42 = vld [vmem:[#allocation5 + $0x2] sm:$0x1]
    %v43 = vld [vmem:[#allocation5 + $0x3] sm:$0x1]
    %v44 = vld [vmem:[#allocation5 + $0x4] sm:$0x1]
    %v45 = vld [vmem:[#allocation5 + $0x5] sm:$0x1]
    %v46 = vld [vmem:[#allocation5 + $0x6] sm:$0x1]
    %v47 = vld [vmem:[#allocation5 + $0x7] sm:$0x1]
    %v48 = vld [vmem:[#allocation5 + $0x8] sm:$0xff]
    %v49 = vld [vmem:[#allocation5 + $0x10] sm:$0xff]
    %v50 = vld [vmem:[#allocation5 + $0x18] sm:$0xff]
    %v51 = vld [vmem:[#allocation5 + $0x20] sm:$0xff]
    %v52 = vld [vmem:[#allocation5 + $0x28] sm:$0xff]
    %v53 = vld [vmem:[#allocation5 + $0x30] sm:$0xff]
    %v54 = vld [vmem:[#allocation5 + $0x38] sm:$0xff]
    %v55 = vld [vmem:[#allocation5 + $0x40] sm:$0xff]
    %v56 = vld [vmem:[#allocation5 + $0x48] sm:$0xff]
    %v57 = vld [vmem:[#allocation5 + $0x50] sm:$0xff]
    %v58 = vld [vmem:[#allocation5 + $0x58] sm:$0xff]
    %v59 = vld [vmem:[#allocation5 + $0x60] sm:$0xff]
    %v60 = vld [vmem:[#allocation5 + $0x68] sm:$0xff]
    %v61 = vld [vmem:[#allocation5 + $0x70] sm:$0xff]
    %v62 = vld [vmem:[#allocation5 + $0x78] sm:$0xff]
    %v63 = vld [vmem:[#allocation5 + $0x80] sm:$0xff]
    %v64 = vld [vmem:[#allocation5 + $0x88] sm:$0xff]
    %v65 = vld [vmem:[#allocation5 + $0x90] sm:$0xff]
    %v66 = vld [vmem:[#allocation5 + $0x98] sm:$0xff]
    %v67 = vld [vmem:[#allocation5 + $0xa0] sm:$0xff]
    %v68 = vld [vmem:[#allocation5 + $0xa8] sm:$0xff]
    %v69 = vld [vmem:[#allocation5 + $0xb0] sm:$0xff]
    %v70 = vld [vmem:[#allocation5 + $0xb8] sm:$0xff]
    %v71 = vld [vmem:[#allocation5 + $0xc0] sm:$0xff]
    %v72 = vld [vmem:[#allocation5 + $0xc8] sm:$0xff]
    %v73 = vld [vmem:[#allocation2] sm:$0xff]
    %v74 = vld [vmem:[#allocation2 + $0x8] sm:$0xff]
    %v75 = vld [vmem:[#allocation2 + $0x10] sm:$0xff]
    %v76 = vld [vmem:[#allocation2 + $0x18] sm:$0xff]
    %vm77 = vcmask 261120
    %v78 = vsel %vm77, %v73, 0.0
    %79 = vadd.xlane.f32.xlu0 %v78
    %v80 = vpop.xlane.xlu0 %79
    %v81 = vsel %vm77, %v74, 0.0
    %82 = vadd.xlane.f32.xlu0 %v81
    %v83 = vpop.xlane.xlu0 %82
    %v84 = vsel %vm77, %v75, 0.0
    %85 = vadd.xlane.f32.xlu0 %v84
    %v86 = vpop.xlane.xlu0 %85
    %v87 = vsel %vm77, %v76, 0.0
    %88 = vadd.xlane.f32.xlu0 %v87
    %v89 = vpop.xlane.xlu0 %88
    %v90 = vrcp.pop 32.0
    %v91 = vmul.f32 %v80, %v90
    %v92 = vmul.f32 %v83, %v90
    %v93 = vmul.f32 %v86, %v90
    %v94 = vmul.f32 %v89, %v90
    %v95 = vsub.f32 %v73, %v91
    %v96 = vsub.f32 %v74, %v92
    %v97 = vsub.f32 %v75, %v93
    %v98 = vsub.f32 %v76, %v94
    %v99 = vmul.f32 %v95, %v95
    %v100 = vmul.f32 %v96, %v96
    %v101 = vmul.f32 %v97, %v97
    %v102 = vmul.f32 %v98, %v98
    %v103 = vsel %vm77, %v99, 0.0
    %104 = vadd.xlane.f32.xlu0 %v103
    %v105 = vpop.xlane.xlu0 %104
    %v106 = vsel %vm77, %v100, 0.0
    %107 = vadd.xlane.f32.xlu0 %v106
    %v108 = vpop.xlane.xlu0 %107
    %v109 = vsel %vm77, %v101, 0.0
    %110 = vadd.xlane.f32.xlu0 %v109
    %v111 = vpop.xlane.xlu0 %110
    %v112 = vsel %vm77, %v102, 0.0
    %113 = vadd.xlane.f32.xlu0 %v112
    %v114 = vpop.xlane.xlu0 %113
    %v115 = vmul.f32 %v105, %v90
    %v116 = vmul.f32 %v108, %v90
    %v117 = vmul.f32 %v111, %v90
    %v118 = vmul.f32 %v114, %v90
    %v119 = vadd.f32 %v115, 1e-05
    %v120 = vadd.f32 %v116, 1e-05
    %v121 = vadd.f32 %v117, 1e-05
    %v122 = vadd.f32 %v118, 1e-05
    %v123 = vrsqrt.pop %v119
    %v124 = vrsqrt.pop %v120
    %v125 = vrsqrt.pop %v121
    %v126 = vrsqrt.pop %v122
    %v127 = vmul.f32 %v95, %v123
    %v128 = vmul.f32 %v96, %v124
    %v129 = vmul.f32 %v97, %v125
    %v130 = vmul.f32 %v98, %v126
    %v131 = vlaneseq
    %v132 = vshrl.u32 %v131, 7
    %v133 = vsub.s32 0, %v132
    %v134 = vrot.slane %v40, %v133
    %v135 = vmul.f32 %v127, %v134
    %v136 = vmul.f32 %v128, %v134
    %v137 = vmul.f32 %v129, %v134
    %v138 = vmul.f32 %v130, %v134
    %v139 = vlaneseq
    %v140 = vshrl.u32 %v139, 7
    %v141 = vsub.s32 0, %v140
    %v142 = vrot.slane %v41, %v141
    %v143 = vadd.f32 %v135, %v142
    %v144 = vadd.f32 %v136, %v142
    %v145 = vadd.f32 %v137, %v142
    %v146 = vadd.f32 %v138, %v142
    %v148 = vsel %vm77, %v143, 0
    %v151 = vsel %vm77, %v144, 0
    %v154 = vsel %vm77, %v145, 0
    %v157 = vsel %vm77, %v146, 0
    %159 = vmatprep.subr.mxu0 0.0
    %160 = vmatpush1.msra.mxu0 %v53
    %161 = vmatprep.subr.mxu0 0.0
    %162 = vmatpush1.msra.mxu0 %v54
    %163 = vmatprep.subr.mxu0 0.0
    %164 = vmatpush1.msra.mxu0 %v55
    %165 = vmatprep.subr.mxu0 0.0
    %166 = vmatpush1.msra.mxu0 %v56
    %167 = vmatprep.subr.mxu0 0.0
    %168 = vmatpush1.msra.mxu0 0.0
    %169 = vmatprep.subr.mxu0 0.0
    %170 = vmatpush1.msra.mxu0 0.0
    %171 = vmatprep.subr.mxu0 0.0
    %172 = vmatpush1.msra.mxu0 0.0
    %173 = vmatprep.subr.mxu0 0.0
    %174 = vmatpush1.msra.mxu0 0.0
    %175 = vmatprep.subr.mxu0 0.0
    %176 = vmatpush1.msra.mxu0 0.0
    %177 = vmatprep.subr.mxu0 0.0
    %178 = vmatpush1.msra.mxu0 0.0
    %179 = vmatprep.subr.mxu0 0.0
    %180 = vmatpush1.msra.mxu0 0.0
    %181 = vmatprep.subr.mxu0 0.0
    %182 = vmatpush1.msra.mxu0 0.0
    %183 = vmatprep.subr.mxu0 0.0
    %184 = vmatpush1.msra.mxu0 0.0
    %185 = vmatprep.subr.mxu0 0.0
    %186 = vmatpush1.msra.mxu0 0.0
    %187 = vmatprep.subr.mxu0 0.0
    %188 = vmatpush1.msra.mxu0 0.0
    %189 = vmatprep.subr.mxu0 0.0
    %190 = vmatpush1.msra.mxu0 0.0
    %191 = vmatprep.subr.mxu0 0.0
    %192 = vmatpush1.msra.mxu0 0.0
    %193 = vmatprep.subr.mxu0 0.0
    %194 = vmatpush1.msra.mxu0 0.0
    %195 = vmatprep.subr.mxu0 0.0
    %196 = vmatpush1.msra.mxu0 0.0
    %197 = vmatprep.subr.mxu0 0.0
    %198 = vmatpush1.msra.mxu0 0.0
    %199 = vmatprep.subr.mxu0 0.0
    %200 = vmatpush1.msra.mxu0 0.0
    %201 = vmatprep.subr.mxu0 0.0
    %202 = vmatpush1.msra.mxu0 0.0
    %203 = vmatprep.subr.mxu0 0.0
    %204 = vmatpush1.msra.mxu0 0.0
    %205 = vmatprep.subr.mxu0 0.0
    %206 = vmatpush1.msra.mxu0 0.0
    %207 = vmatprep.subr.mxu0 0.0
    %208 = vmatpush1.msra.mxu0 0.0
    %209 = vmatprep.subr.mxu0 0.0
    %210 = vmatpush1.msra.mxu0 0.0
    %211 = vmatprep.subr.mxu0 0.0
    %212 = vmatpush1.msra.mxu0 0.0
    %213 = vmatprep.subr.mxu0 0.0
    %214 = vmatpush1.msra.mxu0 0.0
    %215 = vmatprep.subr.mxu0 0.0
    %216 = vmatpush1.msra.mxu0 0.0
    %217 = vmatprep.subr.mxu0 0.0
    %218 = vmatpush1.msra.mxu0 0.0
    %219 = vmatprep.subr.mxu0 0.0
    %220 = vmatpush1.msra.mxu0 0.0
    %221 = vmatprep.subr.mxu0 0.0
    %222 = vmatpush1.msra.mxu0 0.0
    %223 = vmatprep.mubr.f32.mxu0 0.0
    %224 = vmatmul.mubr.f32.gmra.mrb[0].mxu0 %v148
    %v225 = vpop.f32.mrb[0].mxu0
    %v226 = vadd.f32 0.0, %v225
    %v227 = vpop.f32.mrb[0].mxu0
    %228 = vmatprep.mubr.f32.mxu0 0.0
    %229 = vmatmul.mubr.f32.gmra.mrb[0].mxu0 %v151
    %v230 = vpop.f32.mrb[0].mxu0
    %v231 = vadd.f32 0.0, %v230
    %v232 = vpop.f32.mrb[0].mxu0
    %233 = vmatprep.mubr.f32.mxu0 0.0
    %234 = vmatmul.mubr.f32.gmra.mrb[0].mxu0 %v154
    %v235 = vpop.f32.mrb[0].mxu0
    %v236 = vadd.f32 0.0, %v235
    %v237 = vpop.f32.mrb[0].mxu0
    %238 = vmatprep.mubr.f32.mxu0 0.0
    %239 = vmatmul.mubr.f32.gmra.mrb[0].mxu0 %v157
    %v240 = vpop.f32.mrb[0].mxu0
    %v241 = vadd.f32 0.0, %v240
    %v242 = vpop.f32.mrb[0].mxu0
    %243 = vdwg.mxu0
    %v245 = vsel %vm77, %v49, 0
    %v248 = vsel %vm77, %v50, 0
    %v251 = vsel %vm77, %v51, 0
    %v254 = vsel %vm77, %v52, 0
    %256 = vmatprep.subr.mxu0 0.0
    %257 = vmatpush1.xpose.msra.mxu0 %v148
    %258 = vmatprep.subr.mxu0 0.0
    %259 = vmatpush1.xpose.msra.mxu0 %v151
    %260 = vmatprep.subr.mxu0 0.0
    %261 = vmatpush1.xpose.msra.mxu0 0.0
    %262 = vmatprep.subr.mxu0 0.0
    %263 = vmatpush1.xpose.msra.mxu0 0.0
    %264 = vmatprep.subr.mxu0 0.0
    %265 = vmatpush1.xpose.msra.mxu0 0.0
    %266 = vmatprep.subr.mxu0 0.0
    %267 = vmatpush1.xpose.msra.mxu0 0.0
    %268 = vmatprep.subr.mxu0 0.0
    %269 = vmatpush1.xpose.msra.mxu0 0.0
    %270 = vmatprep.subr.mxu0 0.0
    %271 = vmatpush1.xpose.msra.mxu0 0.0
    %272 = vmatprep.subr.mxu0 0.0
    %273 = vmatpush1.xpose.msra.mxu0 0.0
    %274 = vmatprep.subr.mxu0 0.0
    %275 = vmatpush1.xpose.msra.mxu0 0.0
    %276 = vmatprep.subr.mxu0 0.0
    %277 = vmatpush1.xpose.msra.mxu0 0.0
    %278 = vmatprep.subr.mxu0 0.0
    %279 = vmatpush1.xpose.msra.mxu0 0.0
    %280 = vmatprep.subr.mxu0 0.0
    %281 = vmatpush1.xpose.msra.mxu0 0.0
    %282 = vmatprep.subr.mxu0 0.0
    %283 = vmatpush1.xpose.msra.mxu0 0.0
    %284 = vmatprep.subr.mxu0 0.0
    %285 = vmatpush1.xpose.msra.mxu0 0.0
    %286 = vmatprep.subr.mxu0 0.0
    %287 = vmatpush1.xpose.msra.mxu0 0.0
    %288 = vmatprep.subr.mxu0 0.0
    %289 = vmatpush1.xpose.msra.mxu0 0.0
    %290 = vmatprep.subr.mxu0 0.0
    %291 = vmatpush1.xpose.msra.mxu0 0.0
    %292 = vmatprep.subr.mxu0 0.0
    %293 = vmatpush1.xpose.msra.mxu0 0.0
    %294 = vmatprep.subr.mxu0 0.0
    %295 = vmatpush1.xpose.msra.mxu0 0.0
    %296 = vmatprep.subr.mxu0 0.0
    %297 = vmatpush1.xpose.msra.mxu0 0.0
    %298 = vmatprep.subr.mxu0 0.0
    %299 = vmatpush1.xpose.msra.mxu0 0.0
    %300 = vmatprep.subr.mxu0 0.0
    %301 = vmatpush1.xpose.msra.mxu0 0.0
    %302 = vmatprep.subr.mxu0 0.0
    %303 = vmatpush1.xpose.msra.mxu0 0.0
    %304 = vmatprep.subr.mxu0 0.0
    %305 = vmatpush1.xpose.msra.mxu0 0.0
    %306 = vmatprep.subr.mxu0 0.0
    %307 = vmatpush1.xpose.msra.mxu0 0.0
    %308 = vmatprep.subr.mxu0 0.0
    %309 = vmatpush1.xpose.msra.mxu0 0.0
    %310 = vmatprep.subr.mxu0 0.0
    %311 = vmatpush1.xpose.msra.mxu0 0.0
    %312 = vmatprep.subr.mxu0 0.0
    %313 = vmatpush1.xpose.msra.mxu0 0.0
    %314 = vmatprep.subr.mxu0 0.0
    %315 = vmatpush1.xpose.msra.mxu0 0.0
    %316 = vmatprep.subr.mxu0 0.0
    %317 = vmatpush1.xpose.msra.mxu0 0.0
    %318 = vmatprep.subr.mxu0 0.0
    %319 = vmatpush1.xpose.msra.mxu0 0.0
    %320 = vmatprep.mubr.f32.mxu0 0.0
    %321 = vmatmul.mubr.f32.gmra.mrb[0].mxu0 %v245
    %v322 = vpop.f32.mrb[0].mxu0
    %v323 = vadd.f32 0.0, %v322
    %v324 = vpop.f32.mrb[0].mxu0
    %325 = vmatprep.mubr.f32.mxu0 0.0
    %326 = vmatmul.mubr.f32.gmra.mrb[0].mxu0 %v248
    %v327 = vpop.f32.mrb[0].mxu0
    %v328 = vadd.f32 0.0, %v327
    %v329 = vpop.f32.mrb[0].mxu0
    %330 = vmatprep.mubr.f32.mxu0 0.0
    %331 = vmatmul.mubr.f32.gmra.mrb[0].mxu0 %v251
    %v332 = vpop.f32.mrb[0].mxu0
    %v333 = vadd.f32 0.0, %v332
    %v334 = vpop.f32.mrb[0].mxu0
    %335 = vmatprep.mubr.f32.mxu0 0.0
    %336 = vmatmul.mubr.f32.gmra.mrb[0].mxu0 %v254
    %v337 = vpop.f32.mrb[0].mxu0
    %v338 = vadd.f32 0.0, %v337
    %v339 = vpop.f32.mrb[0].mxu0
    %340 = vdwg.mxu0
    %341 = vmatprep.subr.mxu0 0.0
    %342 = vmatpush1.xpose.msra.mxu0 %v154
    %343 = vmatprep.subr.mxu0 0.0
    %344 = vmatpush1.xpose.msra.mxu0 %v157
    %345 = vmatprep.subr.mxu0 0.0
    %346 = vmatpush1.xpose.msra.mxu0 0.0
    %347 = vmatprep.subr.mxu0 0.0
    %348 = vmatpush1.xpose.msra.mxu0 0.0
    %349 = vmatprep.subr.mxu0 0.0
    %350 = vmatpush1.xpose.msra.mxu0 0.0
    %351 = vmatprep.subr.mxu0 0.0
    %352 = vmatpush1.xpose.msra.mxu0 0.0
    %353 = vmatprep.subr.mxu0 0.0
    %354 = vmatpush1.xpose.msra.mxu0 0.0
    %355 = vmatprep.subr.mxu0 0.0
    %356 = vmatpush1.xpose.msra.mxu0 0.0
    %357 = vmatprep.subr.mxu0 0.0
    %358 = vmatpush1.xpose.msra.mxu0 0.0
    %359 = vmatprep.subr.mxu0 0.0
    %360 = vmatpush1.xpose.msra.mxu0 0.0
    %361 = vmatprep.subr.mxu0 0.0
    %362 = vmatpush1.xpose.msra.mxu0 0.0
    %363 = vmatprep.subr.mxu0 0.0
    %364 = vmatpush1.xpose.msra.mxu0 0.0
    %365 = vmatprep.subr.mxu0 0.0
    %366 = vmatpush1.xpose.msra.mxu0 0.0
    %367 = vmatprep.subr.mxu0 0.0
    %368 = vmatpush1.xpose.msra.mxu0 0.0
    %369 = vmatprep.subr.mxu0 0.0
    %370 = vmatpush1.xpose.msra.mxu0 0.0
    %371 = vmatprep.subr.mxu0 0.0
    %372 = vmatpush1.xpose.msra.mxu0 0.0
    %373 = vmatprep.subr.mxu0 0.0
    %374 = vmatpush1.xpose.msra.mxu0 0.0
    %375 = vmatprep.subr.mxu0 0.0
    %376 = vmatpush1.xpose.msra.mxu0 0.0
    %377 = vmatprep.subr.mxu0 0.0
    %378 = vmatpush1.xpose.msra.mxu0 0.0
    %379 = vmatprep.subr.mxu0 0.0
    %380 = vmatpush1.xpose.msra.mxu0 0.0
    %381 = vmatprep.subr.mxu0 0.0
    %382 = vmatpush1.xpose.msra.mxu0 0.0
    %383 = vmatprep.subr.mxu0 0.0
    %384 = vmatpush1.xpose.msra.mxu0 0.0
    %385 = vmatprep.subr.mxu0 0.0
    %386 = vmatpush1.xpose.msra.mxu0 0.0
    %387 = vmatprep.subr.mxu0 0.0
    %388 = vmatpush1.xpose.msra.mxu0 0.0
    %389 = vmatprep.subr.mxu0 0.0
    %390 = vmatpush1.xpose.msra.mxu0 0.0
    %391 = vmatprep.subr.mxu0 0.0
    %392 = vmatpush1.xpose.msra.mxu0 0.0
    %393 = vmatprep.subr.mxu0 0.0
    %394 = vmatpush1.xpose.msra.mxu0 0.0
    %395 = vmatprep.subr.mxu0 0.0
    %396 = vmatpush1.xpose.msra.mxu0 0.0
    %397 = vmatprep.subr.mxu0 0.0
    %398 = vmatpush1.xpose.msra.mxu0 0.0
    %399 = vmatprep.subr.mxu0 0.0
    %400 = vmatpush1.xpose.msra.mxu0 0.0
    %401 = vmatprep.subr.mxu0 0.0
    %402 = vmatpush1.xpose.msra.mxu0 0.0
    %403 = vmatprep.subr.mxu0 0.0
    %404 = vmatpush1.xpose.msra.mxu0 0.0
    %405 = vmatprep.mubr.f32.mxu0 0.0
    %406 = vmatmul.mubr.f32.gmra.mrb[0].mxu0 %v245
    %v407 = vpop.f32.mrb[0].mxu0
    %v408 = vadd.f32 0.0, %v407
    %v409 = vpop.f32.mrb[0].mxu0
    %410 = vmatprep.mubr.f32.mxu0 0.0
    %411 = vmatmul.mubr.f32.gmra.mrb[0].mxu0 %v248
    %v412 = vpop.f32.mrb[0].mxu0
    %v413 = vadd.f32 0.0, %v412
    %v414 = vpop.f32.mrb[0].mxu0
    %415 = vmatprep.mubr.f32.mxu0 0.0
    %416 = vmatmul.mubr.f32.gmra.mrb[0].mxu0 %v251
    %v417 = vpop.f32.mrb[0].mxu0
    %v418 = vadd.f32 0.0, %v417
    %v419 = vpop.f32.mrb[0].mxu0
    %420 = vmatprep.mubr.f32.mxu0 0.0
    %421 = vmatmul.mubr.f32.gmra.mrb[0].mxu0 %v254
    %v422 = vpop.f32.mrb[0].mxu0
    %v423 = vadd.f32 0.0, %v422
    %v424 = vpop.f32.mrb[0].mxu0
    %425 = vdwg.mxu0
    %v426 = vsel %vm77, %v48, 0.0
    %427 = vadd.xlane.f32.xlu0 %v426
    %v428 = vpop.xlane.xlu0 %427
    %v429 = vmul.f32 %v428, %v90
    %v430 = vsub.f32 %v48, %v429
    %v431 = vmul.f32 %v430, %v430
    %v432 = vsel %vm77, %v431, 0.0
    %433 = vadd.xlane.f32.xlu0 %v432
    %v434 = vpop.xlane.xlu0 %433
    %v435 = vmul.f32 %v434, %v90
    %v436 = vadd.f32 %v435, 1e-05
    %v437 = vrsqrt.pop %v436
    %v438 = vmul.f32 %v430, %v437
    %v439 = vlaneseq
    %v440 = vshrl.u32 %v439, 7
    %v441 = vsub.s32 0, %v440
    %v442 = vrot.slane %v42, %v441
    %v443 = vmul.f32 %v438, %v442
    %v444 = vlaneseq
    %v445 = vshrl.u32 %v444, 7
    %v446 = vsub.s32 0, %v445
    %v447 = vrot.slane %v43, %v446
    %v448 = vadd.f32 %v443, %v447
    %v450 = vsel %vm77, %v448, 0
    %452 = vmatprep.subr.mxu0 0.0
    %453 = vmatpush1.msra.mxu0 %v323
    %454 = vmatprep.subr.mxu0 0.0
    %455 = vmatpush1.msra.mxu0 %v328
    %456 = vmatprep.subr.mxu0 0.0
    %457 = vmatpush1.msra.mxu0 %v333
    %458 = vmatprep.subr.mxu0 0.0
    %459 = vmatpush1.msra.mxu0 %v338
    %460 = vmatprep.subr.mxu0 0.0
    %461 = vmatpush1.msra.mxu0 0.0
    %462 = vmatprep.subr.mxu0 0.0
    %463 = vmatpush1.msra.mxu0 0.0
    %464 = vmatprep.subr.mxu0 0.0
    %465 = vmatpush1.msra.mxu0 0.0
    %466 = vmatprep.subr.mxu0 0.0
    %467 = vmatpush1.msra.mxu0 0.0
    %468 = vmatprep.subr.mxu0 0.0
    %469 = vmatpush1.msra.mxu0 0.0
    %470 = vmatprep.subr.mxu0 0.0
    %471 = vmatpush1.msra.mxu0 0.0
    %472 = vmatprep.subr.mxu0 0.0
    %473 = vmatpush1.msra.mxu0 0.0
    %474 = vmatprep.subr.mxu0 0.0
    %475 = vmatpush1.msra.mxu0 0.0
    %476 = vmatprep.subr.mxu0 0.0
    %477 = vmatpush1.msra.mxu0 0.0
    %478 = vmatprep.subr.mxu0 0.0
    %479 = vmatpush1.msra.mxu0 0.0
    %480 = vmatprep.subr.mxu0 0.0
    %481 = vmatpush1.msra.mxu0 0.0
    %482 = vmatprep.subr.mxu0 0.0
    %483 = vmatpush1.msra.mxu0 0.0
    %484 = vmatprep.subr.mxu0 0.0
    %485 = vmatpush1.msra.mxu0 0.0
    %486 = vmatprep.subr.mxu0 0.0
    %487 = vmatpush1.msra.mxu0 0.0
    %488 = vmatprep.subr.mxu0 0.0
    %489 = vmatpush1.msra.mxu0 0.0
    %490 = vmatprep.subr.mxu0 0.0
    %491 = vmatpush1.msra.mxu0 0.0
    %492 = vmatprep.subr.mxu0 0.0
    %493 = vmatpush1.msra.mxu0 0.0
    %494 = vmatprep.subr.mxu0 0.0
    %495 = vmatpush1.msra.mxu0 0.0
    %496 = vmatprep.subr.mxu0 0.0
    %497 = vmatpush1.msra.mxu0 0.0
    %498 = vmatprep.subr.mxu0 0.0
    %499 = vmatpush1.msra.mxu0 0.0
    %500 = vmatprep.subr.mxu0 0.0
    %501 = vmatpush1.msra.mxu0 0.0
    %502 = vmatprep.subr.mxu0 0.0
    %503 = vmatpush1.msra.mxu0 0.0
    %504 = vmatprep.subr.mxu0 0.0
    %505 = vmatpush1.msra.mxu0 0.0
    %506 = vmatprep.subr.mxu0 0.0
    %507 = vmatpush1.msra.mxu0 0.0
    %508 = vmatprep.subr.mxu0 0.0
    %509 = vmatpush1.msra.mxu0 0.0
    %510 = vmatprep.subr.mxu0 0.0
    %511 = vmatpush1.msra.mxu0 0.0
    %512 = vmatprep.subr.mxu0 0.0
    %513 = vmatpush1.msra.mxu0 0.0
    %514 = vmatprep.subr.mxu0 0.0
    %515 = vmatpush1.msra.mxu0 0.0
    %516 = vmatprep.mubr.f32.mxu0 0.0
    %517 = vmatmul.mubr.f32.gmra.mrb[0].mxu0 %v450
    %v518 = vpop.f32.mrb[0].mxu0
    %v519 = vadd.f32 0.0, %v518
    %v520 = vpop.f32.mrb[0].mxu0
    %521 = vdwg.mxu0
    %vm522 = vcmask 130048
    %v523 = vsel %vm522, %v519, -inf
    %v524 = vrot.slane %v523, 4
    %v525 = vmax.f32 %v523, %v524
    %v526 = vrot.slane %v525, 2
    %v527 = vmax.f32 %v525, %v526
    %v528 = vrot.slane %v527, 1
    %v529 = vmax.f32 %v527, %v528
    %v530 = vsub.f32 %v519, %v529
    %v531 = vmul.f32 %v530, 1.442695
    %v532 = vpow.pop %v531
    %v533 = vsel %vm522, %v532, 0.0
    %v534 = vrot.slane %v533, 4
    %v535 = vadd.f32 %v533, %v534
    %v536 = vrot.slane %v535, 2
    %v537 = vadd.f32 %v535, %v536
    %v538 = vrot.slane %v537, 1
    %v539 = vadd.f32 %v537, %v538
    %v540 = vrcp.pop %v539
    %v541 = vmul.f32 %v532, %v540
    %v542 = vadd.f32 %v541, 1e-08
    %v543 = vsel %vm522, %v542, 0.0
    %544 = vadd.xlane.f32.xlu0 %v543
    %v545 = vpop.xlane.xlu0 %544
    %v546 = vrcp.pop %v545
    %v547 = vmul.f32 %v542, %v546
    %v549 = vsel %vm522, %v547, 0
    %551 = vmatprep.subr.mxu0 0.0
    %552 = vmatpush1.msra.mxu0 %v226
    %553 = vmatprep.subr.mxu0 0.0
    %554 = vmatpush1.msra.mxu0 %v231
    %555 = vmatprep.subr.mxu0 0.0
    %556 = vmatpush1.msra.mxu0 0.0
    %557 = vmatprep.subr.mxu0 0.0
    %558 = vmatpush1.msra.mxu0 0.0
    %559 = vmatprep.subr.mxu0 0.0
    %560 = vmatpush1.msra.mxu0 0.0
    %561 = vmatprep.subr.mxu0 0.0
    %562 = vmatpush1.msra.mxu0 0.0
    %563 = vmatprep.subr.mxu0 0.0
    %564 = vmatpush1.msra.mxu0 0.0
    %565 = vmatprep.subr.mxu0 0.0
    %566 = vmatpush1.msra.mxu0 0.0
    %567 = vmatprep.subr.mxu0 0.0
    %568 = vmatpush1.msra.mxu0 0.0
    %569 = vmatprep.subr.mxu0 0.0
    %570 = vmatpush1.msra.mxu0 0.0
    %571 = vmatprep.subr.mxu0 0.0
    %572 = vmatpush1.msra.mxu0 0.0
    %573 = vmatprep.subr.mxu0 0.0
    %574 = vmatpush1.msra.mxu0 0.0
    %575 = vmatprep.subr.mxu0 0.0
    %576 = vmatpush1.msra.mxu0 0.0
    %577 = vmatprep.subr.mxu0 0.0
    %578 = vmatpush1.msra.mxu0 0.0
    %579 = vmatprep.subr.mxu0 0.0
    %580 = vmatpush1.msra.mxu0 0.0
    %581 = vmatprep.subr.mxu0 0.0
    %582 = vmatpush1.msra.mxu0 0.0
    %583 = vmatprep.subr.mxu0 0.0
    %584 = vmatpush1.msra.mxu0 0.0
    %585 = vmatprep.subr.mxu0 0.0
    %586 = vmatpush1.msra.mxu0 0.0
    %587 = vmatprep.subr.mxu0 0.0
    %588 = vmatpush1.msra.mxu0 0.0
    %589 = vmatprep.subr.mxu0 0.0
    %590 = vmatpush1.msra.mxu0 0.0
    %591 = vmatprep.subr.mxu0 0.0
    %592 = vmatpush1.msra.mxu0 0.0
    %593 = vmatprep.subr.mxu0 0.0
    %594 = vmatpush1.msra.mxu0 0.0
    %595 = vmatprep.subr.mxu0 0.0
    %596 = vmatpush1.msra.mxu0 0.0
    %597 = vmatprep.subr.mxu0 0.0
    %598 = vmatpush1.msra.mxu0 0.0
    %599 = vmatprep.subr.mxu0 0.0
    %600 = vmatpush1.msra.mxu0 0.0
    %601 = vmatprep.subr.mxu0 0.0
    %602 = vmatpush1.msra.mxu0 0.0
    %603 = vmatprep.subr.mxu0 0.0
    %604 = vmatpush1.msra.mxu0 0.0
    %605 = vmatprep.subr.mxu0 0.0
    %606 = vmatpush1.msra.mxu0 0.0
    %607 = vmatprep.subr.mxu0 0.0
    %608 = vmatpush1.msra.mxu0 0.0
    %609 = vmatprep.subr.mxu0 0.0
    %610 = vmatpush1.msra.mxu0 0.0
    %611 = vmatprep.subr.mxu0 0.0
    %612 = vmatpush1.msra.mxu0 0.0
    %613 = vmatprep.subr.mxu0 0.0
    %614 = vmatpush1.msra.mxu0 0.0
    %615 = vmatprep.mubr.f32.mxu0 0.0
    %616 = vmatmul.mubr.f32.gmra.mrb[0].mxu0 %v549
    %v617 = vpop.f32.mrb[0].mxu0
    %v618 = vadd.f32 0.0, %v617
    %v619 = vpop.f32.mrb[0].mxu0
    %620 = vdwg.mxu0
    %621 = vmatprep.subr.mxu0 0.0
    %622 = vmatpush1.msra.mxu0 %v408
    %623 = vmatprep.subr.mxu0 0.0
    %624 = vmatpush1.msra.mxu0 %v413
    %625 = vmatprep.subr.mxu0 0.0
    %626 = vmatpush1.msra.mxu0 %v418
    %627 = vmatprep.subr.mxu0 0.0
    %628 = vmatpush1.msra.mxu0 %v423
    %629 = vmatprep.subr.mxu0 0.0
    %630 = vmatpush1.msra.mxu0 0.0
    %631 = vmatprep.subr.mxu0 0.0
    %632 = vmatpush1.msra.mxu0 0.0
    %633 = vmatprep.subr.mxu0 0.0
    %634 = vmatpush1.msra.mxu0 0.0
    %635 = vmatprep.subr.mxu0 0.0
    %636 = vmatpush1.msra.mxu0 0.0
    %637 = vmatprep.subr.mxu0 0.0
    %638 = vmatpush1.msra.mxu0 0.0
    %639 = vmatprep.subr.mxu0 0.0
    %640 = vmatpush1.msra.mxu0 0.0
    %641 = vmatprep.subr.mxu0 0.0
    %642 = vmatpush1.msra.mxu0 0.0
    %643 = vmatprep.subr.mxu0 0.0
    %644 = vmatpush1.msra.mxu0 0.0
    %645 = vmatprep.subr.mxu0 0.0
    %646 = vmatpush1.msra.mxu0 0.0
    %647 = vmatprep.subr.mxu0 0.0
    %648 = vmatpush1.msra.mxu0 0.0
    %649 = vmatprep.subr.mxu0 0.0
    %650 = vmatpush1.msra.mxu0 0.0
    %651 = vmatprep.subr.mxu0 0.0
    %652 = vmatpush1.msra.mxu0 0.0
    %653 = vmatprep.subr.mxu0 0.0
    %654 = vmatpush1.msra.mxu0 0.0
    %655 = vmatprep.subr.mxu0 0.0
    %656 = vmatpush1.msra.mxu0 0.0
    %657 = vmatprep.subr.mxu0 0.0
    %658 = vmatpush1.msra.mxu0 0.0
    %659 = vmatprep.subr.mxu0 0.0
    %660 = vmatpush1.msra.mxu0 0.0
    %661 = vmatprep.subr.mxu0 0.0
    %662 = vmatpush1.msra.mxu0 0.0
    %663 = vmatprep.subr.mxu0 0.0
    %664 = vmatpush1.msra.mxu0 0.0
    %665 = vmatprep.subr.mxu0 0.0
    %666 = vmatpush1.msra.mxu0 0.0
    %667 = vmatprep.subr.mxu0 0.0
    %668 = vmatpush1.msra.mxu0 0.0
    %669 = vmatprep.subr.mxu0 0.0
    %670 = vmatpush1.msra.mxu0 0.0
    %671 = vmatprep.subr.mxu0 0.0
    %672 = vmatpush1.msra.mxu0 0.0
    %673 = vmatprep.subr.mxu0 0.0
    %674 = vmatpush1.msra.mxu0 0.0
    %675 = vmatprep.subr.mxu0 0.0
    %676 = vmatpush1.msra.mxu0 0.0
    %677 = vmatprep.subr.mxu0 0.0
    %678 = vmatpush1.msra.mxu0 0.0
    %679 = vmatprep.subr.mxu0 0.0
    %680 = vmatpush1.msra.mxu0 0.0
    %681 = vmatprep.subr.mxu0 0.0
    %682 = vmatpush1.msra.mxu0 0.0
    %683 = vmatprep.subr.mxu0 0.0
    %684 = vmatpush1.msra.mxu0 0.0
    %685 = vmatprep.mubr.f32.mxu0 0.0
    %686 = vmatmul.mubr.f32.gmra.mrb[0].mxu0 %v450
    %v687 = vpop.f32.mrb[0].mxu0
    %v688 = vadd.f32 0.0, %v687
    %v689 = vpop.f32.mrb[0].mxu0
    %690 = vdwg.mxu0
    %v691 = vsel %vm522, %v688, -inf
    %v692 = vrot.slane %v691, 4
    %v693 = vmax.f32 %v691, %v692
    %v694 = vrot.slane %v693, 2
    %v695 = vmax.f32 %v693, %v694
    %v696 = vrot.slane %v695, 1
    %v697 = vmax.f32 %v695, %v696
    %v698 = vsub.f32 %v688, %v697
    %v699 = vmul.f32 %v698, 1.442695
    %v700 = vpow.pop %v699
    %v701 = vsel %vm522, %v700, 0.0
    %v702 = vrot.slane %v701, 4
    %v703 = vadd.f32 %v701, %v702
    %v704 = vrot.slane %v703, 2
    %v705 = vadd.f32 %v703, %v704
    %v706 = vrot.slane %v705, 1
    %v707 = vadd.f32 %v705, %v706
    %v708 = vrcp.pop %v707
    %v709 = vmul.f32 %v700, %v708
    %v710 = vadd.f32 %v709, 1e-08
    %v711 = vsel %vm522, %v710, 0.0
    %712 = vadd.xlane.f32.xlu0 %v711
    %v713 = vpop.xlane.xlu0 %712
    %v714 = vrcp.pop %v713
    %v715 = vmul.f32 %v710, %v714
    %v717 = vsel %vm522, %v715, 0
    %719 = vmatprep.subr.mxu0 0.0
    %720 = vmatpush1.msra.mxu0 %v236
    %721 = vmatprep.subr.mxu0 0.0
    %722 = vmatpush1.msra.mxu0 %v241
    %723 = vmatprep.subr.mxu0 0.0
    %724 = vmatpush1.msra.mxu0 0.0
    %725 = vmatprep.subr.mxu0 0.0
    %726 = vmatpush1.msra.mxu0 0.0
    %727 = vmatprep.subr.mxu0 0.0
    %728 = vmatpush1.msra.mxu0 0.0
    %729 = vmatprep.subr.mxu0 0.0
    %730 = vmatpush1.msra.mxu0 0.0
    %731 = vmatprep.subr.mxu0 0.0
    %732 = vmatpush1.msra.mxu0 0.0
    %733 = vmatprep.subr.mxu0 0.0
    %734 = vmatpush1.msra.mxu0 0.0
    %735 = vmatprep.subr.mxu0 0.0
    %736 = vmatpush1.msra.mxu0 0.0
    %737 = vmatprep.subr.mxu0 0.0
    %738 = vmatpush1.msra.mxu0 0.0
    %739 = vmatprep.subr.mxu0 0.0
    %740 = vmatpush1.msra.mxu0 0.0
    %741 = vmatprep.subr.mxu0 0.0
    %742 = vmatpush1.msra.mxu0 0.0
    %743 = vmatprep.subr.mxu0 0.0
    %744 = vmatpush1.msra.mxu0 0.0
    %745 = vmatprep.subr.mxu0 0.0
    %746 = vmatpush1.msra.mxu0 0.0
    %747 = vmatprep.subr.mxu0 0.0
    %748 = vmatpush1.msra.mxu0 0.0
    %749 = vmatprep.subr.mxu0 0.0
    %750 = vmatpush1.msra.mxu0 0.0
    %751 = vmatprep.subr.mxu0 0.0
    %752 = vmatpush1.msra.mxu0 0.0
    %753 = vmatprep.subr.mxu0 0.0
    %754 = vmatpush1.msra.mxu0 0.0
    %755 = vmatprep.subr.mxu0 0.0
    %756 = vmatpush1.msra.mxu0 0.0
    %757 = vmatprep.subr.mxu0 0.0
    %758 = vmatpush1.msra.mxu0 0.0
    %759 = vmatprep.subr.mxu0 0.0
    %760 = vmatpush1.msra.mxu0 0.0
    %761 = vmatprep.subr.mxu0 0.0
    %762 = vmatpush1.msra.mxu0 0.0
    %763 = vmatprep.subr.mxu0 0.0
    %764 = vmatpush1.msra.mxu0 0.0
    %765 = vmatprep.subr.mxu0 0.0
    %766 = vmatpush1.msra.mxu0 0.0
    %767 = vmatprep.subr.mxu0 0.0
    %768 = vmatpush1.msra.mxu0 0.0
    %769 = vmatprep.subr.mxu0 0.0
    %770 = vmatpush1.msra.mxu0 0.0
    %771 = vmatprep.subr.mxu0 0.0
    %772 = vmatpush1.msra.mxu0 0.0
    %773 = vmatprep.subr.mxu0 0.0
    %774 = vmatpush1.msra.mxu0 0.0
    %775 = vmatprep.subr.mxu0 0.0
    %776 = vmatpush1.msra.mxu0 0.0
    %777 = vmatprep.subr.mxu0 0.0
    %778 = vmatpush1.msra.mxu0 0.0
    %779 = vmatprep.subr.mxu0 0.0
    %780 = vmatpush1.msra.mxu0 0.0
    %781 = vmatprep.subr.mxu0 0.0
    %782 = vmatpush1.msra.mxu0 0.0
    %783 = vmatprep.mubr.f32.mxu0 0.0
    %784 = vmatmul.mubr.f32.gmra.mrb[0].mxu0 %v717
    %v785 = vpop.f32.mrb[0].mxu0
    %v786 = vadd.f32 0.0, %v785
    %v787 = vpop.f32.mrb[0].mxu0
    %788 = vdwg.mxu0
    %v789 = vlaneseq
    %v790 = vshrl.u32 %v789, 7
    %v791 = vsub.s32 0, %v790
    %v792 = vrot.slane %v46, %v791
    %v793 = vadd.f32 %v618, %v792
    %v794 = vadd.f32 %v786, %v792
    %v795 = vlaneseq
    %v796 = vshrl.u32 %v795, 7
    %v797 = vsub.s32 0, %v796
    %v798 = vrot.slane %v47, %v797
    %v800 = vsel %vm77, %v48, 0
    %802 = vmatprep.subr.mxu0 0.0
    %803 = vmatpush1.msra.mxu0 %v57
    %804 = vmatprep.subr.mxu0 0.0
    %805 = vmatpush1.msra.mxu0 %v58
    %806 = vmatprep.subr.mxu0 0.0
    %807 = vmatpush1.msra.mxu0 %v59
    %808 = vmatprep.subr.mxu0 0.0
    %809 = vmatpush1.msra.mxu0 %v60
    %810 = vmatprep.subr.mxu0 0.0
    %811 = vmatpush1.msra.mxu0 0.0
    %812 = vmatprep.subr.mxu0 0.0
    %813 = vmatpush1.msra.mxu0 0.0
    %814 = vmatprep.subr.mxu0 0.0
    %815 = vmatpush1.msra.mxu0 0.0
    %816 = vmatprep.subr.mxu0 0.0
    %817 = vmatpush1.msra.mxu0 0.0
    %818 = vmatprep.subr.mxu0 0.0
    %819 = vmatpush1.msra.mxu0 0.0
    %820 = vmatprep.subr.mxu0 0.0
    %821 = vmatpush1.msra.mxu0 0.0
    %822 = vmatprep.subr.mxu0 0.0
    %823 = vmatpush1.msra.mxu0 0.0
    %824 = vmatprep.subr.mxu0 0.0
    %825 = vmatpush1.msra.mxu0 0.0
    %826 = vmatprep.subr.mxu0 0.0
    %827 = vmatpush1.msra.mxu0 0.0
    %828 = vmatprep.subr.mxu0 0.0
    %829 = vmatpush1.msra.mxu0 0.0
    %830 = vmatprep.subr.mxu0 0.0
    %831 = vmatpush1.msra.mxu0 0.0
    %832 = vmatprep.subr.mxu0 0.0
    %833 = vmatpush1.msra.mxu0 0.0
    %834 = vmatprep.subr.mxu0 0.0
    %835 = vmatpush1.msra.mxu0 0.0
    %836 = vmatprep.subr.mxu0 0.0
    %837 = vmatpush1.msra.mxu0 0.0
    %838 = vmatprep.subr.mxu0 0.0
    %839 = vmatpush1.msra.mxu0 0.0
    %840 = vmatprep.subr.mxu0 0.0
    %841 = vmatpush1.msra.mxu0 0.0
    %842 = vmatprep.subr.mxu0 0.0
    %843 = vmatpush1.msra.mxu0 0.0
    %844 = vmatprep.subr.mxu0 0.0
    %845 = vmatpush1.msra.mxu0 0.0
    %846 = vmatprep.subr.mxu0 0.0
    %847 = vmatpush1.msra.mxu0 0.0
    %848 = vmatprep.subr.mxu0 0.0
    %849 = vmatpush1.msra.mxu0 0.0
    %850 = vmatprep.subr.mxu0 0.0
    %851 = vmatpush1.msra.mxu0 0.0
    %852 = vmatprep.subr.mxu0 0.0
    %853 = vmatpush1.msra.mxu0 0.0
    %854 = vmatprep.subr.mxu0 0.0
    %855 = vmatpush1.msra.mxu0 0.0
    %856 = vmatprep.subr.mxu0 0.0
    %857 = vmatpush1.msra.mxu0 0.0
    %858 = vmatprep.subr.mxu0 0.0
    %859 = vmatpush1.msra.mxu0 0.0
    %860 = vmatprep.subr.mxu0 0.0
    %861 = vmatpush1.msra.mxu0 0.0
    %862 = vmatprep.subr.mxu0 0.0
    %863 = vmatpush1.msra.mxu0 0.0
    %864 = vmatprep.subr.mxu0 0.0
    %865 = vmatpush1.msra.mxu0 0.0
    %866 = vmatprep.mubr.f32.mxu0 0.0
    %867 = vmatmul.mubr.f32.gmra.mrb[0].mxu0 %v800
    %v868 = vpop.f32.mrb[0].mxu0
    %v869 = vadd.f32 %v798, %v868
    %v870 = vpop.f32.mrb[0].mxu0
    %871 = vmatprep.mubr.f32.mxu0 0.0
    %872 = vmatmul.mubr.f32.gmra.mrb[0].mxu0 %v800
    %v873 = vpop.f32.mrb[0].mxu0
    %v874 = vadd.f32 %v798, %v873
    %v875 = vpop.f32.mrb[0].mxu0
    %876 = vdwg.mxu0
    %v877 = vadd.f32 %v793, %v869
    %v878 = vadd.f32 %v794, %v874
    %v879 = vxor.u32 %v877, 2147483648
    %v880 = vxor.u32 %v878, 2147483648
    %v881 = vmul.f32 %v879, 1.442695
    %v882 = vpow.pop %v881
    %v883 = vmul.f32 %v880, 1.442695
    %v884 = vpow.pop %v883
    %v885 = vadd.f32 %v882, 1.0
    %v886 = vadd.f32 %v884, 1.0
    %v887 = vrcp.pop %v885
    %v888 = vmul.f32 1.0, %v887
    %v889 = vrcp.pop %v886
    %v890 = vmul.f32 1.0, %v889
    %893 = vrot.lane.b32.xlu0 %v869, 64
    %v894 = vpop.permute.xlu0 %893
    %895 = vrot.lane.b32.xlu0 %v874, 64
    %v896 = vpop.permute.xlu0 %895
    %v899 = vmul.f32 %v888, %v894
    %v900 = vmul.f32 %v890, %v896
    %903 = vrot.lane.b32.xlu0 %v899, 64
    %v904 = vpop.permute.xlu0 %903
    %905 = vrot.lane.b32.xlu0 %v900, 64
    %v906 = vpop.permute.xlu0 %905
    %v909 = vadd.f32 %v793, %v904
    %v910 = vadd.f32 %v794, %v906
    %v911 = vtanh.pop %v909
    %v912 = vtanh.pop %v910
    %v913 = vsub.f32 1.0, %v888
    %v914 = vsub.f32 1.0, %v890
    %917 = vrot.lane.b32.xlu0 %v911, 96
    %v918 = vpop.permute.xlu0 %917
    %919 = vrot.lane.b32.xlu0 %v912, 96
    %v920 = vpop.permute.xlu0 %919
    %v923 = vmul.f32 %v913, %v918
    %v924 = vmul.f32 %v914, %v920
    %925 = vrot.lane.b32.xlu0 %v48, 32
    %v926 = vpop.permute.xlu0 %925
    %v928 = vmul.f32 %v888, %v926
    %v929 = vmul.f32 %v890, %v926
    %v930 = vadd.f32 %v923, %v928
    %v931 = vadd.f32 %v924, %v929
    %v932 = vlaneseq
    %v933 = vshrl.u32 %v932, 7
    %v934 = vsub.s32 0, %v933
    %v935 = vrot.slane %v45, %v934
    %938 = vrot.lane.b32.xlu0 %v930, 96
    %v939 = vpop.permute.xlu0 %938
    %940 = vrot.lane.b32.xlu0 %v931, 96
    %v941 = vpop.permute.xlu0 %940
    %v942 = vsel %vm77, %v939, 0
    %v944 = vsel %vm77, %v941, 0
    %946 = vmatprep.subr.mxu0 0.0
    %947 = vmatpush1.msra.mxu0 %v61
    %948 = vmatprep.subr.mxu0 0.0
    %949 = vmatpush1.msra.mxu0 %v62
    %950 = vmatprep.subr.mxu0 0.0
    %951 = vmatpush1.msra.mxu0 %v63
    %952 = vmatprep.subr.mxu0 0.0
    %953 = vmatpush1.msra.mxu0 %v64
    %954 = vmatprep.subr.mxu0 0.0
    %955 = vmatpush1.msra.mxu0 0.0
    %956 = vmatprep.subr.mxu0 0.0
    %957 = vmatpush1.msra.mxu0 0.0
    %958 = vmatprep.subr.mxu0 0.0
    %959 = vmatpush1.msra.mxu0 0.0
    %960 = vmatprep.subr.mxu0 0.0
    %961 = vmatpush1.msra.mxu0 0.0
    %962 = vmatprep.subr.mxu0 0.0
    %963 = vmatpush1.msra.mxu0 0.0
    %964 = vmatprep.subr.mxu0 0.0
    %965 = vmatpush1.msra.mxu0 0.0
    %966 = vmatprep.subr.mxu0 0.0
    %967 = vmatpush1.msra.mxu0 0.0
    %968 = vmatprep.subr.mxu0 0.0
    %969 = vmatpush1.msra.mxu0 0.0
    %970 = vmatprep.subr.mxu0 0.0
    %971 = vmatpush1.msra.mxu0 0.0
    %972 = vmatprep.subr.mxu0 0.0
    %973 = vmatpush1.msra.mxu0 0.0
    %974 = vmatprep.subr.mxu0 0.0
    %975 = vmatpush1.msra.mxu0 0.0
    %976 = vmatprep.subr.mxu0 0.0
    %977 = vmatpush1.msra.mxu0 0.0
    %978 = vmatprep.subr.mxu0 0.0
    %979 = vmatpush1.msra.mxu0 0.0
    %980 = vmatprep.subr.mxu0 0.0
    %981 = vmatpush1.msra.mxu0 0.0
    %982 = vmatprep.subr.mxu0 0.0
    %983 = vmatpush1.msra.mxu0 0.0
    %984 = vmatprep.subr.mxu0 0.0
    %985 = vmatpush1.msra.mxu0 0.0
    %986 = vmatprep.subr.mxu0 0.0
    %987 = vmatpush1.msra.mxu0 0.0
    %988 = vmatprep.subr.mxu0 0.0
    %989 = vmatpush1.msra.mxu0 0.0
    %990 = vmatprep.subr.mxu0 0.0
    %991 = vmatpush1.msra.mxu0 0.0
    %992 = vmatprep.subr.mxu0 0.0
    %993 = vmatpush1.msra.mxu0 0.0
    %994 = vmatprep.subr.mxu0 0.0
    %995 = vmatpush1.msra.mxu0 0.0
    %996 = vmatprep.subr.mxu0 0.0
    %997 = vmatpush1.msra.mxu0 0.0
    %998 = vmatprep.subr.mxu0 0.0
    %999 = vmatpush1.msra.mxu0 0.0
    %1000 = vmatprep.subr.mxu0 0.0
    %1001 = vmatpush1.msra.mxu0 0.0
    %1002 = vmatprep.subr.mxu0 0.0
    %1003 = vmatpush1.msra.mxu0 0.0
    %1004 = vmatprep.subr.mxu0 0.0
    %1005 = vmatpush1.msra.mxu0 0.0
    %1006 = vmatprep.subr.mxu0 0.0
    %1007 = vmatpush1.msra.mxu0 0.0
    %1008 = vmatprep.subr.mxu0 0.0
    %1009 = vmatpush1.msra.mxu0 0.0
    %1010 = vmatprep.mubr.f32.mxu0 0.0
    %1011 = vmatmul.mubr.f32.gmra.mrb[0].mxu0 %v942
    %v1012 = vpop.f32.mrb[0].mxu0
    %v1013 = vadd.f32 %v935, %v1012
    %v1014 = vpop.f32.mrb[0].mxu0
    %1015 = vmatprep.mubr.f32.mxu0 0.0
    %1016 = vmatmul.mubr.f32.gmra.mrb[0].mxu0 %v944
    %v1017 = vpop.f32.mrb[0].mxu0
    %v1018 = vadd.f32 %v935, %v1017
    %v1019 = vpop.f32.mrb[0].mxu0
    %1020 = vdwg.mxu0
    %v1021 = vmax.f32 %v1013, 0.0
    %v1022 = vmax.f32 %v1018, 0.0
    %vm1023 = vcmask 523264
    %v1025 = vsel %vm1023, %v1021, 0
    %v1028 = vsel %vm1023, %v1022, 0
    %1030 = vmatprep.subr.mxu0 0.0
    %1031 = vmatpush1.msra.mxu0 %v65
    %1032 = vmatprep.subr.mxu0 0.0
    %1033 = vmatpush1.msra.mxu0 %v66
    %1034 = vmatprep.subr.mxu0 0.0
    %1035 = vmatpush1.msra.mxu0 %v67
    %1036 = vmatprep.subr.mxu0 0.0
    %1037 = vmatpush1.msra.mxu0 %v68
    %1038 = vmatprep.subr.mxu0 0.0
    %1039 = vmatpush1.msra.mxu0 %v69
    %1040 = vmatprep.subr.mxu0 0.0
    %1041 = vmatpush1.msra.mxu0 %v70
    %1042 = vmatprep.subr.mxu0 0.0
    %1043 = vmatpush1.msra.mxu0 %v71
    %1044 = vmatprep.subr.mxu0 0.0
    %1045 = vmatpush1.msra.mxu0 %v72
    %1046 = vmatprep.subr.mxu0 0.0
    %1047 = vmatpush1.msra.mxu0 0.0
    %1048 = vmatprep.subr.mxu0 0.0
    %1049 = vmatpush1.msra.mxu0 0.0
    %1050 = vmatprep.subr.mxu0 0.0
    %1051 = vmatpush1.msra.mxu0 0.0
    %1052 = vmatprep.subr.mxu0 0.0
    %1053 = vmatpush1.msra.mxu0 0.0
    %1054 = vmatprep.subr.mxu0 0.0
    %1055 = vmatpush1.msra.mxu0 0.0
    %1056 = vmatprep.subr.mxu0 0.0
    %1057 = vmatpush1.msra.mxu0 0.0
    %1058 = vmatprep.subr.mxu0 0.0
    %1059 = vmatpush1.msra.mxu0 0.0
    %1060 = vmatprep.subr.mxu0 0.0
    %1061 = vmatpush1.msra.mxu0 0.0
    %1062 = vmatprep.subr.mxu0 0.0
    %1063 = vmatpush1.msra.mxu0 0.0
    %1064 = vmatprep.subr.mxu0 0.0
    %1065 = vmatpush1.msra.mxu0 0.0
    %1066 = vmatprep.subr.mxu0 0.0
    %1067 = vmatpush1.msra.mxu0 0.0
    %1068 = vmatprep.subr.mxu0 0.0
    %1069 = vmatpush1.msra.mxu0 0.0
    %1070 = vmatprep.subr.mxu0 0.0
    %1071 = vmatpush1.msra.mxu0 0.0
    %1072 = vmatprep.subr.mxu0 0.0
    %1073 = vmatpush1.msra.mxu0 0.0
    %1074 = vmatprep.subr.mxu0 0.0
    %1075 = vmatpush1.msra.mxu0 0.0
    %1076 = vmatprep.subr.mxu0 0.0
    %1077 = vmatpush1.msra.mxu0 0.0
    %1078 = vmatprep.subr.mxu0 0.0
    %1079 = vmatpush1.msra.mxu0 0.0
    %1080 = vmatprep.subr.mxu0 0.0
    %1081 = vmatpush1.msra.mxu0 0.0
    %1082 = vmatprep.subr.mxu0 0.0
    %1083 = vmatpush1.msra.mxu0 0.0
    %1084 = vmatprep.subr.mxu0 0.0
    %1085 = vmatpush1.msra.mxu0 0.0
    %1086 = vmatprep.subr.mxu0 0.0
    %1087 = vmatpush1.msra.mxu0 0.0
    %1088 = vmatprep.subr.mxu0 0.0
    %1089 = vmatpush1.msra.mxu0 0.0
    %1090 = vmatprep.subr.mxu0 0.0
    %1091 = vmatpush1.msra.mxu0 0.0
    %1092 = vmatprep.subr.mxu0 0.0
    %1093 = vmatpush1.msra.mxu0 0.0
    %1094 = vmatprep.mubr.f32.mxu0 0.0
    %1095 = vmatmul.mubr.f32.gmra.mrb[0].mxu0 %v1025
    %v1096 = vpop.f32.mrb[0].mxu0
    %v1097 = vadd.f32 0.0, %v1096
    %v1098 = vpop.f32.mrb[0].mxu0
    %1099 = vmatprep.mubr.f32.mxu0 0.0
    %1100 = vmatmul.mubr.f32.gmra.mrb[0].mxu0 %v1028
    %v1101 = vpop.f32.mrb[0].mxu0
    %v1102 = vadd.f32 0.0, %v1101
    %v1103 = vpop.f32.mrb[0].mxu0
    %1104 = vdwg.mxu0
    %1107 = vrot.lane.b32.xlu0 %v1097, 32
    %v1108 = vpop.permute.xlu0 %1107
    %1109 = vrot.lane.b32.xlu0 %v1102, 32
    %v1110 = vpop.permute.xlu0 %1109
    %v1113 = vadd.f32 %v930, %v1108
    %v1114 = vadd.f32 %v931, %v1110
    %v1115 = vlaneseq
    %v1116 = vshrl.u32 %v1115, 7
    %v1117 = vsub.s32 0, %v1116
    %v1118 = vrot.slane %v44, %v1117
    %1120 = vrot.lane.b32.xlu0 %v1118, 32
    %v1121 = vpop.permute.xlu0 %1120
    %v1123 = vadd.f32 %v1113, %v1121
    %v1124 = vadd.f32 %v1114, %v1121
    %1127 = vrot.lane.b32.xlu0 %v1123, 96
    %v1128 = vpop.permute.xlu0 %1127
    %1129 = vrot.lane.b32.xlu0 %v1124, 96
    %v1130 = vpop.permute.xlu0 %1129
    %v1133 = vsel %vm77, %v1128, 0.0
    %1134 = vadd.xlane.f32.xlu0 %v1133
    %v1135 = vpop.xlane.xlu0 %1134
    %v1136 = vsel %vm77, %v1130, 0.0
    %1137 = vadd.xlane.f32.xlu0 %v1136
    %v1138 = vpop.xlane.xlu0 %1137
    %v1139 = vmul.f32 %v1135, %v90
    %v1140 = vmul.f32 %v1138, %v90
    %v1141 = vsub.f32 %v1123, %v1139
    %v1142 = vsub.f32 %v1124, %v1140
    %v1143 = vmul.f32 %v1141, %v1141
    %v1144 = vmul.f32 %v1142, %v1142
    %1147 = vrot.lane.b32.xlu0 %v1143, 96
    %v1148 = vpop.permute.xlu0 %1147
    %1149 = vrot.lane.b32.xlu0 %v1144, 96
    %v1150 = vpop.permute.xlu0 %1149
    %v1153 = vsel %vm77, %v1148, 0.0
    %1154 = vadd.xlane.f32.xlu0 %v1153
    %v1155 = vpop.xlane.xlu0 %1154
    %v1156 = vsel %vm77, %v1150, 0.0
    %1157 = vadd.xlane.f32.xlu0 %v1156
    %v1158 = vpop.xlane.xlu0 %1157
    %v1159 = vmul.f32 %v1155, %v90
    %v1160 = vmul.f32 %v1158, %v90
    %v1161 = vadd.f32 %v1159, 1e-05
    %v1162 = vadd.f32 %v1160, 1e-05
    %v1163 = vrsqrt.pop %v1161
    %v1164 = vrsqrt.pop %v1162
    %v1165 = vmul.f32 %v1141, %v1163
    %v1166 = vmul.f32 %v1142, %v1164
    %1168 = vrot.lane.b32.xlu0 %v442, 32
    %v1169 = vpop.permute.xlu0 %1168
    %v1171 = vmul.f32 %v1165, %v1169
    %v1172 = vmul.f32 %v1166, %v1169
    %1174 = vrot.lane.b32.xlu0 %v447, 32
    %v1175 = vpop.permute.xlu0 %1174
    %v1177 = vadd.f32 %v1171, %v1175
    %v1178 = vadd.f32 %v1172, %v1175
    %1180 = vrot.lane.b32.xlu0 %v1177, 96
    %v1181 = vpop.permute.xlu0 %1180
    %v1182 = vsel %vm77, %v1181, 0
    %1184 = vmatprep.subr.mxu0 0.0
    %1185 = vmatpush1.msra.mxu0 %v323
    %1186 = vmatprep.subr.mxu0 0.0
    %1187 = vmatpush1.msra.mxu0 %v328
    %1188 = vmatprep.subr.mxu0 0.0
    %1189 = vmatpush1.msra.mxu0 %v333
    %1190 = vmatprep.subr.mxu0 0.0
    %1191 = vmatpush1.msra.mxu0 %v338
    %1192 = vmatprep.subr.mxu0 0.0
    %1193 = vmatpush1.msra.mxu0 0.0
    %1194 = vmatprep.subr.mxu0 0.0
    %1195 = vmatpush1.msra.mxu0 0.0
    %1196 = vmatprep.subr.mxu0 0.0
    %1197 = vmatpush1.msra.mxu0 0.0
    %1198 = vmatprep.subr.mxu0 0.0
    %1199 = vmatpush1.msra.mxu0 0.0
    %1200 = vmatprep.subr.mxu0 0.0
    %1201 = vmatpush1.msra.mxu0 0.0
    %1202 = vmatprep.subr.mxu0 0.0
    %1203 = vmatpush1.msra.mxu0 0.0
    %1204 = vmatprep.subr.mxu0 0.0
    %1205 = vmatpush1.msra.mxu0 0.0
    %1206 = vmatprep.subr.mxu0 0.0
    %1207 = vmatpush1.msra.mxu0 0.0
    %1208 = vmatprep.subr.mxu0 0.0
    %1209 = vmatpush1.msra.mxu0 0.0
    %1210 = vmatprep.subr.mxu0 0.0
    %1211 = vmatpush1.msra.mxu0 0.0
    %1212 = vmatprep.subr.mxu0 0.0
    %1213 = vmatpush1.msra.mxu0 0.0
    %1214 = vmatprep.subr.mxu0 0.0
    %1215 = vmatpush1.msra.mxu0 0.0
    %1216 = vmatprep.subr.mxu0 0.0
    %1217 = vmatpush1.msra.mxu0 0.0
    %1218 = vmatprep.subr.mxu0 0.0
    %1219 = vmatpush1.msra.mxu0 0.0
    %1220 = vmatprep.subr.mxu0 0.0
    %1221 = vmatpush1.msra.mxu0 0.0
    %1222 = vmatprep.subr.mxu0 0.0
    %1223 = vmatpush1.msra.mxu0 0.0
    %1224 = vmatprep.subr.mxu0 0.0
    %1225 = vmatpush1.msra.mxu0 0.0
    %1226 = vmatprep.subr.mxu0 0.0
    %1227 = vmatpush1.msra.mxu0 0.0
    %1228 = vmatprep.subr.mxu0 0.0
    %1229 = vmatpush1.msra.mxu0 0.0
    %1230 = vmatprep.subr.mxu0 0.0
    %1231 = vmatpush1.msra.mxu0 0.0
    %1232 = vmatprep.subr.mxu0 0.0
    %1233 = vmatpush1.msra.mxu0 0.0
    %1234 = vmatprep.subr.mxu0 0.0
    %1235 = vmatpush1.msra.mxu0 0.0
    %1236 = vmatprep.subr.mxu0 0.0
    %1237 = vmatpush1.msra.mxu0 0.0
    %1238 = vmatprep.subr.mxu0 0.0
    %1239 = vmatpush1.msra.mxu0 0.0
    %1240 = vmatprep.subr.mxu0 0.0
    %1241 = vmatpush1.msra.mxu0 0.0
    %1242 = vmatprep.subr.mxu0 0.0
    %1243 = vmatpush1.msra.mxu0 0.0
    %1244 = vmatprep.subr.mxu0 0.0
    %1245 = vmatpush1.msra.mxu0 0.0
    %1246 = vmatprep.subr.mxu0 0.0
    %1247 = vmatpush1.msra.mxu0 0.0
    %1248 = vmatprep.mubr.f32.mxu0 0.0
    %1249 = vmatmul.mubr.f32.gmra.mrb[0].mxu0 %v1182
    %v1250 = vpop.f32.mrb[0].mxu0
    %v1251 = vadd.f32 0.0, %v1250
    %v1252 = vpop.f32.mrb[0].mxu0
    %1253 = vdwg.mxu0
    %v1254 = vsel %vm522, %v1251, -inf
    %v1255 = vrot.slane %v1254, 4
    %v1256 = vmax.f32 %v1254, %v1255
    %v1257 = vrot.slane %v1256, 2
    %v1258 = vmax.f32 %v1256, %v1257
    %v1259 = vrot.slane %v1258, 1
    %v1260 = vmax.f32 %v1258, %v1259
    %v1261 = vsub.f32 %v1251, %v1260
    %v1262 = vmul.f32 %v1261, 1.442695
    %v1263 = vpow.pop %v1262
    %v1264 = vsel %vm522, %v1263, 0.0
    %v1265 = vrot.slane %v1264, 4
    %v1266 = vadd.f32 %v1264, %v1265
    %v1267 = vrot.slane %v1266, 2
    %v1268 = vadd.f32 %v1266, %v1267
    %v1269 = vrot.slane %v1268, 1
    %v1270 = vadd.f32 %v1268, %v1269
    %v1271 = vrcp.pop %v1270
    %v1272 = vmul.f32 %v1263, %v1271
    %v1273 = vadd.f32 %v1272, 1e-08
    %v1274 = vsel %vm522, %v1273, 0.0
    %1275 = vadd.xlane.f32.xlu0 %v1274
    %v1276 = vpop.xlane.xlu0 %1275
    %v1277 = vrcp.pop %v1276
    %v1278 = vmul.f32 %v1273, %v1277
    %v1280 = vsel %vm522, %v1278, 0
    %1282 = vmatprep.subr.mxu0 0.0
    %1283 = vmatpush1.msra.mxu0 %v226
    %1284 = vmatprep.subr.mxu0 0.0
    %1285 = vmatpush1.msra.mxu0 %v231
    %1286 = vmatprep.subr.mxu0 0.0
    %1287 = vmatpush1.msra.mxu0 0.0
    %1288 = vmatprep.subr.mxu0 0.0
    %1289 = vmatpush1.msra.mxu0 0.0
    %1290 = vmatprep.subr.mxu0 0.0
    %1291 = vmatpush1.msra.mxu0 0.0
    %1292 = vmatprep.subr.mxu0 0.0
    %1293 = vmatpush1.msra.mxu0 0.0
    %1294 = vmatprep.subr.mxu0 0.0
    %1295 = vmatpush1.msra.mxu0 0.0
    %1296 = vmatprep.subr.mxu0 0.0
    %1297 = vmatpush1.msra.mxu0 0.0
    %1298 = vmatprep.subr.mxu0 0.0
    %1299 = vmatpush1.msra.mxu0 0.0
    %1300 = vmatprep.subr.mxu0 0.0
    %1301 = vmatpush1.msra.mxu0 0.0
    %1302 = vmatprep.subr.mxu0 0.0
    %1303 = vmatpush1.msra.mxu0 0.0
    %1304 = vmatprep.subr.mxu0 0.0
    %1305 = vmatpush1.msra.mxu0 0.0
    %1306 = vmatprep.subr.mxu0 0.0
    %1307 = vmatpush1.msra.mxu0 0.0
    %1308 = vmatprep.subr.mxu0 0.0
    %1309 = vmatpush1.msra.mxu0 0.0
    %1310 = vmatprep.subr.mxu0 0.0
    %1311 = vmatpush1.msra.mxu0 0.0
    %1312 = vmatprep.subr.mxu0 0.0
    %1313 = vmatpush1.msra.mxu0 0.0
    %1314 = vmatprep.subr.mxu0 0.0
    %1315 = vmatpush1.msra.mxu0 0.0
    %1316 = vmatprep.subr.mxu0 0.0
    %1317 = vmatpush1.msra.mxu0 0.0
    %1318 = vmatprep.subr.mxu0 0.0
    %1319 = vmatpush1.msra.mxu0 0.0
    %1320 = vmatprep.subr.mxu0 0.0
    %1321 = vmatpush1.msra.mxu0 0.0
    %1322 = vmatprep.subr.mxu0 0.0
    %1323 = vmatpush1.msra.mxu0 0.0
    %1324 = vmatprep.subr.mxu0 0.0
    %1325 = vmatpush1.msra.mxu0 0.0
    %1326 = vmatprep.subr.mxu0 0.0
    %1327 = vmatpush1.msra.mxu0 0.0
    %1328 = vmatprep.subr.mxu0 0.0
    %1329 = vmatpush1.msra.mxu0 0.0
    %1330 = vmatprep.subr.mxu0 0.0
    %1331 = vmatpush1.msra.mxu0 0.0
    %1332 = vmatprep.subr.mxu0 0.0
    %1333 = vmatpush1.msra.mxu0 0.0
    %1334 = vmatprep.subr.mxu0 0.0
    %1335 = vmatpush1.msra.mxu0 0.0
    %1336 = vmatprep.subr.mxu0 0.0
    %1337 = vmatpush1.msra.mxu0 0.0
    %1338 = vmatprep.subr.mxu0 0.0
    %1339 = vmatpush1.msra.mxu0 0.0
    %1340 = vmatprep.subr.mxu0 0.0
    %1341 = vmatpush1.msra.mxu0 0.0
    %1342 = vmatprep.subr.mxu0 0.0
    %1343 = vmatpush1.msra.mxu0 0.0
    %1344 = vmatprep.subr.mxu0 0.0
    %1345 = vmatpush1.msra.mxu0 0.0
    %1346 = vmatprep.mubr.f32.mxu0 0.0
    %1347 = vmatmul.mubr.f32.gmra.mrb[0].mxu0 %v1280
    %v1348 = vpop.f32.mrb[0].mxu0
    %v1349 = vadd.f32 0.0, %v1348
    %v1350 = vpop.f32.mrb[0].mxu0
    %1351 = vdwg.mxu0
    %1353 = vrot.lane.b32.xlu0 %v1178, 96
    %v1354 = vpop.permute.xlu0 %1353
    %v1355 = vsel %vm77, %v1354, 0
    %1357 = vmatprep.subr.mxu0 0.0
    %1358 = vmatpush1.msra.mxu0 %v408
    %1359 = vmatprep.subr.mxu0 0.0
    %1360 = vmatpush1.msra.mxu0 %v413
    %1361 = vmatprep.subr.mxu0 0.0
    %1362 = vmatpush1.msra.mxu0 %v418
    %1363 = vmatprep.subr.mxu0 0.0
    %1364 = vmatpush1.msra.mxu0 %v423
    %1365 = vmatprep.subr.mxu0 0.0
    %1366 = vmatpush1.msra.mxu0 0.0
    %1367 = vmatprep.subr.mxu0 0.0
    %1368 = vmatpush1.msra.mxu0 0.0
    %1369 = vmatprep.subr.mxu0 0.0
    %1370 = vmatpush1.msra.mxu0 0.0
    %1371 = vmatprep.subr.mxu0 0.0
    %1372 = vmatpush1.msra.mxu0 0.0
    %1373 = vmatprep.subr.mxu0 0.0
    %1374 = vmatpush1.msra.mxu0 0.0
    %1375 = vmatprep.subr.mxu0 0.0
    %1376 = vmatpush1.msra.mxu0 0.0
    %1377 = vmatprep.subr.mxu0 0.0
    %1378 = vmatpush1.msra.mxu0 0.0
    %1379 = vmatprep.subr.mxu0 0.0
    %1380 = vmatpush1.msra.mxu0 0.0
    %1381 = vmatprep.subr.mxu0 0.0
    %1382 = vmatpush1.msra.mxu0 0.0
    %1383 = vmatprep.subr.mxu0 0.0
    %1384 = vmatpush1.msra.mxu0 0.0
    %1385 = vmatprep.subr.mxu0 0.0
    %1386 = vmatpush1.msra.mxu0 0.0
    %1387 = vmatprep.subr.mxu0 0.0
    %1388 = vmatpush1.msra.mxu0 0.0
    %1389 = vmatprep.subr.mxu0 0.0
    %1390 = vmatpush1.msra.mxu0 0.0
    %1391 = vmatprep.subr.mxu0 0.0
    %1392 = vmatpush1.msra.mxu0 0.0
    %1393 = vmatprep.subr.mxu0 0.0
    %1394 = vmatpush1.msra.mxu0 0.0
    %1395 = vmatprep.subr.mxu0 0.0
    %1396 = vmatpush1.msra.mxu0 0.0
    %1397 = vmatprep.subr.mxu0 0.0
    %1398 = vmatpush1.msra.mxu0 0.0
    %1399 = vmatprep.subr.mxu0 0.0
    %1400 = vmatpush1.msra.mxu0 0.0
    %1401 = vmatprep.subr.mxu0 0.0
    %1402 = vmatpush1.msra.mxu0 0.0
    %1403 = vmatprep.subr.mxu0 0.0
    %1404 = vmatpush1.msra.mxu0 0.0
    %1405 = vmatprep.subr.mxu0 0.0
    %1406 = vmatpush1.msra.mxu0 0.0
    %1407 = vmatprep.subr.mxu0 0.0
    %1408 = vmatpush1.msra.mxu0 0.0
    %1409 = vmatprep.subr.mxu0 0.0
    %1410 = vmatpush1.msra.mxu0 0.0
    %1411 = vmatprep.subr.mxu0 0.0
    %1412 = vmatpush1.msra.mxu0 0.0
    %1413 = vmatprep.subr.mxu0 0.0
    %1414 = vmatpush1.msra.mxu0 0.0
    %1415 = vmatprep.subr.mxu0 0.0
    %1416 = vmatpush1.msra.mxu0 0.0
    %1417 = vmatprep.subr.mxu0 0.0
    %1418 = vmatpush1.msra.mxu0 0.0
    %1419 = vmatprep.subr.mxu0 0.0
    %1420 = vmatpush1.msra.mxu0 0.0
    %1421 = vmatprep.mubr.f32.mxu0 0.0
    %1422 = vmatmul.mubr.f32.gmra.mrb[0].mxu0 %v1355
    %v1423 = vpop.f32.mrb[0].mxu0
    %v1424 = vadd.f32 0.0, %v1423
    %v1425 = vpop.f32.mrb[0].mxu0
    %1426 = vdwg.mxu0
    %v1427 = vsel %vm522, %v1424, -inf
    %v1428 = vrot.slane %v1427, 4
    %v1429 = vmax.f32 %v1427, %v1428
    %v1430 = vrot.slane %v1429, 2
    %v1431 = vmax.f32 %v1429, %v1430
    %v1432 = vrot.slane %v1431, 1
    %v1433 = vmax.f32 %v1431, %v1432
    %v1434 = vsub.f32 %v1424, %v1433
    %v1435 = vmul.f32 %v1434, 1.442695
    %v1436 = vpow.pop %v1435
    %v1437 = vsel %vm522, %v1436, 0.0
    %v1438 = vrot.slane %v1437, 4
    %v1439 = vadd.f32 %v1437, %v1438
    %v1440 = vrot.slane %v1439, 2
    %v1441 = vadd.f32 %v1439, %v1440
    %v1442 = vrot.slane %v1441, 1
    %v1443 = vadd.f32 %v1441, %v1442
    %v1444 = vrcp.pop %v1443
    %v1445 = vmul.f32 %v1436, %v1444
    %v1446 = vadd.f32 %v1445, 1e-08
    %v1447 = vsel %vm522, %v1446, 0.0
    %1448 = vadd.xlane.f32.xlu0 %v1447
    %v1449 = vpop.xlane.xlu0 %1448
    %v1450 = vrcp.pop %v1449
    %v1451 = vmul.f32 %v1446, %v1450
    %v1453 = vsel %vm522, %v1451, 0
    %1455 = vmatprep.subr.mxu0 0.0
    %1456 = vmatpush1.msra.mxu0 %v236
    %1457 = vmatprep.subr.mxu0 0.0
    %1458 = vmatpush1.msra.mxu0 %v241
    %1459 = vmatprep.subr.mxu0 0.0
    %1460 = vmatpush1.msra.mxu0 0.0
    %1461 = vmatprep.subr.mxu0 0.0
    %1462 = vmatpush1.msra.mxu0 0.0
    %1463 = vmatprep.subr.mxu0 0.0
    %1464 = vmatpush1.msra.mxu0 0.0
    %1465 = vmatprep.subr.mxu0 0.0
    %1466 = vmatpush1.msra.mxu0 0.0
    %1467 = vmatprep.subr.mxu0 0.0
    %1468 = vmatpush1.msra.mxu0 0.0
    %1469 = vmatprep.subr.mxu0 0.0
    %1470 = vmatpush1.msra.mxu0 0.0
    %1471 = vmatprep.subr.mxu0 0.0
    %1472 = vmatpush1.msra.mxu0 0.0
    %1473 = vmatprep.subr.mxu0 0.0
    %1474 = vmatpush1.msra.mxu0 0.0
    %1475 = vmatprep.subr.mxu0 0.0
    %1476 = vmatpush1.msra.mxu0 0.0
    %1477 = vmatprep.subr.mxu0 0.0
    %1478 = vmatpush1.msra.mxu0 0.0
    %1479 = vmatprep.subr.mxu0 0.0
    %1480 = vmatpush1.msra.mxu0 0.0
    %1481 = vmatprep.subr.mxu0 0.0
    %1482 = vmatpush1.msra.mxu0 0.0
    %1483 = vmatprep.subr.mxu0 0.0
    %1484 = vmatpush1.msra.mxu0 0.0
    %1485 = vmatprep.subr.mxu0 0.0
    %1486 = vmatpush1.msra.mxu0 0.0
    %1487 = vmatprep.subr.mxu0 0.0
    %1488 = vmatpush1.msra.mxu0 0.0
    %1489 = vmatprep.subr.mxu0 0.0
    %1490 = vmatpush1.msra.mxu0 0.0
    %1491 = vmatprep.subr.mxu0 0.0
    %1492 = vmatpush1.msra.mxu0 0.0
    %1493 = vmatprep.subr.mxu0 0.0
    %1494 = vmatpush1.msra.mxu0 0.0
    %1495 = vmatprep.subr.mxu0 0.0
    %1496 = vmatpush1.msra.mxu0 0.0
    %1497 = vmatprep.subr.mxu0 0.0
    %1498 = vmatpush1.msra.mxu0 0.0
    %1499 = vmatprep.subr.mxu0 0.0
    %1500 = vmatpush1.msra.mxu0 0.0
    %1501 = vmatprep.subr.mxu0 0.0
    %1502 = vmatpush1.msra.mxu0 0.0
    %1503 = vmatprep.subr.mxu0 0.0
    %1504 = vmatpush1.msra.mxu0 0.0
    %1505 = vmatprep.subr.mxu0 0.0
    %1506 = vmatpush1.msra.mxu0 0.0
    %1507 = vmatprep.subr.mxu0 0.0
    %1508 = vmatpush1.msra.mxu0 0.0
    %1509 = vmatprep.subr.mxu0 0.0
    %1510 = vmatpush1.msra.mxu0 0.0
    %1511 = vmatprep.subr.mxu0 0.0
    %1512 = vmatpush1.msra.mxu0 0.0
    %1513 = vmatprep.subr.mxu0 0.0
    %1514 = vmatpush1.msra.mxu0 0.0
    %1515 = vmatprep.subr.mxu0 0.0
    %1516 = vmatpush1.msra.mxu0 0.0
    %1517 = vmatprep.subr.mxu0 0.0
    %1518 = vmatpush1.msra.mxu0 0.0
    %1519 = vmatprep.mubr.f32.mxu0 0.0
    %1520 = vmatmul.mubr.f32.gmra.mrb[0].mxu0 %v1453
    %v1521 = vpop.f32.mrb[0].mxu0
    %v1522 = vadd.f32 0.0, %v1521
    %v1523 = vpop.f32.mrb[0].mxu0
    %1524 = vdwg.mxu0
    %v1525 = vadd.f32 %v1349, %v792
    %v1526 = vadd.f32 %v1522, %v792
    %v1527 = vsel %vm77, %v1128, 0
    %v1529 = vsel %vm77, %v1130, 0
    %1531 = vmatprep.subr.mxu0 0.0
    %1532 = vmatpush1.msra.mxu0 %v57
    %1533 = vmatprep.subr.mxu0 0.0
    %1534 = vmatpush1.msra.mxu0 %v58
    %1535 = vmatprep.subr.mxu0 0.0
    %1536 = vmatpush1.msra.mxu0 %v59
    %1537 = vmatprep.subr.mxu0 0.0
    %1538 = vmatpush1.msra.mxu0 %v60
    %1539 = vmatprep.subr.mxu0 0.0
    %1540 = vmatpush1.msra.mxu0 0.0
    %1541 = vmatprep.subr.mxu0 0.0
    %1542 = vmatpush1.msra.mxu0 0.0
    %1543 = vmatprep.subr.mxu0 0.0
    %1544 = vmatpush1.msra.mxu0 0.0
    %1545 = vmatprep.subr.mxu0 0.0
    %1546 = vmatpush1.msra.mxu0 0.0
    %1547 = vmatprep.subr.mxu0 0.0
    %1548 = vmatpush1.msra.mxu0 0.0
    %1549 = vmatprep.subr.mxu0 0.0
    %1550 = vmatpush1.msra.mxu0 0.0
    %1551 = vmatprep.subr.mxu0 0.0
    %1552 = vmatpush1.msra.mxu0 0.0
    %1553 = vmatprep.subr.mxu0 0.0
    %1554 = vmatpush1.msra.mxu0 0.0
    %1555 = vmatprep.subr.mxu0 0.0
    %1556 = vmatpush1.msra.mxu0 0.0
    %1557 = vmatprep.subr.mxu0 0.0
    %1558 = vmatpush1.msra.mxu0 0.0
    %1559 = vmatprep.subr.mxu0 0.0
    %1560 = vmatpush1.msra.mxu0 0.0
    %1561 = vmatprep.subr.mxu0 0.0
    %1562 = vmatpush1.msra.mxu0 0.0
    %1563 = vmatprep.subr.mxu0 0.0
    %1564 = vmatpush1.msra.mxu0 0.0
    %1565 = vmatprep.subr.mxu0 0.0
    %1566 = vmatpush1.msra.mxu0 0.0
    %1567 = vmatprep.subr.mxu0 0.0
    %1568 = vmatpush1.msra.mxu0 0.0
    %1569 = vmatprep.subr.mxu0 0.0
    %1570 = vmatpush1.msra.mxu0 0.0
    %1571 = vmatprep.subr.mxu0 0.0
    %1572 = vmatpush1.msra.mxu0 0.0
    %1573 = vmatprep.subr.mxu0 0.0
    %1574 = vmatpush1.msra.mxu0 0.0
    %1575 = vmatprep.subr.mxu0 0.0
    %1576 = vmatpush1.msra.mxu0 0.0
    %1577 = vmatprep.subr.mxu0 0.0
    %1578 = vmatpush1.msra.mxu0 0.0
    %1579 = vmatprep.subr.mxu0 0.0
    %1580 = vmatpush1.msra.mxu0 0.0
    %1581 = vmatprep.subr.mxu0 0.0
    %1582 = vmatpush1.msra.mxu0 0.0
    %1583 = vmatprep.subr.mxu0 0.0
    %1584 = vmatpush1.msra.mxu0 0.0
    %1585 = vmatprep.subr.mxu0 0.0
    %1586 = vmatpush1.msra.mxu0 0.0
    %1587 = vmatprep.subr.mxu0 0.0
    %1588 = vmatpush1.msra.mxu0 0.0
    %1589 = vmatprep.subr.mxu0 0.0
    %1590 = vmatpush1.msra.mxu0 0.0
    %1591 = vmatprep.subr.mxu0 0.0
    %1592 = vmatpush1.msra.mxu0 0.0
    %1593 = vmatprep.subr.mxu0 0.0
    %1594 = vmatpush1.msra.mxu0 0.0
    %1595 = vmatprep.mubr.f32.mxu0 0.0
    %1596 = vmatmul.mubr.f32.gmra.mrb[0].mxu0 %v1527
    %v1597 = vpop.f32.mrb[0].mxu0
    %v1598 = vadd.f32 %v798, %v1597
    %v1599 = vpop.f32.mrb[0].mxu0
    %1600 = vmatprep.mubr.f32.mxu0 0.0
    %1601 = vmatmul.mubr.f32.gmra.mrb[0].mxu0 %v1529
    %v1602 = vpop.f32.mrb[0].mxu0
    %v1603 = vadd.f32 %v798, %v1602
    %v1604 = vpop.f32.mrb[0].mxu0
    %1605 = vdwg.mxu0
    %v1606 = vadd.f32 %v1525, %v1598
    %v1607 = vadd.f32 %v1526, %v1603
    %v1608 = vxor.u32 %v1606, 2147483648
    %v1609 = vxor.u32 %v1607, 2147483648
    %v1610 = vmul.f32 %v1608, 1.442695
    %v1611 = vpow.pop %v1610
    %v1612 = vmul.f32 %v1609, 1.442695
    %v1613 = vpow.pop %v1612
    %v1614 = vadd.f32 %v1611, 1.0
    %v1615 = vadd.f32 %v1613, 1.0
    %v1616 = vrcp.pop %v1614
    %v1617 = vmul.f32 1.0, %v1616
    %v1618 = vrcp.pop %v1615
    %v1619 = vmul.f32 1.0, %v1618
    %1622 = vrot.lane.b32.xlu0 %v1598, 64
    %v1623 = vpop.permute.xlu0 %1622
    %1624 = vrot.lane.b32.xlu0 %v1603, 64
    %v1625 = vpop.permute.xlu0 %1624
    %v1628 = vmul.f32 %v1617, %v1623
    %v1629 = vmul.f32 %v1619, %v1625
    %1632 = vrot.lane.b32.xlu0 %v1628, 64
    %v1633 = vpop.permute.xlu0 %1632
    %1634 = vrot.lane.b32.xlu0 %v1629, 64
    %v1635 = vpop.permute.xlu0 %1634
    %v1638 = vadd.f32 %v1525, %v1633
    %v1639 = vadd.f32 %v1526, %v1635
    %v1640 = vtanh.pop %v1638
    %v1641 = vtanh.pop %v1639
    %v1642 = vsub.f32 1.0, %v1617
    %v1643 = vsub.f32 1.0, %v1619
    %1646 = vrot.lane.b32.xlu0 %v1640, 96
    %v1647 = vpop.permute.xlu0 %1646
    %1648 = vrot.lane.b32.xlu0 %v1641, 96
    %v1649 = vpop.permute.xlu0 %1648
    %v1652 = vmul.f32 %v1642, %v1647
    %v1653 = vmul.f32 %v1643, %v1649
    %v1654 = vmul.f32 %v1617, %v1123
    %v1655 = vmul.f32 %v1619, %v1124
    %v1656 = vadd.f32 %v1652, %v1654
    %v1657 = vadd.f32 %v1653, %v1655
    %1660 = vrot.lane.b32.xlu0 %v1656, 96
    %v1661 = vpop.permute.xlu0 %1660
    %1662 = vrot.lane.b32.xlu0 %v1657, 96
    %v1663 = vpop.permute.xlu0 %1662
    %v1664 = vsel %vm77, %v1661, 0
    %v1666 = vsel %vm77, %v1663, 0
    %1668 = vmatprep.subr.mxu0 0.0
    %1669 = vmatpush1.msra.mxu0 %v61
    %1670 = vmatprep.subr.mxu0 0.0
    %1671 = vmatpush1.msra.mxu0 %v62
    %1672 = vmatprep.subr.mxu0 0.0
    %1673 = vmatpush1.msra.mxu0 %v63
    %1674 = vmatprep.subr.mxu0 0.0
    %1675 = vmatpush1.msra.mxu0 %v64
    %1676 = vmatprep.subr.mxu0 0.0
    %1677 = vmatpush1.msra.mxu0 0.0
    %1678 = vmatprep.subr.mxu0 0.0
    %1679 = vmatpush1.msra.mxu0 0.0
    %1680 = vmatprep.subr.mxu0 0.0
    %1681 = vmatpush1.msra.mxu0 0.0
    %1682 = vmatprep.subr.mxu0 0.0
    %1683 = vmatpush1.msra.mxu0 0.0
    %1684 = vmatprep.subr.mxu0 0.0
    %1685 = vmatpush1.msra.mxu0 0.0
    %1686 = vmatprep.subr.mxu0 0.0
    %1687 = vmatpush1.msra.mxu0 0.0
    %1688 = vmatprep.subr.mxu0 0.0
    %1689 = vmatpush1.msra.mxu0 0.0
    %1690 = vmatprep.subr.mxu0 0.0
    %1691 = vmatpush1.msra.mxu0 0.0
    %1692 = vmatprep.subr.mxu0 0.0
    %1693 = vmatpush1.msra.mxu0 0.0
    %1694 = vmatprep.subr.mxu0 0.0
    %1695 = vmatpush1.msra.mxu0 0.0
    %1696 = vmatprep.subr.mxu0 0.0
    %1697 = vmatpush1.msra.mxu0 0.0
    %1698 = vmatprep.subr.mxu0 0.0
    %1699 = vmatpush1.msra.mxu0 0.0
    %1700 = vmatprep.subr.mxu0 0.0
    %1701 = vmatpush1.msra.mxu0 0.0
    %1702 = vmatprep.subr.mxu0 0.0
    %1703 = vmatpush1.msra.mxu0 0.0
    %1704 = vmatprep.subr.mxu0 0.0
    %1705 = vmatpush1.msra.mxu0 0.0
    %1706 = vmatprep.subr.mxu0 0.0
    %1707 = vmatpush1.msra.mxu0 0.0
    %1708 = vmatprep.subr.mxu0 0.0
    %1709 = vmatpush1.msra.mxu0 0.0
    %1710 = vmatprep.subr.mxu0 0.0
    %1711 = vmatpush1.msra.mxu0 0.0
    %1712 = vmatprep.subr.mxu0 0.0
    %1713 = vmatpush1.msra.mxu0 0.0
    %1714 = vmatprep.subr.mxu0 0.0
    %1715 = vmatpush1.msra.mxu0 0.0
    %1716 = vmatprep.subr.mxu0 0.0
    %1717 = vmatpush1.msra.mxu0 0.0
    %1718 = vmatprep.subr.mxu0 0.0
    %1719 = vmatpush1.msra.mxu0 0.0
    %1720 = vmatprep.subr.mxu0 0.0
    %1721 = vmatpush1.msra.mxu0 0.0
    %1722 = vmatprep.subr.mxu0 0.0
    %1723 = vmatpush1.msra.mxu0 0.0
    %1724 = vmatprep.subr.mxu0 0.0
    %1725 = vmatpush1.msra.mxu0 0.0
    %1726 = vmatprep.subr.mxu0 0.0
    %1727 = vmatpush1.msra.mxu0 0.0
    %1728 = vmatprep.subr.mxu0 0.0
    %1729 = vmatpush1.msra.mxu0 0.0
    %1730 = vmatprep.subr.mxu0 0.0
    %1731 = vmatpush1.msra.mxu0 0.0
    %1732 = vmatprep.mubr.f32.mxu0 0.0
    %1733 = vmatmul.mubr.f32.gmra.mrb[0].mxu0 %v1664
    %v1734 = vpop.f32.mrb[0].mxu0
    %v1735 = vadd.f32 %v935, %v1734
    %v1736 = vpop.f32.mrb[0].mxu0
    %1737 = vmatprep.mubr.f32.mxu0 0.0
    %1738 = vmatmul.mubr.f32.gmra.mrb[0].mxu0 %v1666
    %v1739 = vpop.f32.mrb[0].mxu0
    %v1740 = vadd.f32 %v935, %v1739
    %v1741 = vpop.f32.mrb[0].mxu0
    %1742 = vdwg.mxu0
    %v1743 = vmax.f32 %v1735, 0.0
    %v1744 = vmax.f32 %v1740, 0.0
    %v1746 = vsel %vm1023, %v1743, 0
    %v1749 = vsel %vm1023, %v1744, 0
    %1751 = vmatprep.subr.mxu0 0.0
    %1752 = vmatpush1.msra.mxu0 %v65
    %1753 = vmatprep.subr.mxu0 0.0
    %1754 = vmatpush1.msra.mxu0 %v66
    %1755 = vmatprep.subr.mxu0 0.0
    %1756 = vmatpush1.msra.mxu0 %v67
    %1757 = vmatprep.subr.mxu0 0.0
    %1758 = vmatpush1.msra.mxu0 %v68
    %1759 = vmatprep.subr.mxu0 0.0
    %1760 = vmatpush1.msra.mxu0 %v69
    %1761 = vmatprep.subr.mxu0 0.0
    %1762 = vmatpush1.msra.mxu0 %v70
    %1763 = vmatprep.subr.mxu0 0.0
    %1764 = vmatpush1.msra.mxu0 %v71
    %1765 = vmatprep.subr.mxu0 0.0
    %1766 = vmatpush1.msra.mxu0 %v72
    %1767 = vmatprep.subr.mxu0 0.0
    %1768 = vmatpush1.msra.mxu0 0.0
    %1769 = vmatprep.subr.mxu0 0.0
    %1770 = vmatpush1.msra.mxu0 0.0
    %1771 = vmatprep.subr.mxu0 0.0
    %1772 = vmatpush1.msra.mxu0 0.0
    %1773 = vmatprep.subr.mxu0 0.0
    %1774 = vmatpush1.msra.mxu0 0.0
    %1775 = vmatprep.subr.mxu0 0.0
    %1776 = vmatpush1.msra.mxu0 0.0
    %1777 = vmatprep.subr.mxu0 0.0
    %1778 = vmatpush1.msra.mxu0 0.0
    %1779 = vmatprep.subr.mxu0 0.0
    %1780 = vmatpush1.msra.mxu0 0.0
    %1781 = vmatprep.subr.mxu0 0.0
    %1782 = vmatpush1.msra.mxu0 0.0
    %1783 = vmatprep.subr.mxu0 0.0
    %1784 = vmatpush1.msra.mxu0 0.0
    %1785 = vmatprep.subr.mxu0 0.0
    %1786 = vmatpush1.msra.mxu0 0.0
    %1787 = vmatprep.subr.mxu0 0.0
    %1788 = vmatpush1.msra.mxu0 0.0
    %1789 = vmatprep.subr.mxu0 0.0
    %1790 = vmatpush1.msra.mxu0 0.0
    %1791 = vmatprep.subr.mxu0 0.0
    %1792 = vmatpush1.msra.mxu0 0.0
    %1793 = vmatprep.subr.mxu0 0.0
    %1794 = vmatpush1.msra.mxu0 0.0
    %1795 = vmatprep.subr.mxu0 0.0
    %1796 = vmatpush1.msra.mxu0 0.0
    %1797 = vmatprep.subr.mxu0 0.0
    %1798 = vmatpush1.msra.mxu0 0.0
    %1799 = vmatprep.subr.mxu0 0.0
    %1800 = vmatpush1.msra.mxu0 0.0
    %1801 = vmatprep.subr.mxu0 0.0
    %1802 = vmatpush1.msra.mxu0 0.0
    %1803 = vmatprep.subr.mxu0 0.0
    %1804 = vmatpush1.msra.mxu0 0.0
    %1805 = vmatprep.subr.mxu0 0.0
    %1806 = vmatpush1.msra.mxu0 0.0
    %1807 = vmatprep.subr.mxu0 0.0
    %1808 = vmatpush1.msra.mxu0 0.0
    %1809 = vmatprep.subr.mxu0 0.0
    %1810 = vmatpush1.msra.mxu0 0.0
    %1811 = vmatprep.subr.mxu0 0.0
    %1812 = vmatpush1.msra.mxu0 0.0
    %1813 = vmatprep.subr.mxu0 0.0
    %1814 = vmatpush1.msra.mxu0 0.0
    %1815 = vmatprep.mubr.f32.mxu0 0.0
    %1816 = vmatmul.mubr.f32.gmra.mrb[0].mxu0 %v1746
    %v1817 = vpop.f32.mrb[0].mxu0
    %v1818 = vadd.f32 0.0, %v1817
    %v1819 = vpop.f32.mrb[0].mxu0
    %1820 = vmatprep.mubr.f32.mxu0 0.0
    %1821 = vmatmul.mubr.f32.gmra.mrb[0].mxu0 %v1749
    %v1822 = vpop.f32.mrb[0].mxu0
    %v1823 = vadd.f32 0.0, %v1822
    %v1824 = vpop.f32.mrb[0].mxu0
    %1825 = vdwg.mxu0
    %1828 = vrot.lane.b32.xlu0 %v1818, 32
    %v1829 = vpop.permute.xlu0 %1828
    %1830 = vrot.lane.b32.xlu0 %v1823, 32
    %v1831 = vpop.permute.xlu0 %1830
    %v1834 = vadd.f32 %v1656, %v1829
    %v1835 = vadd.f32 %v1657, %v1831
    %v1836 = vadd.f32 %v1834, %v1121
    %v1837 = vadd.f32 %v1835, %v1121
    %1840 = vrot.lane.b32.xlu0 %v1836, 96
    %v1841 = vpop.permute.xlu0 %1840
    %1842 = vrot.lane.b32.xlu0 %v1837, 96
    %v1843 = vpop.permute.xlu0 %1842
    %v1846 = vsel %vm77, %v1841, 0.0
    %1847 = vadd.xlane.f32.xlu0 %v1846
    %v1848 = vpop.xlane.xlu0 %1847
    %v1849 = vsel %vm77, %v1843, 0.0
    %1850 = vadd.xlane.f32.xlu0 %v1849
    %v1851 = vpop.xlane.xlu0 %1850
    %v1852 = vmul.f32 %v1848, %v90
    %v1853 = vmul.f32 %v1851, %v90
    %v1854 = vsub.f32 %v1836, %v1852
    %v1855 = vsub.f32 %v1837, %v1853
    %v1856 = vmul.f32 %v1854, %v1854
    %v1857 = vmul.f32 %v1855, %v1855
    %1860 = vrot.lane.b32.xlu0 %v1856, 96
    %v1861 = vpop.permute.xlu0 %1860
    %1862 = vrot.lane.b32.xlu0 %v1857, 96
    %v1863 = vpop.permute.xlu0 %1862
    %v1866 = vsel %vm77, %v1861, 0.0
    %1867 = vadd.xlane.f32.xlu0 %v1866
    %v1868 = vpop.xlane.xlu0 %1867
    %v1869 = vsel %vm77, %v1863, 0.0
    %1870 = vadd.xlane.f32.xlu0 %v1869
    %v1871 = vpop.xlane.xlu0 %1870
    %v1872 = vmul.f32 %v1868, %v90
    %v1873 = vmul.f32 %v1871, %v90
    %v1874 = vadd.f32 %v1872, 1e-05
    %v1875 = vadd.f32 %v1873, 1e-05
    %v1876 = vrsqrt.pop %v1874
    %v1877 = vrsqrt.pop %v1875
    %v1878 = vmul.f32 %v1854, %v1876
    %v1879 = vmul.f32 %v1855, %v1877
    %v1880 = vmul.f32 %v1878, %v1169
    %v1881 = vmul.f32 %v1879, %v1169
    %v1882 = vadd.f32 %v1880, %v1175
    %v1883 = vadd.f32 %v1881, %v1175
    %1885 = vrot.lane.b32.xlu0 %v1882, 96
    %v1886 = vpop.permute.xlu0 %1885
    %v1887 = vsel %vm77, %v1886, 0
    %1889 = vmatprep.subr.mxu0 0.0
    %1890 = vmatpush1.msra.mxu0 %v323
    %1891 = vmatprep.subr.mxu0 0.0
    %1892 = vmatpush1.msra.mxu0 %v328
    %1893 = vmatprep.subr.mxu0 0.0
    %1894 = vmatpush1.msra.mxu0 %v333
    %1895 = vmatprep.subr.mxu0 0.0
    %1896 = vmatpush1.msra.mxu0 %v338
    %1897 = vmatprep.subr.mxu0 0.0
    %1898 = vmatpush1.msra.mxu0 0.0
    %1899 = vmatprep.subr.mxu0 0.0
    %1900 = vmatpush1.msra.mxu0 0.0
    %1901 = vmatprep.subr.mxu0 0.0
    %1902 = vmatpush1.msra.mxu0 0.0
    %1903 = vmatprep.subr.mxu0 0.0
    %1904 = vmatpush1.msra.mxu0 0.0
    %1905 = vmatprep.subr.mxu0 0.0
    %1906 = vmatpush1.msra.mxu0 0.0
    %1907 = vmatprep.subr.mxu0 0.0
    %1908 = vmatpush1.msra.mxu0 0.0
    %1909 = vmatprep.subr.mxu0 0.0
    %1910 = vmatpush1.msra.mxu0 0.0
    %1911 = vmatprep.subr.mxu0 0.0
    %1912 = vmatpush1.msra.mxu0 0.0
    %1913 = vmatprep.subr.mxu0 0.0
    %1914 = vmatpush1.msra.mxu0 0.0
    %1915 = vmatprep.subr.mxu0 0.0
    %1916 = vmatpush1.msra.mxu0 0.0
    %1917 = vmatprep.subr.mxu0 0.0
    %1918 = vmatpush1.msra.mxu0 0.0
    %1919 = vmatprep.subr.mxu0 0.0
    %1920 = vmatpush1.msra.mxu0 0.0
    %1921 = vmatprep.subr.mxu0 0.0
    %1922 = vmatpush1.msra.mxu0 0.0
    %1923 = vmatprep.subr.mxu0 0.0
    %1924 = vmatpush1.msra.mxu0 0.0
    %1925 = vmatprep.subr.mxu0 0.0
    %1926 = vmatpush1.msra.mxu0 0.0
    %1927 = vmatprep.subr.mxu0 0.0
    %1928 = vmatpush1.msra.mxu0 0.0
    %1929 = vmatprep.subr.mxu0 0.0
    %1930 = vmatpush1.msra.mxu0 0.0
    %1931 = vmatprep.subr.mxu0 0.0
    %1932 = vmatpush1.msra.mxu0 0.0
    %1933 = vmatprep.subr.mxu0 0.0
    %1934 = vmatpush1.msra.mxu0 0.0
    %1935 = vmatprep.subr.mxu0 0.0
    %1936 = vmatpush1.msra.mxu0 0.0
    %1937 = vmatprep.subr.mxu0 0.0
    %1938 = vmatpush1.msra.mxu0 0.0
    %1939 = vmatprep.subr.mxu0 0.0
    %1940 = vmatpush1.msra.mxu0 0.0
    %1941 = vmatprep.subr.mxu0 0.0
    %1942 = vmatpush1.msra.mxu0 0.0
    %1943 = vmatprep.subr.mxu0 0.0
    %1944 = vmatpush1.msra.mxu0 0.0
    %1945 = vmatprep.subr.mxu0 0.0
    %1946 = vmatpush1.msra.mxu0 0.0
    %1947 = vmatprep.subr.mxu0 0.0
    %1948 = vmatpush1.msra.mxu0 0.0
    %1949 = vmatprep.subr.mxu0 0.0
    %1950 = vmatpush1.msra.mxu0 0.0
    %1951 = vmatprep.subr.mxu0 0.0
    %1952 = vmatpush1.msra.mxu0 0.0
    %1953 = vmatprep.mubr.f32.mxu0 0.0
    %1954 = vmatmul.mubr.f32.gmra.mrb[0].mxu0 %v1887
    %v1955 = vpop.f32.mrb[0].mxu0
    %v1956 = vadd.f32 0.0, %v1955
    %v1957 = vpop.f32.mrb[0].mxu0
    %1958 = vdwg.mxu0
    %v1959 = vsel %vm522, %v1956, -inf
    %v1960 = vrot.slane %v1959, 4
    %v1961 = vmax.f32 %v1959, %v1960
    %v1962 = vrot.slane %v1961, 2
    %v1963 = vmax.f32 %v1961, %v1962
    %v1964 = vrot.slane %v1963, 1
    %v1965 = vmax.f32 %v1963, %v1964
    %v1966 = vsub.f32 %v1956, %v1965
    %v1967 = vmul.f32 %v1966, 1.442695
    %v1968 = vpow.pop %v1967
    %v1969 = vsel %vm522, %v1968, 0.0
    %v1970 = vrot.slane %v1969, 4
    %v1971 = vadd.f32 %v1969, %v1970
    %v1972 = vrot.slane %v1971, 2
    %v1973 = vadd.f32 %v1971, %v1972
    %v1974 = vrot.slane %v1973, 1
    %v1975 = vadd.f32 %v1973, %v1974
    %v1976 = vrcp.pop %v1975
    %v1977 = vmul.f32 %v1968, %v1976
    %v1978 = vadd.f32 %v1977, 1e-08
    %v1979 = vsel %vm522, %v1978, 0.0
    %1980 = vadd.xlane.f32.xlu0 %v1979
    %v1981 = vpop.xlane.xlu0 %1980
    %v1982 = vrcp.pop %v1981
    %v1983 = vmul.f32 %v1978, %v1982
    %v1985 = vsel %vm522, %v1983, 0
    %1987 = vmatprep.subr.mxu0 0.0
    %1988 = vmatpush1.msra.mxu0 %v226
    %1989 = vmatprep.subr.mxu0 0.0
    %1990 = vmatpush1.msra.mxu0 %v231
    %1991 = vmatprep.subr.mxu0 0.0
    %1992 = vmatpush1.msra.mxu0 0.0
    %1993 = vmatprep.subr.mxu0 0.0
    %1994 = vmatpush1.msra.mxu0 0.0
    %1995 = vmatprep.subr.mxu0 0.0
    %1996 = vmatpush1.msra.mxu0 0.0
    %1997 = vmatprep.subr.mxu0 0.0
    %1998 = vmatpush1.msra.mxu0 0.0
    %1999 = vmatprep.subr.mxu0 0.0
    %2000 = vmatpush1.msra.mxu0 0.0
    %2001 = vmatprep.subr.mxu0 0.0
    %2002 = vmatpush1.msra.mxu0 0.0
    %2003 = vmatprep.subr.mxu0 0.0
    %2004 = vmatpush1.msra.mxu0 0.0
    %2005 = vmatprep.subr.mxu0 0.0
    %2006 = vmatpush1.msra.mxu0 0.0
    %2007 = vmatprep.subr.mxu0 0.0
    %2008 = vmatpush1.msra.mxu0 0.0
    %2009 = vmatprep.subr.mxu0 0.0
    %2010 = vmatpush1.msra.mxu0 0.0
    %2011 = vmatprep.subr.mxu0 0.0
    %2012 = vmatpush1.msra.mxu0 0.0
    %2013 = vmatprep.subr.mxu0 0.0
    %2014 = vmatpush1.msra.mxu0 0.0
    %2015 = vmatprep.subr.mxu0 0.0
    %2016 = vmatpush1.msra.mxu0 0.0
    %2017 = vmatprep.subr.mxu0 0.0
    %2018 = vmatpush1.msra.mxu0 0.0
    %2019 = vmatprep.subr.mxu0 0.0
    %2020 = vmatpush1.msra.mxu0 0.0
    %2021 = vmatprep.subr.mxu0 0.0
    %2022 = vmatpush1.msra.mxu0 0.0
    %2023 = vmatprep.subr.mxu0 0.0
    %2024 = vmatpush1.msra.mxu0 0.0
    %2025 = vmatprep.subr.mxu0 0.0
    %2026 = vmatpush1.msra.mxu0 0.0
    %2027 = vmatprep.subr.mxu0 0.0
    %2028 = vmatpush1.msra.mxu0 0.0
    %2029 = vmatprep.subr.mxu0 0.0
    %2030 = vmatpush1.msra.mxu0 0.0
    %2031 = vmatprep.subr.mxu0 0.0
    %2032 = vmatpush1.msra.mxu0 0.0
    %2033 = vmatprep.subr.mxu0 0.0
    %2034 = vmatpush1.msra.mxu0 0.0
    %2035 = vmatprep.subr.mxu0 0.0
    %2036 = vmatpush1.msra.mxu0 0.0
    %2037 = vmatprep.subr.mxu0 0.0
    %2038 = vmatpush1.msra.mxu0 0.0
    %2039 = vmatprep.subr.mxu0 0.0
    %2040 = vmatpush1.msra.mxu0 0.0
    %2041 = vmatprep.subr.mxu0 0.0
    %2042 = vmatpush1.msra.mxu0 0.0
    %2043 = vmatprep.subr.mxu0 0.0
    %2044 = vmatpush1.msra.mxu0 0.0
    %2045 = vmatprep.subr.mxu0 0.0
    %2046 = vmatpush1.msra.mxu0 0.0
    %2047 = vmatprep.subr.mxu0 0.0
    %2048 = vmatpush1.msra.mxu0 0.0
    %2049 = vmatprep.subr.mxu0 0.0
    %2050 = vmatpush1.msra.mxu0 0.0
    %2051 = vmatprep.mubr.f32.mxu0 0.0
    %2052 = vmatmul.mubr.f32.gmra.mrb[0].mxu0 %v1985
    %v2053 = vpop.f32.mrb[0].mxu0
    %v2054 = vadd.f32 0.0, %v2053
    %v2055 = vpop.f32.mrb[0].mxu0
    %2056 = vdwg.mxu0
    %2058 = vrot.lane.b32.xlu0 %v1883, 96
    %v2059 = vpop.permute.xlu0 %2058
    %v2060 = vsel %vm77, %v2059, 0
    %2062 = vmatprep.subr.mxu0 0.0
    %2063 = vmatpush1.msra.mxu0 %v408
    %2064 = vmatprep.subr.mxu0 0.0
    %2065 = vmatpush1.msra.mxu0 %v413
    %2066 = vmatprep.subr.mxu0 0.0
    %2067 = vmatpush1.msra.mxu0 %v418
    %2068 = vmatprep.subr.mxu0 0.0
    %2069 = vmatpush1.msra.mxu0 %v423
    %2070 = vmatprep.subr.mxu0 0.0
    %2071 = vmatpush1.msra.mxu0 0.0
    %2072 = vmatprep.subr.mxu0 0.0
    %2073 = vmatpush1.msra.mxu0 0.0
    %2074 = vmatprep.subr.mxu0 0.0
    %2075 = vmatpush1.msra.mxu0 0.0
    %2076 = vmatprep.subr.mxu0 0.0
    %2077 = vmatpush1.msra.mxu0 0.0
    %2078 = vmatprep.subr.mxu0 0.0
    %2079 = vmatpush1.msra.mxu0 0.0
    %2080 = vmatprep.subr.mxu0 0.0
    %2081 = vmatpush1.msra.mxu0 0.0
    %2082 = vmatprep.subr.mxu0 0.0
    %2083 = vmatpush1.msra.mxu0 0.0
    %2084 = vmatprep.subr.mxu0 0.0
    %2085 = vmatpush1.msra.mxu0 0.0
    %2086 = vmatprep.subr.mxu0 0.0
    %2087 = vmatpush1.msra.mxu0 0.0
    %2088 = vmatprep.subr.mxu0 0.0
    %2089 = vmatpush1.msra.mxu0 0.0
    %2090 = vmatprep.subr.mxu0 0.0
    %2091 = vmatpush1.msra.mxu0 0.0
    %2092 = vmatprep.subr.mxu0 0.0
    %2093 = vmatpush1.msra.mxu0 0.0
    %2094 = vmatprep.subr.mxu0 0.0
    %2095 = vmatpush1.msra.mxu0 0.0
    %2096 = vmatprep.subr.mxu0 0.0
    %2097 = vmatpush1.msra.mxu0 0.0
    %2098 = vmatprep.subr.mxu0 0.0
    %2099 = vmatpush1.msra.mxu0 0.0
    %2100 = vmatprep.subr.mxu0 0.0
    %2101 = vmatpush1.msra.mxu0 0.0
    %2102 = vmatprep.subr.mxu0 0.0
    %2103 = vmatpush1.msra.mxu0 0.0
    %2104 = vmatprep.subr.mxu0 0.0
    %2105 = vmatpush1.msra.mxu0 0.0
    %2106 = vmatprep.subr.mxu0 0.0
    %2107 = vmatpush1.msra.mxu0 0.0
    %2108 = vmatprep.subr.mxu0 0.0
    %2109 = vmatpush1.msra.mxu0 0.0
    %2110 = vmatprep.subr.mxu0 0.0
    %2111 = vmatpush1.msra.mxu0 0.0
    %2112 = vmatprep.subr.mxu0 0.0
    %2113 = vmatpush1.msra.mxu0 0.0
    %2114 = vmatprep.subr.mxu0 0.0
    %2115 = vmatpush1.msra.mxu0 0.0
    %2116 = vmatprep.subr.mxu0 0.0
    %2117 = vmatpush1.msra.mxu0 0.0
    %2118 = vmatprep.subr.mxu0 0.0
    %2119 = vmatpush1.msra.mxu0 0.0
    %2120 = vmatprep.subr.mxu0 0.0
    %2121 = vmatpush1.msra.mxu0 0.0
    %2122 = vmatprep.subr.mxu0 0.0
    %2123 = vmatpush1.msra.mxu0 0.0
    %2124 = vmatprep.subr.mxu0 0.0
    %2125 = vmatpush1.msra.mxu0 0.0
    %2126 = vmatprep.mubr.f32.mxu0 0.0
    %2127 = vmatmul.mubr.f32.gmra.mrb[0].mxu0 %v2060
    %v2128 = vpop.f32.mrb[0].mxu0
    %v2129 = vadd.f32 0.0, %v2128
    %v2130 = vpop.f32.mrb[0].mxu0
    %2131 = vdwg.mxu0
    %v2132 = vsel %vm522, %v2129, -inf
    %v2133 = vrot.slane %v2132, 4
    %v2134 = vmax.f32 %v2132, %v2133
    %v2135 = vrot.slane %v2134, 2
    %v2136 = vmax.f32 %v2134, %v2135
    %v2137 = vrot.slane %v2136, 1
    %v2138 = vmax.f32 %v2136, %v2137
    %v2139 = vsub.f32 %v2129, %v2138
    %v2140 = vmul.f32 %v2139, 1.442695
    %v2141 = vpow.pop %v2140
    %v2142 = vsel %vm522, %v2141, 0.0
    %v2143 = vrot.slane %v2142, 4
    %v2144 = vadd.f32 %v2142, %v2143
    %v2145 = vrot.slane %v2144, 2
    %v2146 = vadd.f32 %v2144, %v2145
    %v2147 = vrot.slane %v2146, 1
    %v2148 = vadd.f32 %v2146, %v2147
    %v2149 = vrcp.pop %v2148
    %v2150 = vmul.f32 %v2141, %v2149
    %v2151 = vadd.f32 %v2150, 1e-08
    %v2152 = vsel %vm522, %v2151, 0.0
    %2153 = vadd.xlane.f32.xlu0 %v2152
    %v2154 = vpop.xlane.xlu0 %2153
    %v2155 = vrcp.pop %v2154
    %v2156 = vmul.f32 %v2151, %v2155
    %v2158 = vsel %vm522, %v2156, 0
    %2160 = vmatprep.subr.mxu0 0.0
    %2161 = vmatpush1.msra.mxu0 %v236
    %2162 = vmatprep.subr.mxu0 0.0
    %2163 = vmatpush1.msra.mxu0 %v241
    %2164 = vmatprep.subr.mxu0 0.0
    %2165 = vmatpush1.msra.mxu0 0.0
    %2166 = vmatprep.subr.mxu0 0.0
    %2167 = vmatpush1.msra.mxu0 0.0
    %2168 = vmatprep.subr.mxu0 0.0
    %2169 = vmatpush1.msra.mxu0 0.0
    %2170 = vmatprep.subr.mxu0 0.0
    %2171 = vmatpush1.msra.mxu0 0.0
    %2172 = vmatprep.subr.mxu0 0.0
    %2173 = vmatpush1.msra.mxu0 0.0
    %2174 = vmatprep.subr.mxu0 0.0
    %2175 = vmatpush1.msra.mxu0 0.0
    %2176 = vmatprep.subr.mxu0 0.0
    %2177 = vmatpush1.msra.mxu0 0.0
    %2178 = vmatprep.subr.mxu0 0.0
    %2179 = vmatpush1.msra.mxu0 0.0
    %2180 = vmatprep.subr.mxu0 0.0
    %2181 = vmatpush1.msra.mxu0 0.0
    %2182 = vmatprep.subr.mxu0 0.0
    %2183 = vmatpush1.msra.mxu0 0.0
    %2184 = vmatprep.subr.mxu0 0.0
    %2185 = vmatpush1.msra.mxu0 0.0
    %2186 = vmatprep.subr.mxu0 0.0
    %2187 = vmatpush1.msra.mxu0 0.0
    %2188 = vmatprep.subr.mxu0 0.0
    %2189 = vmatpush1.msra.mxu0 0.0
    %2190 = vmatprep.subr.mxu0 0.0
    %2191 = vmatpush1.msra.mxu0 0.0
    %2192 = vmatprep.subr.mxu0 0.0
    %2193 = vmatpush1.msra.mxu0 0.0
    %2194 = vmatprep.subr.mxu0 0.0
    %2195 = vmatpush1.msra.mxu0 0.0
    %2196 = vmatprep.subr.mxu0 0.0
    %2197 = vmatpush1.msra.mxu0 0.0
    %2198 = vmatprep.subr.mxu0 0.0
    %2199 = vmatpush1.msra.mxu0 0.0
    %2200 = vmatprep.subr.mxu0 0.0
    %2201 = vmatpush1.msra.mxu0 0.0
    %2202 = vmatprep.subr.mxu0 0.0
    %2203 = vmatpush1.msra.mxu0 0.0
    %2204 = vmatprep.subr.mxu0 0.0
    %2205 = vmatpush1.msra.mxu0 0.0
    %2206 = vmatprep.subr.mxu0 0.0
    %2207 = vmatpush1.msra.mxu0 0.0
    %2208 = vmatprep.subr.mxu0 0.0
    %2209 = vmatpush1.msra.mxu0 0.0
    %2210 = vmatprep.subr.mxu0 0.0
    %2211 = vmatpush1.msra.mxu0 0.0
    %2212 = vmatprep.subr.mxu0 0.0
    %2213 = vmatpush1.msra.mxu0 0.0
    %2214 = vmatprep.subr.mxu0 0.0
    %2215 = vmatpush1.msra.mxu0 0.0
    %2216 = vmatprep.subr.mxu0 0.0
    %2217 = vmatpush1.msra.mxu0 0.0
    %2218 = vmatprep.subr.mxu0 0.0
    %2219 = vmatpush1.msra.mxu0 0.0
    %2220 = vmatprep.subr.mxu0 0.0
    %2221 = vmatpush1.msra.mxu0 0.0
    %2222 = vmatprep.subr.mxu0 0.0
    %2223 = vmatpush1.msra.mxu0 0.0
    %2224 = vmatprep.mubr.f32.mxu0 0.0
    %2225 = vmatmul.mubr.f32.gmra.mrb[0].mxu0 %v2158
    %v2226 = vpop.f32.mrb[0].mxu0
    %v2227 = vadd.f32 0.0, %v2226
    %v2228 = vpop.f32.mrb[0].mxu0
    %2229 = vdwg.mxu0
    %v2230 = vadd.f32 %v2054, %v792
    %v2231 = vadd.f32 %v2227, %v792
    %v2232 = vsel %vm77, %v1841, 0
    %v2234 = vsel %vm77, %v1843, 0
    %2236 = vmatprep.subr.mxu0 0.0
    %2237 = vmatpush1.msra.mxu0 %v57
    %2238 = vmatprep.subr.mxu0 0.0
    %2239 = vmatpush1.msra.mxu0 %v58
    %2240 = vmatprep.subr.mxu0 0.0
    %2241 = vmatpush1.msra.mxu0 %v59
    %2242 = vmatprep.subr.mxu0 0.0
    %2243 = vmatpush1.msra.mxu0 %v60
    %2244 = vmatprep.subr.mxu0 0.0
    %2245 = vmatpush1.msra.mxu0 0.0
    %2246 = vmatprep.subr.mxu0 0.0
    %2247 = vmatpush1.msra.mxu0 0.0
    %2248 = vmatprep.subr.mxu0 0.0
    %2249 = vmatpush1.msra.mxu0 0.0
    %2250 = vmatprep.subr.mxu0 0.0
    %2251 = vmatpush1.msra.mxu0 0.0
    %2252 = vmatprep.subr.mxu0 0.0
    %2253 = vmatpush1.msra.mxu0 0.0
    %2254 = vmatprep.subr.mxu0 0.0
    %2255 = vmatpush1.msra.mxu0 0.0
    %2256 = vmatprep.subr.mxu0 0.0
    %2257 = vmatpush1.msra.mxu0 0.0
    %2258 = vmatprep.subr.mxu0 0.0
    %2259 = vmatpush1.msra.mxu0 0.0
    %2260 = vmatprep.subr.mxu0 0.0
    %2261 = vmatpush1.msra.mxu0 0.0
    %2262 = vmatprep.subr.mxu0 0.0
    %2263 = vmatpush1.msra.mxu0 0.0
    %2264 = vmatprep.subr.mxu0 0.0
    %2265 = vmatpush1.msra.mxu0 0.0
    %2266 = vmatprep.subr.mxu0 0.0
    %2267 = vmatpush1.msra.mxu0 0.0
    %2268 = vmatprep.subr.mxu0 0.0
    %2269 = vmatpush1.msra.mxu0 0.0
    %2270 = vmatprep.subr.mxu0 0.0
    %2271 = vmatpush1.msra.mxu0 0.0
    %2272 = vmatprep.subr.mxu0 0.0
    %2273 = vmatpush1.msra.mxu0 0.0
    %2274 = vmatprep.subr.mxu0 0.0
    %2275 = vmatpush1.msra.mxu0 0.0
    %2276 = vmatprep.subr.mxu0 0.0
    %2277 = vmatpush1.msra.mxu0 0.0
    %2278 = vmatprep.subr.mxu0 0.0
    %2279 = vmatpush1.msra.mxu0 0.0
    %2280 = vmatprep.subr.mxu0 0.0
    %2281 = vmatpush1.msra.mxu0 0.0
    %2282 = vmatprep.subr.mxu0 0.0
    %2283 = vmatpush1.msra.mxu0 0.0
    %2284 = vmatprep.subr.mxu0 0.0
    %2285 = vmatpush1.msra.mxu0 0.0
    %2286 = vmatprep.subr.mxu0 0.0
    %2287 = vmatpush1.msra.mxu0 0.0
    %2288 = vmatprep.subr.mxu0 0.0
    %2289 = vmatpush1.msra.mxu0 0.0
    %2290 = vmatprep.subr.mxu0 0.0
    %2291 = vmatpush1.msra.mxu0 0.0
    %2292 = vmatprep.subr.mxu0 0.0
    %2293 = vmatpush1.msra.mxu0 0.0
    %2294 = vmatprep.subr.mxu0 0.0
    %2295 = vmatpush1.msra.mxu0 0.0
    %2296 = vmatprep.subr.mxu0 0.0
    %2297 = vmatpush1.msra.mxu0 0.0
    %2298 = vmatprep.subr.mxu0 0.0
    %2299 = vmatpush1.msra.mxu0 0.0
    %2300 = vmatprep.mubr.f32.mxu0 0.0
    %2301 = vmatmul.mubr.f32.gmra.mrb[0].mxu0 %v2232
    %v2302 = vpop.f32.mrb[0].mxu0
    %v2303 = vadd.f32 %v798, %v2302
    %v2304 = vpop.f32.mrb[0].mxu0
    %2305 = vmatprep.mubr.f32.mxu0 0.0
    %2306 = vmatmul.mubr.f32.gmra.mrb[0].mxu0 %v2234
    %v2307 = vpop.f32.mrb[0].mxu0
    %v2308 = vadd.f32 %v798, %v2307
    %v2309 = vpop.f32.mrb[0].mxu0
    %2310 = vdwg.mxu0
    %v2311 = vadd.f32 %v2230, %v2303
    %v2312 = vadd.f32 %v2231, %v2308
    %v2313 = vxor.u32 %v2311, 2147483648
    %v2314 = vxor.u32 %v2312, 2147483648
    %v2315 = vmul.f32 %v2313, 1.442695
    %v2316 = vpow.pop %v2315
    %v2317 = vmul.f32 %v2314, 1.442695
    %v2318 = vpow.pop %v2317
    %v2319 = vadd.f32 %v2316, 1.0
    %v2320 = vadd.f32 %v2318, 1.0
    %v2321 = vrcp.pop %v2319
    %v2322 = vmul.f32 1.0, %v2321
    %v2323 = vrcp.pop %v2320
    %v2324 = vmul.f32 1.0, %v2323
    %2327 = vrot.lane.b32.xlu0 %v2303, 64
    %v2328 = vpop.permute.xlu0 %2327
    %2329 = vrot.lane.b32.xlu0 %v2308, 64
    %v2330 = vpop.permute.xlu0 %2329
    %v2333 = vmul.f32 %v2322, %v2328
    %v2334 = vmul.f32 %v2324, %v2330
    %2337 = vrot.lane.b32.xlu0 %v2333, 64
    %v2338 = vpop.permute.xlu0 %2337
    %2339 = vrot.lane.b32.xlu0 %v2334, 64
    %v2340 = vpop.permute.xlu0 %2339
    %v2343 = vadd.f32 %v2230, %v2338
    %v2344 = vadd.f32 %v2231, %v2340
    %v2345 = vtanh.pop %v2343
    %v2346 = vtanh.pop %v2344
    %v2347 = vsub.f32 1.0, %v2322
    %v2348 = vsub.f32 1.0, %v2324
    %2351 = vrot.lane.b32.xlu0 %v2345, 96
    %v2352 = vpop.permute.xlu0 %2351
    %2353 = vrot.lane.b32.xlu0 %v2346, 96
    %v2354 = vpop.permute.xlu0 %2353
    %v2357 = vmul.f32 %v2347, %v2352
    %v2358 = vmul.f32 %v2348, %v2354
    %v2359 = vmul.f32 %v2322, %v1836
    %v2360 = vmul.f32 %v2324, %v1837
    %v2361 = vadd.f32 %v2357, %v2359
    %v2362 = vadd.f32 %v2358, %v2360
    %2365 = vrot.lane.b32.xlu0 %v2361, 96
    %v2366 = vpop.permute.xlu0 %2365
    %2367 = vrot.lane.b32.xlu0 %v2362, 96
    %v2368 = vpop.permute.xlu0 %2367
    %v2369 = vsel %vm77, %v2366, 0
    %v2371 = vsel %vm77, %v2368, 0
    %2373 = vmatprep.subr.mxu0 0.0
    %2374 = vmatpush1.msra.mxu0 %v61
    %2375 = vmatprep.subr.mxu0 0.0
    %2376 = vmatpush1.msra.mxu0 %v62
    %2377 = vmatprep.subr.mxu0 0.0
    %2378 = vmatpush1.msra.mxu0 %v63
    %2379 = vmatprep.subr.mxu0 0.0
    %2380 = vmatpush1.msra.mxu0 %v64
    %2381 = vmatprep.subr.mxu0 0.0
    %2382 = vmatpush1.msra.mxu0 0.0
    %2383 = vmatprep.subr.mxu0 0.0
    %2384 = vmatpush1.msra.mxu0 0.0
    %2385 = vmatprep.subr.mxu0 0.0
    %2386 = vmatpush1.msra.mxu0 0.0
    %2387 = vmatprep.subr.mxu0 0.0
    %2388 = vmatpush1.msra.mxu0 0.0
    %2389 = vmatprep.subr.mxu0 0.0
    %2390 = vmatpush1.msra.mxu0 0.0
    %2391 = vmatprep.subr.mxu0 0.0
    %2392 = vmatpush1.msra.mxu0 0.0
    %2393 = vmatprep.subr.mxu0 0.0
    %2394 = vmatpush1.msra.mxu0 0.0
    %2395 = vmatprep.subr.mxu0 0.0
    %2396 = vmatpush1.msra.mxu0 0.0
    %2397 = vmatprep.subr.mxu0 0.0
    %2398 = vmatpush1.msra.mxu0 0.0
    %2399 = vmatprep.subr.mxu0 0.0
    %2400 = vmatpush1.msra.mxu0 0.0
    %2401 = vmatprep.subr.mxu0 0.0
    %2402 = vmatpush1.msra.mxu0 0.0
    %2403 = vmatprep.subr.mxu0 0.0
    %2404 = vmatpush1.msra.mxu0 0.0
    %2405 = vmatprep.subr.mxu0 0.0
    %2406 = vmatpush1.msra.mxu0 0.0
    %2407 = vmatprep.subr.mxu0 0.0
    %2408 = vmatpush1.msra.mxu0 0.0
    %2409 = vmatprep.subr.mxu0 0.0
    %2410 = vmatpush1.msra.mxu0 0.0
    %2411 = vmatprep.subr.mxu0 0.0
    %2412 = vmatpush1.msra.mxu0 0.0
    %2413 = vmatprep.subr.mxu0 0.0
    %2414 = vmatpush1.msra.mxu0 0.0
    %2415 = vmatprep.subr.mxu0 0.0
    %2416 = vmatpush1.msra.mxu0 0.0
    %2417 = vmatprep.subr.mxu0 0.0
    %2418 = vmatpush1.msra.mxu0 0.0
    %2419 = vmatprep.subr.mxu0 0.0
    %2420 = vmatpush1.msra.mxu0 0.0
    %2421 = vmatprep.subr.mxu0 0.0
    %2422 = vmatpush1.msra.mxu0 0.0
    %2423 = vmatprep.subr.mxu0 0.0
    %2424 = vmatpush1.msra.mxu0 0.0
    %2425 = vmatprep.subr.mxu0 0.0
    %2426 = vmatpush1.msra.mxu0 0.0
    %2427 = vmatprep.subr.mxu0 0.0
    %2428 = vmatpush1.msra.mxu0 0.0
    %2429 = vmatprep.subr.mxu0 0.0
    %2430 = vmatpush1.msra.mxu0 0.0
    %2431 = vmatprep.subr.mxu0 0.0
    %2432 = vmatpush1.msra.mxu0 0.0
    %2433 = vmatprep.subr.mxu0 0.0
    %2434 = vmatpush1.msra.mxu0 0.0
    %2435 = vmatprep.subr.mxu0 0.0
    %2436 = vmatpush1.msra.mxu0 0.0
    %2437 = vmatprep.mubr.f32.mxu0 0.0
    %2438 = vmatmul.mubr.f32.gmra.mrb[0].mxu0 %v2369
    %v2439 = vpop.f32.mrb[0].mxu0
    %v2440 = vadd.f32 %v935, %v2439
    %v2441 = vpop.f32.mrb[0].mxu0
    %2442 = vmatprep.mubr.f32.mxu0 0.0
    %2443 = vmatmul.mubr.f32.gmra.mrb[0].mxu0 %v2371
    %v2444 = vpop.f32.mrb[0].mxu0
    %v2445 = vadd.f32 %v935, %v2444
    %v2446 = vpop.f32.mrb[0].mxu0
    %2447 = vdwg.mxu0
    %v2448 = vmax.f32 %v2440, 0.0
    %v2449 = vmax.f32 %v2445, 0.0
    %v2451 = vsel %vm1023, %v2448, 0
    %v2454 = vsel %vm1023, %v2449, 0
    %2456 = vmatprep.subr.mxu0 0.0
    %2457 = vmatpush1.msra.mxu0 %v65
    %2458 = vmatprep.subr.mxu0 0.0
    %2459 = vmatpush1.msra.mxu0 %v66
    %2460 = vmatprep.subr.mxu0 0.0
    %2461 = vmatpush1.msra.mxu0 %v67
    %2462 = vmatprep.subr.mxu0 0.0
    %2463 = vmatpush1.msra.mxu0 %v68
    %2464 = vmatprep.subr.mxu0 0.0
    %2465 = vmatpush1.msra.mxu0 %v69
    %2466 = vmatprep.subr.mxu0 0.0
    %2467 = vmatpush1.msra.mxu0 %v70
    %2468 = vmatprep.subr.mxu0 0.0
    %2469 = vmatpush1.msra.mxu0 %v71
    %2470 = vmatprep.subr.mxu0 0.0
    %2471 = vmatpush1.msra.mxu0 %v72
    %2472 = vmatprep.subr.mxu0 0.0
    %2473 = vmatpush1.msra.mxu0 0.0
    %2474 = vmatprep.subr.mxu0 0.0
    %2475 = vmatpush1.msra.mxu0 0.0
    %2476 = vmatprep.subr.mxu0 0.0
    %2477 = vmatpush1.msra.mxu0 0.0
    %2478 = vmatprep.subr.mxu0 0.0
    %2479 = vmatpush1.msra.mxu0 0.0
    %2480 = vmatprep.subr.mxu0 0.0
    %2481 = vmatpush1.msra.mxu0 0.0
    %2482 = vmatprep.subr.mxu0 0.0
    %2483 = vmatpush1.msra.mxu0 0.0
    %2484 = vmatprep.subr.mxu0 0.0
    %2485 = vmatpush1.msra.mxu0 0.0
    %2486 = vmatprep.subr.mxu0 0.0
    %2487 = vmatpush1.msra.mxu0 0.0
    %2488 = vmatprep.subr.mxu0 0.0
    %2489 = vmatpush1.msra.mxu0 0.0
    %2490 = vmatprep.subr.mxu0 0.0
    %2491 = vmatpush1.msra.mxu0 0.0
    %2492 = vmatprep.subr.mxu0 0.0
    %2493 = vmatpush1.msra.mxu0 0.0
    %2494 = vmatprep.subr.mxu0 0.0
    %2495 = vmatpush1.msra.mxu0 0.0
    %2496 = vmatprep.subr.mxu0 0.0
    %2497 = vmatpush1.msra.mxu0 0.0
    %2498 = vmatprep.subr.mxu0 0.0
    %2499 = vmatpush1.msra.mxu0 0.0
    %2500 = vmatprep.subr.mxu0 0.0
    %2501 = vmatpush1.msra.mxu0 0.0
    %2502 = vmatprep.subr.mxu0 0.0
    %2503 = vmatpush1.msra.mxu0 0.0
    %2504 = vmatprep.subr.mxu0 0.0
    %2505 = vmatpush1.msra.mxu0 0.0
    %2506 = vmatprep.subr.mxu0 0.0
    %2507 = vmatpush1.msra.mxu0 0.0
    %2508 = vmatprep.subr.mxu0 0.0
    %2509 = vmatpush1.msra.mxu0 0.0
    %2510 = vmatprep.subr.mxu0 0.0
    %2511 = vmatpush1.msra.mxu0 0.0
    %2512 = vmatprep.subr.mxu0 0.0
    %2513 = vmatpush1.msra.mxu0 0.0
    %2514 = vmatprep.subr.mxu0 0.0
    %2515 = vmatpush1.msra.mxu0 0.0
    %2516 = vmatprep.subr.mxu0 0.0
    %2517 = vmatpush1.msra.mxu0 0.0
    %2518 = vmatprep.subr.mxu0 0.0
    %2519 = vmatpush1.msra.mxu0 0.0
    %2520 = vmatprep.mubr.f32.mxu0 0.0
    %2521 = vmatmul.mubr.f32.gmra.mrb[0].mxu0 %v2451
    %v2522 = vpop.f32.mrb[0].mxu0
    %v2523 = vadd.f32 0.0, %v2522
    %v2524 = vpop.f32.mrb[0].mxu0
    %2525 = vmatprep.mubr.f32.mxu0 0.0
    %2526 = vmatmul.mubr.f32.gmra.mrb[0].mxu0 %v2454
    %v2527 = vpop.f32.mrb[0].mxu0
    %v2528 = vadd.f32 0.0, %v2527
    %v2529 = vpop.f32.mrb[0].mxu0
    %2530 = vdwg.mxu0
    %2533 = vrot.lane.b32.xlu0 %v2523, 32
    %v2534 = vpop.permute.xlu0 %2533
    %2535 = vrot.lane.b32.xlu0 %v2528, 32
    %v2536 = vpop.permute.xlu0 %2535
    %v2539 = vadd.f32 %v2361, %v2534
    %v2540 = vadd.f32 %v2362, %v2536
    %v2541 = vadd.f32 %v2539, %v1121
    %v2542 = vadd.f32 %v2540, %v1121
    %2545 = vrot.lane.b32.xlu0 %v2541, 96
    %v2546 = vpop.permute.xlu0 %2545
    %2547 = vrot.lane.b32.xlu0 %v2542, 96
    %v2548 = vpop.permute.xlu0 %2547
    %2551 = vst.msk [vmem:[#allocation7] sm:$0xff] %vm77, %v2546
    %2552 = vst.msk [vmem:[#allocation7 + $0x8] sm:$0xff] %vm77, %v2548
    // Predicated region
    $region18: #{tpu_custom_call.1} parent=1 // pred_check
      _
    $region19: #{tpu_custom_call.1} parent=1 // pred_check_branch
      %2554 = sbr.rel (0) target = $region21
    $region20: #{tpu_custom_call.1} parent=1 // pred_region
      %s2556 = ssub.s32 256, 256
      %2557 = vsyncadd [#allocation4], %s2556
      %s2558 = sshll.u32 [#allocation7], 4
      %s2559 = int_to_ptr.vmem [resolvable:$true] %s2558
      %2564 = dma.vmem_to_hbm [thread:$0]  %s2559, 256, %s2, [#allocation4], 128, 128, 8
    $region21: #{tpu_custom_call.1} parent=1 // pred_fallthru
      _
    // Predicated region
    $region22: #{tpu_custom_call.1} parent=1 // pred_check
      _
    $region23: #{tpu_custom_call.1} parent=1 // pred_check_branch
      %2566 = sbr.rel (0) target = $region25
    $region24: #{tpu_custom_call.1} parent=1 // pred_region
      %2567 = dma.done [#allocation4], 256
    $region25: #{tpu_custom_call.1} parent=1 // pred_fallthru
      _
    %2568 = vsyncpa [#allocation3], 1
    %2569 = vsyncpa [#allocation6], 1
    %2570 = vsyncpa [#allocation4], 1

</llo_original>
